<compile_context>
chip_gen: v7x
topology: tpu7x:2x2x1
jax: 0.10.0
libtpu: 0.0.40
codegen_flags: <defaults>
</compile_context>

<pallas_src>
import math
import jax
import jax.numpy as jnp
from jax import lax
from jax.experimental import pallas as pl
from jax.experimental.pallas import tpu as pltpu

# ---- small, module-consistent sizes -----------------------------------------
B = 2           # batch
T = 8           # sequence length (n_ctx)
D = 32          # n_embd
H = 4           # n_head
HD = D // H     # head_features
INNER = 4 * D   # n_inner (config.n_inner is None -> 4 * n_embd)
EPS = 1e-5      # layer_norm_epsilon
SCALE = True    # GPT2Model instantiates Block(..., scale=True)
INV_SQRT_HD = 1.0 / math.sqrt(HD)


def _layernorm(h, g, b):
    mu = jnp.mean(h, axis=-1, keepdims=True)
    var = jnp.mean((h - mu) ** 2, axis=-1, keepdims=True)
    return (h - mu) * lax.rsqrt(var + EPS) * g + b


def _gelu_new(x):
    # HuggingFace gpt2 "gelu_new"
    return 0.5 * x * (1.0 + jnp.tanh(
        math.sqrt(2.0 / math.pi) * (x + 0.044715 * x * x * x)))


def block_kernel(x_ref,
                 ln1g_ref, ln1b_ref,
                 wq_ref, bq_ref, wk_ref, bk_ref, wv_ref, bv_ref,
                 wao_ref, bao_ref,
                 ln2g_ref, ln2b_ref,
                 wfc_ref, bfc_ref,
                 wpr_ref, bpr_ref,
                 o_ref):
    x = x_ref[...]                                        # (B*T, D) residual stream

    # ---- ln_1 ---------------------------------------------------------------
    h = _layernorm(x, ln1g_ref[...], ln1b_ref[...])       # (B*T, D)

    # ---- self-attention: all (batch, head) pairs batched on the leading axis.
    # Replicate normalized activations across heads (leading-dim broadcast only,
    # no lane/sublane relayout) -> (B*H, T, D).
    h_bh = jnp.broadcast_to(h.reshape(B, 1, T, D),
                            (B, H, T, D)).reshape(B * H, T, D)

    def tile_b(w):
        # (H, ...) -> (B*H, ...) via leading-dim broadcast + leading-dim reshape.
        return jnp.broadcast_to(w[None], (B,) + w.shape).reshape(
            (B * H,) + w.shape[1:])

    # wq/bq already carry the 1/sqrt(HD) scale (folded in on the host).
    q = jnp.einsum('xtd,xdk->xtk', h_bh, tile_b(wq_ref[...]),
                   preferred_element_type=jnp.float32) + tile_b(bq_ref[...])
    k = jnp.einsum('xtd,xdk->xtk', h_bh, tile_b(wk_ref[...]),
                   preferred_element_type=jnp.float32) + tile_b(bk_ref[...])
    v = jnp.einsum('xtd,xdk->xtk', h_bh, tile_b(wv_ref[...]),
                   preferred_element_type=jnp.float32) + tile_b(bv_ref[...])

    s = jnp.einsum('xtd,xsd->xts', q, k,
                   preferred_element_type=jnp.float32)    # (B*H, T, T)

    row = lax.broadcasted_iota(jnp.int32, (T, T), 0)
    col = lax.broadcasted_iota(jnp.int32, (T, T), 1)
    causal = (col <= row)[None]                           # (1, T, T)
    s = jnp.where(causal, s, jnp.float32(-1e4))           # w*b - 1e4*(1-b)
    s = s - jnp.max(s, axis=-1, keepdims=True)
    p = jnp.exp(s)
    p = p * pl.reciprocal(jnp.sum(p, axis=-1, keepdims=True), approx=True)

    ctx = jnp.einsum('xts,xsd->xtd', p, v,
                     preferred_element_type=jnp.float32)  # (B*H, T, HD)

    # Merge-heads + c_proj fused: per-head projection summed over heads.
    a = jnp.einsum('xtd,xdk->xtk', ctx, tile_b(wao_ref[...]),
                   preferred_element_type=jnp.float32)    # (B*H, T, D)
    a = a.reshape(B, H, T, D).sum(axis=1).reshape(B * T, D) + bao_ref[...]

    h1 = x + a                                            # residual 1

    # ---- ln_2 + MLP ---------------------------------------------------------
    h2 = _layernorm(h1, ln2g_ref[...], ln2b_ref[...])
    u = jnp.dot(h2, wfc_ref[...], preferred_element_type=jnp.float32) + bfc_ref[...]
    u = _gelu_new(u)
    m = jnp.dot(u, wpr_ref[...], preferred_element_type=jnp.float32) + bpr_ref[...]

    o_ref[...] = h1 + m                                   # residual 2


def block_forward(x, params):
    # Host-side repacking of weights into head-major layouts so the kernel can
    # use batched einsums instead of lane-slicing per head.  Attention scale is
    # folded into the q projection here (zero kernel cost).
    w_qkv, b_qkv = params["w_qkv"], params["b_qkv"]
    w_q, w_k, w_v = (w_qkv[:, 0 * D:1 * D], w_qkv[:, 1 * D:2 * D],
                     w_qkv[:, 2 * D:3 * D])
    b_q, b_k, b_v = (b_qkv[:, 0 * D:1 * D], b_qkv[:, 1 * D:2 * D],
                     b_qkv[:, 2 * D:3 * D])

    heads_w = lambda w: w.reshape(D, H, HD).transpose(1, 0, 2)   # (H, D, HD)
    heads_b = lambda b: b.reshape(H, HD)[:, None, :]             # (H, 1, HD)

    q_scale = jnp.float32(INV_SQRT_HD) if SCALE else jnp.float32(1.0)

    operands = [
        x.reshape(B * T, D),                 # fused batch*seq activation slab
        params["ln1_g"], params["ln1_b"],
        heads_w(w_q) * q_scale, heads_b(b_q) * q_scale,
        heads_w(w_k), heads_b(b_k),
        heads_w(w_v), heads_b(b_v),
        params["w_ao"].reshape(H, HD, D), params["b_ao"],
        params["ln2_g"], params["ln2_b"],
        params["w_fc"], params["b_fc"],
        params["w_pr"], params["b_pr"],
    ]

    in_specs = [pl.BlockSpec(op.shape, lambda i, nd=op.ndim: (0,) * nd)
                for op in operands]

    out = pl.pallas_call(
        block_kernel,
        out_shape=jax.ShapeDtypeStruct((B * T, D), jnp.float32),
        grid_spec=pltpu.PrefetchScalarGridSpec(
            num_scalar_prefetch=0,
            grid=(1,),                       # single fused step
            in_specs=in_specs,
            out_specs=pl.BlockSpec((B * T, D), lambda i: (0, 0)),
        ),
        compiler_params=pltpu.CompilerParams(
            dimension_semantics=("arbitrary",)),
    )(*operands)
    return out.reshape(B, T, D)


# ---- pure-JAX reference (same math, no Pallas) ------------------------------
def block_reference(x, p):
    def ln(h, g, b):
        mu = jnp.mean(h, axis=-1, keepdims=True)
        var = jnp.mean((h - mu) ** 2, axis=-1, keepdims=True)
        return (h - mu) / jnp.sqrt(var + EPS) * g + b

    h = ln(x, p["ln1_g"], p["ln1_b"])
    qkv = h @ p["w_qkv"] + p["b_qkv"]
    q, k, v = jnp.split(qkv, 3, axis=-1)
    def heads(t):  # (B,T,D) -> (B,H,T,HD)
        return t.reshape(B, T, H, HD).transpose(0, 2, 1, 3)
    q, k, v = heads(q), heads(k), heads(v)
    w = jnp.einsum("bhqd,bhkd->bhqk", q, k)
    if SCALE:
        w = w / math.sqrt(HD)
    mask = jnp.tril(jnp.ones((T, T), dtype=bool))
    w = jnp.where(mask, w, -1e4)
    pattn = jax.nn.softmax(w, axis=-1)
    ctx = jnp.einsum("bhqk,bhkd->bhqd", pattn, v).transpose(0, 2, 1, 3).reshape(B, T, D)
    a = ctx @ p["w_ao"] + p["b_ao"]
    h1 = x + a
    h2 = ln(h1, p["ln2_g"], p["ln2_b"])
    u = h2 @ p["w_fc"] + p["b_fc"]
    u = 0.5 * u * (1.0 + jnp.tanh(math.sqrt(2.0 / math.pi) * (u + 0.044715 * u ** 3)))
    m = u @ p["w_pr"] + p["b_pr"]
    return h1 + m


if __name__ == "__main__":
    key = jax.random.PRNGKey(0)
    ks = jax.random.split(key, 8)

    # Deterministic synthetic parameters (GPT-2 style init: N(0, 0.02), zero bias,
    # LayerNorm gamma=1 / beta=0). Biases/LN kept 2-D (1, n) for TPU-friendly layout.
    params = {
        "ln1_g": jnp.ones((1, D), jnp.float32),
        "ln1_b": jnp.zeros((1, D), jnp.float32),
        "w_qkv": (0.02 * jax.random.normal(ks[0], (D, 3 * D))).astype(jnp.float32),
        "b_qkv": jnp.zeros((1, 3 * D), jnp.float32),
        "w_ao":  (0.02 * jax.random.normal(ks[1], (D, D))).astype(jnp.float32),
        "b_ao":  jnp.zeros((1, D), jnp.float32),
        "ln2_g": jnp.ones((1, D), jnp.float32),
        "ln2_b": jnp.zeros((1, D), jnp.float32),
        "w_fc":  (0.02 * jax.random.normal(ks[2], (D, INNER))).astype(jnp.float32),
        "b_fc":  jnp.zeros((1, INNER), jnp.float32),
        "w_pr":  (0.02 * jax.random.normal(ks[3], (INNER, D))).astype(jnp.float32),
        "b_pr":  jnp.zeros((1, D), jnp.float32),
    }

    x = jax.random.normal(ks[4], (B, T, D), dtype=jnp.float32)

    out = block_forward(x, params)
    out = jax.block_until_ready(out)

    ref = block_reference(x, params)
    assert out.shape == (B, T, D)
    # Tolerance relaxed vs 1e-4: pl.reciprocal(approx=True) in the softmax has
    # ~2^-12 relative error (observed end-to-end deviation is ~1e-5).
    assert jnp.allclose(out, ref, atol=1e-3, rtol=1e-3), "mismatch vs JAX reference"

    print("KERNEL_OK")
</pallas_src>

<mosaic_0001>
module attributes {stable_mosaic.version = 11 : i64} {
  func.func @block_kernel(%arg0: i32, %arg1: memref<16x32xf32, #tpu.memory_space<vmem>>, %arg2: memref<1x32xf32, #tpu.memory_space<vmem>>, %arg3: memref<1x32xf32, #tpu.memory_space<vmem>>, %arg4: memref<4x32x8xf32, #tpu.memory_space<vmem>>, %arg5: memref<4x1x8xf32, #tpu.memory_space<vmem>>, %arg6: memref<4x32x8xf32, #tpu.memory_space<vmem>>, %arg7: memref<4x1x8xf32, #tpu.memory_space<vmem>>, %arg8: memref<4x32x8xf32, #tpu.memory_space<vmem>>, %arg9: memref<4x1x8xf32, #tpu.memory_space<vmem>>, %arg10: memref<4x8x32xf32, #tpu.memory_space<vmem>>, %arg11: memref<1x32xf32, #tpu.memory_space<vmem>>, %arg12: memref<1x32xf32, #tpu.memory_space<vmem>>, %arg13: memref<1x32xf32, #tpu.memory_space<vmem>>, %arg14: memref<32x128xf32, #tpu.memory_space<vmem>>, %arg15: memref<1x128xf32, #tpu.memory_space<vmem>>, %arg16: memref<128x32xf32, #tpu.memory_space<vmem>>, %arg17: memref<1x32xf32, #tpu.memory_space<vmem>>, %arg18: memref<16x32xf32, #tpu.memory_space<vmem>>) attributes {dimension_semantics = [#tpu.dimension_semantics<arbitrary>], iteration_bounds = array<i64: 1>, scalar_prefetch = 0 : i64, scratch_operands = 0 : i64, tpu.core_type = #tpu.core_type<tc>, window_params = [{pipeline_mode = #tpu.pipeline_mode<synchronous>, transform_indices = @transform_0, window_bounds = array<i64: 16, 32>}, {pipeline_mode = #tpu.pipeline_mode<synchronous>, transform_indices = @transform_1, window_bounds = array<i64: 1, 32>}, {pipeline_mode = #tpu.pipeline_mode<synchronous>, transform_indices = @transform_2, window_bounds = array<i64: 1, 32>}, {pipeline_mode = #tpu.pipeline_mode<synchronous>, transform_indices = @transform_3, window_bounds = array<i64: 4, 32, 8>}, {pipeline_mode = #tpu.pipeline_mode<synchronous>, transform_indices = @transform_4, window_bounds = array<i64: 4, 1, 8>}, {pipeline_mode = #tpu.pipeline_mode<synchronous>, transform_indices = @transform_5, window_bounds = array<i64: 4, 32, 8>}, {pipeline_mode = #tpu.pipeline_mode<synchronous>, transform_indices = @transform_6, window_bounds = array<i64: 4, 1, 8>}, {pipeline_mode = #tpu.pipeline_mode<synchronous>, transform_indices = @transform_7, window_bounds = array<i64: 4, 32, 8>}, {pipeline_mode = #tpu.pipeline_mode<synchronous>, transform_indices = @transform_8, window_bounds = array<i64: 4, 1, 8>}, {pipeline_mode = #tpu.pipeline_mode<synchronous>, transform_indices = @transform_9, window_bounds = array<i64: 4, 8, 32>}, {pipeline_mode = #tpu.pipeline_mode<synchronous>, transform_indices = @transform_10, window_bounds = array<i64: 1, 32>}, {pipeline_mode = #tpu.pipeline_mode<synchronous>, transform_indices = @transform_11, window_bounds = array<i64: 1, 32>}, {pipeline_mode = #tpu.pipeline_mode<synchronous>, transform_indices = @transform_12, window_bounds = array<i64: 1, 32>}, {pipeline_mode = #tpu.pipeline_mode<synchronous>, transform_indices = @transform_13, window_bounds = array<i64: 32, 128>}, {pipeline_mode = #tpu.pipeline_mode<synchronous>, transform_indices = @transform_14, window_bounds = array<i64: 1, 128>}, {pipeline_mode = #tpu.pipeline_mode<synchronous>, transform_indices = @transform_15, window_bounds = array<i64: 128, 32>}, {pipeline_mode = #tpu.pipeline_mode<synchronous>, transform_indices = @transform_16, window_bounds = array<i64: 1, 32>}, {pipeline_mode = #tpu.pipeline_mode<synchronous>, transform_indices = @transform_17, window_bounds = array<i64: 16, 32>}]} {
    %c0 = arith.constant 0 : index
    %c0_0 = arith.constant 0 : index
    %0 = vector.load %arg1[%c0, %c0_0] : memref<16x32xf32, #tpu.memory_space<vmem>>, vector<16x32xf32>
    %c0_1 = arith.constant 0 : index
    %c0_2 = arith.constant 0 : index
    %1 = vector.load %arg2[%c0_1, %c0_2] : memref<1x32xf32, #tpu.memory_space<vmem>>, vector<1x32xf32>
    %c0_3 = arith.constant 0 : index
    %c0_4 = arith.constant 0 : index
    %2 = vector.load %arg3[%c0_3, %c0_4] : memref<1x32xf32, #tpu.memory_space<vmem>>, vector<1x32xf32>
    %cst = arith.constant dense<0.000000e+00> : vector<16xf32>
    %3 = vector.multi_reduction <add>, %0, %cst [1] : vector<16x32xf32> to vector<16xf32>
    %4 = vector.shape_cast %3 : vector<16xf32> to vector<16x1xf32>
    %cst_5 = arith.constant 3.200000e+01 : f32
    %5 = vector.broadcast %cst_5 : f32 to vector<16x1xf32>
    %6 = arith.divf %4, %5 : vector<16x1xf32>
    %7 = vector.broadcast %6 : vector<16x1xf32> to vector<16x32xf32>
    %8 = arith.subf %0, %7 : vector<16x32xf32>
    %9 = arith.mulf %8, %8 : vector<16x32xf32>
    %cst_6 = arith.constant dense<0.000000e+00> : vector<16xf32>
    %10 = vector.multi_reduction <add>, %9, %cst_6 [1] : vector<16x32xf32> to vector<16xf32>
    %11 = vector.shape_cast %10 : vector<16xf32> to vector<16x1xf32>
    %cst_7 = arith.constant 3.200000e+01 : f32
    %12 = vector.broadcast %cst_7 : f32 to vector<16x1xf32>
    %13 = arith.divf %11, %12 : vector<16x1xf32>
    %14 = vector.broadcast %6 : vector<16x1xf32> to vector<16x32xf32>
    %15 = arith.subf %0, %14 : vector<16x32xf32>
    %cst_8 = arith.constant 9.99999974E-6 : f32
    %16 = vector.broadcast %cst_8 : f32 to vector<16x1xf32>
    %17 = arith.addf %13, %16 : vector<16x1xf32>
    %18 = math.rsqrt %17 : vector<16x1xf32>
    %19 = vector.broadcast %18 : vector<16x1xf32> to vector<16x32xf32>
    %20 = arith.mulf %15, %19 : vector<16x32xf32>
    %21 = vector.broadcast %1 : vector<1x32xf32> to vector<16x32xf32>
    %22 = arith.mulf %20, %21 : vector<16x32xf32>
    %23 = vector.broadcast %2 : vector<1x32xf32> to vector<16x32xf32>
    %24 = arith.addf %22, %23 : vector<16x32xf32>
    %25 = vector.shape_cast %24 : vector<16x32xf32> to vector<2x1x8x32xf32>
    %26 = vector.shape_cast %25 : vector<2x1x8x32xf32> to vector<2x1x8x32xf32>
    %27 = vector.broadcast %26 : vector<2x1x8x32xf32> to vector<2x4x8x32xf32>
    %28 = vector.shape_cast %27 : vector<2x4x8x32xf32> to vector<8x8x32xf32>
    %c0_9 = arith.constant 0 : index
    %c0_10 = arith.constant 0 : index
    %c0_11 = arith.constant 0 : index
    %29 = vector.load %arg4[%c0_9, %c0_10, %c0_11] : memref<4x32x8xf32, #tpu.memory_space<vmem>>, vector<4x32x8xf32>
    %30 = vector.shape_cast %29 : vector<4x32x8xf32> to vector<1x4x32x8xf32>
    %31 = vector.shape_cast %30 : vector<1x4x32x8xf32> to vector<1x4x32x8xf32>
    %32 = vector.broadcast %31 : vector<1x4x32x8xf32> to vector<2x4x32x8xf32>
    %33 = vector.shape_cast %32 : vector<2x4x32x8xf32> to vector<8x32x8xf32>
    "tpu.trace_start"() <{level = 10 : i32, message = "xtd,xdk->xtk"}> : () -> ()
    %cst_12 = arith.constant dense<0.000000e+00> : vector<8x8x8xf32>
    %34 = tpu.matmul %28, %33, %cst_12 {dimension_numbers = #tpu.dot_dimension_numbers<[2], [1], [1], [2], [0, 0, 0, 1, 1, 2], [0], [0]>} : vector<8x8x32xf32>, vector<8x32x8xf32>, vector<8x8x8xf32> -> vector<8x8x8xf32>
    "tpu.trace_stop"() : () -> ()
    %c0_13 = arith.constant 0 : index
    %c0_14 = arith.constant 0 : index
    %c0_15 = arith.constant 0 : index
    %35 = vector.load %arg5[%c0_13, %c0_14, %c0_15] : memref<4x1x8xf32, #tpu.memory_space<vmem>>, vector<4x1x8xf32>
    %36 = vector.shape_cast %35 : vector<4x1x8xf32> to vector<1x4x1x8xf32>
    %37 = vector.shape_cast %36 : vector<1x4x1x8xf32> to vector<1x4x1x8xf32>
    %38 = vector.broadcast %37 : vector<1x4x1x8xf32> to vector<2x4x1x8xf32>
    %39 = vector.shape_cast %38 : vector<2x4x1x8xf32> to vector<8x1x8xf32>
    %40 = vector.broadcast %39 : vector<8x1x8xf32> to vector<8x8x8xf32>
    %41 = arith.addf %34, %40 : vector<8x8x8xf32>
    %c0_16 = arith.constant 0 : index
    %c0_17 = arith.constant 0 : index
    %c0_18 = arith.constant 0 : index
    %42 = vector.load %arg6[%c0_16, %c0_17, %c0_18] : memref<4x32x8xf32, #tpu.memory_space<vmem>>, vector<4x32x8xf32>
    %43 = vector.shape_cast %42 : vector<4x32x8xf32> to vector<1x4x32x8xf32>
    %44 = vector.shape_cast %43 : vector<1x4x32x8xf32> to vector<1x4x32x8xf32>
    %45 = vector.broadcast %44 : vector<1x4x32x8xf32> to vector<2x4x32x8xf32>
    %46 = vector.shape_cast %45 : vector<2x4x32x8xf32> to vector<8x32x8xf32>
    "tpu.trace_start"() <{level = 10 : i32, message = "xtd,xdk->xtk"}> : () -> ()
    %cst_19 = arith.constant dense<0.000000e+00> : vector<8x8x8xf32>
    %47 = tpu.matmul %28, %46, %cst_19 {dimension_numbers = #tpu.dot_dimension_numbers<[2], [1], [1], [2], [0, 0, 0, 1, 1, 2], [0], [0]>} : vector<8x8x32xf32>, vector<8x32x8xf32>, vector<8x8x8xf32> -> vector<8x8x8xf32>
    "tpu.trace_stop"() : () -> ()
    %c0_20 = arith.constant 0 : index
    %c0_21 = arith.constant 0 : index
    %c0_22 = arith.constant 0 : index
    %48 = vector.load %arg7[%c0_20, %c0_21, %c0_22] : memref<4x1x8xf32, #tpu.memory_space<vmem>>, vector<4x1x8xf32>
    %49 = vector.shape_cast %48 : vector<4x1x8xf32> to vector<1x4x1x8xf32>
    %50 = vector.shape_cast %49 : vector<1x4x1x8xf32> to vector<1x4x1x8xf32>
    %51 = vector.broadcast %50 : vector<1x4x1x8xf32> to vector<2x4x1x8xf32>
    %52 = vector.shape_cast %51 : vector<2x4x1x8xf32> to vector<8x1x8xf32>
    %53 = vector.broadcast %52 : vector<8x1x8xf32> to vector<8x8x8xf32>
    %54 = arith.addf %47, %53 : vector<8x8x8xf32>
    %c0_23 = arith.constant 0 : index
    %c0_24 = arith.constant 0 : index
    %c0_25 = arith.constant 0 : index
    %55 = vector.load %arg8[%c0_23, %c0_24, %c0_25] : memref<4x32x8xf32, #tpu.memory_space<vmem>>, vector<4x32x8xf32>
    %56 = vector.shape_cast %55 : vector<4x32x8xf32> to vector<1x4x32x8xf32>
    %57 = vector.shape_cast %56 : vector<1x4x32x8xf32> to vector<1x4x32x8xf32>
    %58 = vector.broadcast %57 : vector<1x4x32x8xf32> to vector<2x4x32x8xf32>
    %59 = vector.shape_cast %58 : vector<2x4x32x8xf32> to vector<8x32x8xf32>
    "tpu.trace_start"() <{level = 10 : i32, message = "xtd,xdk->xtk"}> : () -> ()
    %cst_26 = arith.constant dense<0.000000e+00> : vector<8x8x8xf32>
    %60 = tpu.matmul %28, %59, %cst_26 {dimension_numbers = #tpu.dot_dimension_numbers<[2], [1], [1], [2], [0, 0, 0, 1, 1, 2], [0], [0]>} : vector<8x8x32xf32>, vector<8x32x8xf32>, vector<8x8x8xf32> -> vector<8x8x8xf32>
    "tpu.trace_stop"() : () -> ()
    %c0_27 = arith.constant 0 : index
    %c0_28 = arith.constant 0 : index
    %c0_29 = arith.constant 0 : index
    %61 = vector.load %arg9[%c0_27, %c0_28, %c0_29] : memref<4x1x8xf32, #tpu.memory_space<vmem>>, vector<4x1x8xf32>
    %62 = vector.shape_cast %61 : vector<4x1x8xf32> to vector<1x4x1x8xf32>
    %63 = vector.shape_cast %62 : vector<1x4x1x8xf32> to vector<1x4x1x8xf32>
    %64 = vector.broadcast %63 : vector<1x4x1x8xf32> to vector<2x4x1x8xf32>
    %65 = vector.shape_cast %64 : vector<2x4x1x8xf32> to vector<8x1x8xf32>
    %66 = vector.broadcast %65 : vector<8x1x8xf32> to vector<8x8x8xf32>
    %67 = arith.addf %60, %66 : vector<8x8x8xf32>
    "tpu.trace_start"() <{level = 10 : i32, message = "xtd,xsd->xts"}> : () -> ()
    %cst_30 = arith.constant dense<0.000000e+00> : vector<8x8x8xf32>
    %68 = tpu.matmul %41, %54, %cst_30 {dimension_numbers = #tpu.dot_dimension_numbers<[2], [2], [1], [1], [0, 0, 0, 1, 1, 1], [0], [0]>} : vector<8x8x8xf32>, vector<8x8x8xf32>, vector<8x8x8xf32> -> vector<8x8x8xf32>
    "tpu.trace_stop"() : () -> ()
    %69 = tpu.iota {dimensions = array<i32: 0>} : vector<8x8xi32>
    %70 = tpu.iota {dimensions = array<i32: 1>} : vector<8x8xi32>
    %71 = arith.cmpi sle, %70, %69 : vector<8x8xi32>
    %72 = vector.shape_cast %71 : vector<8x8xi1> to vector<1x8x8xi1>
    %cst_31 = arith.constant -1.000000e+04 : f32
    %73 = vector.shape_cast %72 : vector<1x8x8xi1> to vector<1x8x8xi1>
    %74 = vector.broadcast %73 : vector<1x8x8xi1> to vector<8x8x8xi1>
    %75 = vector.broadcast %cst_31 : f32 to vector<8x8x8xf32>
    %76 = arith.select %74, %68, %75 : vector<8x8x8xi1>, vector<8x8x8xf32>
    %cst_32 = arith.constant dense<0xFF800000> : vector<8x8xf32>
    %77 = vector.multi_reduction <maximumf>, %76, %cst_32 [2] : vector<8x8x8xf32> to vector<8x8xf32>
    %78 = vector.shape_cast %77 : vector<8x8xf32> to vector<8x8x1xf32>
    %79 = vector.broadcast %78 : vector<8x8x1xf32> to vector<8x8x8xf32>
    %80 = arith.subf %76, %79 : vector<8x8x8xf32>
    %81 = math.exp %80 : vector<8x8x8xf32>
    %cst_33 = arith.constant dense<0.000000e+00> : vector<8x8xf32>
    %82 = vector.multi_reduction <add>, %81, %cst_33 [2] : vector<8x8x8xf32> to vector<8x8xf32>
    %83 = vector.shape_cast %82 : vector<8x8xf32> to vector<8x8x1xf32>
    %84 = tpu.reciprocal %83 {approx = true} : vector<8x8x1xf32> -> vector<8x8x1xf32>
    %85 = vector.broadcast %84 : vector<8x8x1xf32> to vector<8x8x8xf32>
    %86 = arith.mulf %81, %85 : vector<8x8x8xf32>
    "tpu.trace_start"() <{level = 10 : i32, message = "xts,xsd->xtd"}> : () -> ()
    %cst_34 = arith.constant dense<0.000000e+00> : vector<8x8x8xf32>
    %87 = tpu.matmul %86, %67, %cst_34 {dimension_numbers = #tpu.dot_dimension_numbers<[2], [1], [1], [2], [0, 0, 0, 1, 1, 2], [0], [0]>} : vector<8x8x8xf32>, vector<8x8x8xf32>, vector<8x8x8xf32> -> vector<8x8x8xf32>
    "tpu.trace_stop"() : () -> ()
    %c0_35 = arith.constant 0 : index
    %c0_36 = arith.constant 0 : index
    %c0_37 = arith.constant 0 : index
    %88 = vector.load %arg10[%c0_35, %c0_36, %c0_37] : memref<4x8x32xf32, #tpu.memory_space<vmem>>, vector<4x8x32xf32>
    %89 = vector.shape_cast %88 : vector<4x8x32xf32> to vector<1x4x8x32xf32>
    %90 = vector.shape_cast %89 : vector<1x4x8x32xf32> to vector<1x4x8x32xf32>
    %91 = vector.broadcast %90 : vector<1x4x8x32xf32> to vector<2x4x8x32xf32>
    %92 = vector.shape_cast %91 : vector<2x4x8x32xf32> to vector<8x8x32xf32>
    "tpu.trace_start"() <{level = 10 : i32, message = "xtd,xdk->xtk"}> : () -> ()
    %cst_38 = arith.constant dense<0.000000e+00> : vector<8x8x32xf32>
    %93 = tpu.matmul %87, %92, %cst_38 {dimension_numbers = #tpu.dot_dimension_numbers<[2], [1], [1], [2], [0, 0, 0, 1, 1, 2], [0], [0]>} : vector<8x8x8xf32>, vector<8x8x32xf32>, vector<8x8x32xf32> -> vector<8x8x32xf32>
    "tpu.trace_stop"() : () -> ()
    %94 = vector.shape_cast %93 : vector<8x8x32xf32> to vector<2x4x8x32xf32>
    %cst_39 = arith.constant dense<0.000000e+00> : vector<2x8x32xf32>
    %95 = vector.multi_reduction <add>, %94, %cst_39 [1] : vector<2x4x8x32xf32> to vector<2x8x32xf32>
    %96 = vector.shape_cast %95 : vector<2x8x32xf32> to vector<16x32xf32>
    %c0_40 = arith.constant 0 : index
    %c0_41 = arith.constant 0 : index
    %97 = vector.load %arg11[%c0_40, %c0_41] : memref<1x32xf32, #tpu.memory_space<vmem>>, vector<1x32xf32>
    %98 = vector.broadcast %97 : vector<1x32xf32> to vector<16x32xf32>
    %99 = arith.addf %96, %98 : vector<16x32xf32>
    %100 = arith.addf %0, %99 : vector<16x32xf32>
    %c0_42 = arith.constant 0 : index
    %c0_43 = arith.constant 0 : index
    %101 = vector.load %arg12[%c0_42, %c0_43] : memref<1x32xf32, #tpu.memory_space<vmem>>, vector<1x32xf32>
    %c0_44 = arith.constant 0 : index
    %c0_45 = arith.constant 0 : index
    %102 = vector.load %arg13[%c0_44, %c0_45] : memref<1x32xf32, #tpu.memory_space<vmem>>, vector<1x32xf32>
    %cst_46 = arith.constant dense<0.000000e+00> : vector<16xf32>
    %103 = vector.multi_reduction <add>, %100, %cst_46 [1] : vector<16x32xf32> to vector<16xf32>
    %104 = vector.shape_cast %103 : vector<16xf32> to vector<16x1xf32>
    %cst_47 = arith.constant 3.200000e+01 : f32
    %105 = vector.broadcast %cst_47 : f32 to vector<16x1xf32>
    %106 = arith.divf %104, %105 : vector<16x1xf32>
    %107 = vector.broadcast %106 : vector<16x1xf32> to vector<16x32xf32>
    %108 = arith.subf %100, %107 : vector<16x32xf32>
    %109 = arith.mulf %108, %108 : vector<16x32xf32>
    %cst_48 = arith.constant dense<0.000000e+00> : vector<16xf32>
    %110 = vector.multi_reduction <add>, %109, %cst_48 [1] : vector<16x32xf32> to vector<16xf32>
    %111 = vector.shape_cast %110 : vector<16xf32> to vector<16x1xf32>
    %cst_49 = arith.constant 3.200000e+01 : f32
    %112 = vector.broadcast %cst_49 : f32 to vector<16x1xf32>
    %113 = arith.divf %111, %112 : vector<16x1xf32>
    %114 = vector.broadcast %106 : vector<16x1xf32> to vector<16x32xf32>
    %115 = arith.subf %100, %114 : vector<16x32xf32>
    %cst_50 = arith.constant 9.99999974E-6 : f32
    %116 = vector.broadcast %cst_50 : f32 to vector<16x1xf32>
    %117 = arith.addf %113, %116 : vector<16x1xf32>
    %118 = math.rsqrt %117 : vector<16x1xf32>
    %119 = vector.broadcast %118 : vector<16x1xf32> to vector<16x32xf32>
    %120 = arith.mulf %115, %119 : vector<16x32xf32>
    %121 = vector.broadcast %101 : vector<1x32xf32> to vector<16x32xf32>
    %122 = arith.mulf %120, %121 : vector<16x32xf32>
    %123 = vector.broadcast %102 : vector<1x32xf32> to vector<16x32xf32>
    %124 = arith.addf %122, %123 : vector<16x32xf32>
    %c0_51 = arith.constant 0 : index
    %c0_52 = arith.constant 0 : index
    %125 = vector.load %arg14[%c0_51, %c0_52] : memref<32x128xf32, #tpu.memory_space<vmem>>, vector<32x128xf32>
    %cst_53 = arith.constant dense<0.000000e+00> : vector<16x128xf32>
    %126 = tpu.matmul %124, %125, %cst_53 {dimension_numbers = #tpu.dot_dimension_numbers<[1], [0], [0], [1], [0, 0, 1, 1], [], []>} : vector<16x32xf32>, vector<32x128xf32>, vector<16x128xf32> -> vector<16x128xf32>
    %c0_54 = arith.constant 0 : index
    %c0_55 = arith.constant 0 : index
    %127 = vector.load %arg15[%c0_54, %c0_55] : memref<1x128xf32, #tpu.memory_space<vmem>>, vector<1x128xf32>
    %128 = vector.broadcast %127 : vector<1x128xf32> to vector<16x128xf32>
    %129 = arith.addf %126, %128 : vector<16x128xf32>
    %cst_56 = arith.constant 5.000000e-01 : f32
    %130 = vector.broadcast %cst_56 : f32 to vector<16x128xf32>
    %131 = arith.mulf %130, %129 : vector<16x128xf32>
    %cst_57 = arith.constant 4.471500e-02 : f32
    %132 = vector.broadcast %cst_57 : f32 to vector<16x128xf32>
    %133 = arith.mulf %132, %129 : vector<16x128xf32>
    %134 = arith.mulf %133, %129 : vector<16x128xf32>
    %135 = arith.mulf %134, %129 : vector<16x128xf32>
    %136 = arith.addf %129, %135 : vector<16x128xf32>
    %cst_58 = arith.constant 0.797884583 : f32
    %137 = vector.broadcast %cst_58 : f32 to vector<16x128xf32>
    %138 = arith.mulf %137, %136 : vector<16x128xf32>
    %139 = math.tanh %138 : vector<16x128xf32>
    %cst_59 = arith.constant 1.000000e+00 : f32
    %140 = vector.broadcast %cst_59 : f32 to vector<16x128xf32>
    %141 = arith.addf %140, %139 : vector<16x128xf32>
    %142 = arith.mulf %131, %141 : vector<16x128xf32>
    %c0_60 = arith.constant 0 : index
    %c0_61 = arith.constant 0 : index
    %143 = vector.load %arg16[%c0_60, %c0_61] : memref<128x32xf32, #tpu.memory_space<vmem>>, vector<128x32xf32>
    %cst_62 = arith.constant dense<0.000000e+00> : vector<16x32xf32>
    %144 = tpu.matmul %142, %143, %cst_62 {dimension_numbers = #tpu.dot_dimension_numbers<[1], [0], [0], [1], [0, 0, 1, 1], [], []>} : vector<16x128xf32>, vector<128x32xf32>, vector<16x32xf32> -> vector<16x32xf32>
    %c0_63 = arith.constant 0 : index
    %c0_64 = arith.constant 0 : index
    %145 = vector.load %arg17[%c0_63, %c0_64] : memref<1x32xf32, #tpu.memory_space<vmem>>, vector<1x32xf32>
    %146 = vector.broadcast %145 : vector<1x32xf32> to vector<16x32xf32>
    %147 = arith.addf %144, %146 : vector<16x32xf32>
    %148 = arith.addf %100, %147 : vector<16x32xf32>
    %c0_65 = arith.constant 0 : index
    %c0_66 = arith.constant 0 : index
    %149 = vector.load %arg18[%c0_65, %c0_66] : memref<16x32xf32, #tpu.memory_space<vmem>>, vector<16x32xf32>
    tpu.vector_store %arg18[%c0_65, %c0_66], %148 {strides = array<i32>} : memref<16x32xf32, #tpu.memory_space<vmem>>, vector<16x32xf32>,
    return
  }
  func.func @transform_0(%arg0: i32) -> (i32, i32) {
    %c0_i32 = arith.constant 0 : i32
    %c0_i32_0 = arith.constant 0 : i32
    %c0_i32_1 = arith.constant 0 : i32
    return %c0_i32, %c0_i32_0 : i32, i32
  }
  func.func @transform_1(%arg0: i32) -> (i32, i32) {
    %c0_i32 = arith.constant 0 : i32
    %c0_i32_0 = arith.constant 0 : i32
    %c0_i32_1 = arith.constant 0 : i32
    return %c0_i32, %c0_i32_0 : i32, i32
  }
  func.func @transform_2(%arg0: i32) -> (i32, i32) {
    %c0_i32 = arith.constant 0 : i32
    %c0_i32_0 = arith.constant 0 : i32
    %c0_i32_1 = arith.constant 0 : i32
    return %c0_i32, %c0_i32_0 : i32, i32
  }
  func.func @transform_3(%arg0: i32) -> (i32, i32, i32) {
    %c0_i32 = arith.constant 0 : i32
    %c0_i32_0 = arith.constant 0 : i32
    %c0_i32_1 = arith.constant 0 : i32
    %c0_i32_2 = arith.constant 0 : i32
    return %c0_i32, %c0_i32_0, %c0_i32_1 : i32, i32, i32
  }
  func.func @transform_4(%arg0: i32) -> (i32, i32, i32) {
    %c0_i32 = arith.constant 0 : i32
    %c0_i32_0 = arith.constant 0 : i32
    %c0_i32_1 = arith.constant 0 : i32
    %c0_i32_2 = arith.constant 0 : i32
    return %c0_i32, %c0_i32_0, %c0_i32_1 : i32, i32, i32
  }
  func.func @transform_5(%arg0: i32) -> (i32, i32, i32) {
    %c0_i32 = arith.constant 0 : i32
    %c0_i32_0 = arith.constant 0 : i32
    %c0_i32_1 = arith.constant 0 : i32
    %c0_i32_2 = arith.constant 0 : i32
    return %c0_i32, %c0_i32_0, %c0_i32_1 : i32, i32, i32
  }
  func.func @transform_6(%arg0: i32) -> (i32, i32, i32) {
    %c0_i32 = arith.constant 0 : i32
    %c0_i32_0 = arith.constant 0 : i32
    %c0_i32_1 = arith.constant 0 : i32
    %c0_i32_2 = arith.constant 0 : i32
    return %c0_i32, %c0_i32_0, %c0_i32_1 : i32, i32, i32
  }
  func.func @transform_7(%arg0: i32) -> (i32, i32, i32) {
    %c0_i32 = arith.constant 0 : i32
    %c0_i32_0 = arith.constant 0 : i32
    %c0_i32_1 = arith.constant 0 : i32
    %c0_i32_2 = arith.constant 0 : i32
    return %c0_i32, %c0_i32_0, %c0_i32_1 : i32, i32, i32
  }
  func.func @transform_8(%arg0: i32) -> (i32, i32, i32) {
    %c0_i32 = arith.constant 0 : i32
    %c0_i32_0 = arith.constant 0 : i32
    %c0_i32_1 = arith.constant 0 : i32
    %c0_i32_2 = arith.constant 0 : i32
    return %c0_i32, %c0_i32_0, %c0_i32_1 : i32, i32, i32
  }
  func.func @transform_9(%arg0: i32) -> (i32, i32, i32) {
    %c0_i32 = arith.constant 0 : i32
    %c0_i32_0 = arith.constant 0 : i32
    %c0_i32_1 = arith.constant 0 : i32
    %c0_i32_2 = arith.constant 0 : i32
    return %c0_i32, %c0_i32_0, %c0_i32_1 : i32, i32, i32
  }
  func.func @transform_10(%arg0: i32) -> (i32, i32) {
    %c0_i32 = arith.constant 0 : i32
    %c0_i32_0 = arith.constant 0 : i32
    %c0_i32_1 = arith.constant 0 : i32
    return %c0_i32, %c0_i32_0 : i32, i32
  }
  func.func @transform_11(%arg0: i32) -> (i32, i32) {
    %c0_i32 = arith.constant 0 : i32
    %c0_i32_0 = arith.constant 0 : i32
    %c0_i32_1 = arith.constant 0 : i32
    return %c0_i32, %c0_i32_0 : i32, i32
  }
  func.func @transform_12(%arg0: i32) -> (i32, i32) {
    %c0_i32 = arith.constant 0 : i32
    %c0_i32_0 = arith.constant 0 : i32
    %c0_i32_1 = arith.constant 0 : i32
    return %c0_i32, %c0_i32_0 : i32, i32
  }
  func.func @transform_13(%arg0: i32) -> (i32, i32) {
    %c0_i32 = arith.constant 0 : i32
    %c0_i32_0 = arith.constant 0 : i32
    %c0_i32_1 = arith.constant 0 : i32
    return %c0_i32, %c0_i32_0 : i32, i32
  }
  func.func @transform_14(%arg0: i32) -> (i32, i32) {
    %c0_i32 = arith.constant 0 : i32
    %c0_i32_0 = arith.constant 0 : i32
    %c0_i32_1 = arith.constant 0 : i32
    return %c0_i32, %c0_i32_0 : i32, i32
  }
  func.func @transform_15(%arg0: i32) -> (i32, i32) {
    %c0_i32 = arith.constant 0 : i32
    %c0_i32_0 = arith.constant 0 : i32
    %c0_i32_1 = arith.constant 0 : i32
    return %c0_i32, %c0_i32_0 : i32, i32
  }
  func.func @transform_16(%arg0: i32) -> (i32, i32) {
    %c0_i32 = arith.constant 0 : i32
    %c0_i32_0 = arith.constant 0 : i32
    %c0_i32_1 = arith.constant 0 : i32
    return %c0_i32, %c0_i32_0 : i32, i32
  }
  func.func @transform_17(%arg0: i32) -> (i32, i32) {
    %c0_i32 = arith.constant 0 : i32
    %c0_i32_0 = arith.constant 0 : i32
    %c0_i32_1 = arith.constant 0 : i32
    return %c0_i32, %c0_i32_0 : i32, i32
  }
}

</mosaic_0001>

<llo_original>
// kernel: tpu_custom_call.1
$region0: #{tpu_custom_call.1}
  #allocation0 [shape = 'u32[]', space=smem, size = 0x4, offset = 0x4, fixed_abs, tag = 'smem constant byte address 0x4 - core index']
  #allocation1 [shape = 'u32[144,128]{1,0:T(1,128)}', space=vmem, size = 0x12000, scoped, tag = 'internal scratch']
  %s0 = inlined_call_operand.vmem [shape: f32[16,32], index: 0, kind: input, shape index: {}]
  %s1 = inlined_call_operand.vmem [shape: f32[1,32], index: 1, kind: input, shape index: {}]
  %s2 = inlined_call_operand.vmem [shape: f32[1,32], index: 2, kind: input, shape index: {}]
  %s3 = inlined_call_operand.vmem [shape: f32[4,32,8], index: 3, kind: input, shape index: {}]
  %s4 = inlined_call_operand.vmem [shape: f32[4,1,8], index: 4, kind: input, shape index: {}]
  %s5 = inlined_call_operand.vmem [shape: f32[4,32,8], index: 5, kind: input, shape index: {}]
  %s6 = inlined_call_operand.vmem [shape: f32[4,1,8], index: 6, kind: input, shape index: {}]
  %s7 = inlined_call_operand.vmem [shape: f32[4,32,8], index: 7, kind: input, shape index: {}]
  %s8 = inlined_call_operand.vmem [shape: f32[4,1,8], index: 8, kind: input, shape index: {}]
  %s9 = inlined_call_operand.vmem [shape: f32[4,8,32], index: 9, kind: input, shape index: {}]
  %s10 = inlined_call_operand.vmem [shape: f32[1,32], index: 10, kind: input, shape index: {}]
  %s11 = inlined_call_operand.vmem [shape: f32[1,32], index: 11, kind: input, shape index: {}]
  %s12 = inlined_call_operand.vmem [shape: f32[1,32], index: 12, kind: input, shape index: {}]
  %s13 = inlined_call_operand.vmem [shape: f32[32,128], index: 13, kind: input, shape index: {}]
  %s14 = inlined_call_operand.vmem [shape: f32[1,128], index: 14, kind: input, shape index: {}]
  %s15 = inlined_call_operand.vmem [shape: f32[128,32], index: 15, kind: input, shape index: {}]
  %s16 = inlined_call_operand.vmem [shape: f32[1,32], index: 16, kind: input, shape index: {}]
  %s17 = inlined_call_operand.hbm [shape: f32[16,32], index: 17, kind: output, shape index: {}]
  %s18 = sld [smem:[#allocation0]]
  $region78: #{tpu_custom_call.1} parent=0
    _
  %s20 = ssub.s32 1, %s18
  %s21 = scalar_select 0, %s20, %s18
  $region1: #{tpu_custom_call.1} parent=0
    #allocation2 [shape = 'u8[8192]{0}', space=vmem, size = 0x2000, scoped, tag = 'output window, operand 0, single buffered']
    #allocation3 [shape = 's32[1]{0}', space=sflag, size = 0x4, scoped, tag = 'scoped memory for tpu_custom_call.1']
    %22 = vsyncpa [#allocation3], 0
    // Predicated region
    $region2: #{tpu_custom_call.1} parent=1 // pred_check
      _
    $region3: #{tpu_custom_call.1} parent=1 // pred_check_branch
      %24 = sbr.rel (0) target = $region5
    $region4: #{tpu_custom_call.1} parent=1 // pred_region
      _
    $region5: #{tpu_custom_call.1} parent=1 // pred_fallthru
      _
    // Predicated region
    $region6: #{tpu_custom_call.1} parent=1 // pred_check
      _
    $region7: #{tpu_custom_call.1} parent=1 // pred_check_branch
      %26 = sbr.rel (0) target = $region9
    $region8: #{tpu_custom_call.1} parent=1 // pred_region
      _
    $region9: #{tpu_custom_call.1} parent=1 // pred_fallthru
      _
    // Predicated region
    $region10: #{tpu_custom_call.1} parent=1 // pred_check
      _
    $region11: #{tpu_custom_call.1} parent=1 // pred_check_branch
      %28 = sbr.rel (0) target = $region13
    $region12: #{tpu_custom_call.1} parent=1 // pred_region
      _
    $region13: #{tpu_custom_call.1} parent=1 // pred_fallthru
      _
    // Predicated region
    $region14: #{tpu_custom_call.1} parent=1 // pred_check
      _
    $region15: #{tpu_custom_call.1} parent=1 // pred_check_branch
      %30 = sbr.rel (0) target = $region17
    $region16: #{tpu_custom_call.1} parent=1 // pred_region
      _
    $region17: #{tpu_custom_call.1} parent=1 // pred_fallthru
      _
    // Predicated region
    $region18: #{tpu_custom_call.1} parent=1 // pred_check
      _
    $region19: #{tpu_custom_call.1} parent=1 // pred_check_branch
      %32 = sbr.rel (0) target = $region21
    $region20: #{tpu_custom_call.1} parent=1 // pred_region
      _
    $region21: #{tpu_custom_call.1} parent=1 // pred_fallthru
      _
    // Predicated region
    $region22: #{tpu_custom_call.1} parent=1 // pred_check
      _
    $region23: #{tpu_custom_call.1} parent=1 // pred_check_branch
      %34 = sbr.rel (0) target = $region25
    $region24: #{tpu_custom_call.1} parent=1 // pred_region
      _
    $region25: #{tpu_custom_call.1} parent=1 // pred_fallthru
      _
    // Predicated region
    $region26: #{tpu_custom_call.1} parent=1 // pred_check
      _
    $region27: #{tpu_custom_call.1} parent=1 // pred_check_branch
      %36 = sbr.rel (0) target = $region29
    $region28: #{tpu_custom_call.1} parent=1 // pred_region
      _
    $region29: #{tpu_custom_call.1} parent=1 // pred_fallthru
      _
    // Predicated region
    $region30: #{tpu_custom_call.1} parent=1 // pred_check
      _
    $region31: #{tpu_custom_call.1} parent=1 // pred_check_branch
      %38 = sbr.rel (0) target = $region33
    $region32: #{tpu_custom_call.1} parent=1 // pred_region
      _
    $region33: #{tpu_custom_call.1} parent=1 // pred_fallthru
      _
    // Predicated region
    $region34: #{tpu_custom_call.1} parent=1 // pred_check
      _
    $region35: #{tpu_custom_call.1} parent=1 // pred_check_branch
      %40 = sbr.rel (0) target = $region37
    $region36: #{tpu_custom_call.1} parent=1 // pred_region
      _
    $region37: #{tpu_custom_call.1} parent=1 // pred_fallthru
      _
    // Predicated region
    $region38: #{tpu_custom_call.1} parent=1 // pred_check
      _
    $region39: #{tpu_custom_call.1} parent=1 // pred_check_branch
      %42 = sbr.rel (0) target = $region41
    $region40: #{tpu_custom_call.1} parent=1 // pred_region
      _
    $region41: #{tpu_custom_call.1} parent=1 // pred_fallthru
      _
    // Predicated region
    $region42: #{tpu_custom_call.1} parent=1 // pred_check
      _
    $region43: #{tpu_custom_call.1} parent=1 // pred_check_branch
      %44 = sbr.rel (0) target = $region45
    $region44: #{tpu_custom_call.1} parent=1 // pred_region
      _
    $region45: #{tpu_custom_call.1} parent=1 // pred_fallthru
      _
    // Predicated region
    $region46: #{tpu_custom_call.1} parent=1 // pred_check
      _
    $region47: #{tpu_custom_call.1} parent=1 // pred_check_branch
      %46 = sbr.rel (0) target = $region49
    $region48: #{tpu_custom_call.1} parent=1 // pred_region
      _
    $region49: #{tpu_custom_call.1} parent=1 // pred_fallthru
      _
    // Predicated region
    $region50: #{tpu_custom_call.1} parent=1 // pred_check
      _
    $region51: #{tpu_custom_call.1} parent=1 // pred_check_branch
      %48 = sbr.rel (0) target = $region53
    $region52: #{tpu_custom_call.1} parent=1 // pred_region
      _
    $region53: #{tpu_custom_call.1} parent=1 // pred_fallthru
      _
    // Predicated region
    $region54: #{tpu_custom_call.1} parent=1 // pred_check
      _
    $region55: #{tpu_custom_call.1} parent=1 // pred_check_branch
      %50 = sbr.rel (0) target = $region57
    $region56: #{tpu_custom_call.1} parent=1 // pred_region
      _
    $region57: #{tpu_custom_call.1} parent=1 // pred_fallthru
      _
    // Predicated region
    $region58: #{tpu_custom_call.1} parent=1 // pred_check
      _
    $region59: #{tpu_custom_call.1} parent=1 // pred_check_branch
      %52 = sbr.rel (0) target = $region61
    $region60: #{tpu_custom_call.1} parent=1 // pred_region
      _
    $region61: #{tpu_custom_call.1} parent=1 // pred_fallthru
      _
    // Predicated region
    $region62: #{tpu_custom_call.1} parent=1 // pred_check
      _
    $region63: #{tpu_custom_call.1} parent=1 // pred_check_branch
      %54 = sbr.rel (0) target = $region65
    $region64: #{tpu_custom_call.1} parent=1 // pred_region
      _
    $region65: #{tpu_custom_call.1} parent=1 // pred_fallthru
      _
    // Predicated region
    $region66: #{tpu_custom_call.1} parent=1 // pred_check
      _
    $region67: #{tpu_custom_call.1} parent=1 // pred_check_branch
      %56 = sbr.rel (0) target = $region69
    $region68: #{tpu_custom_call.1} parent=1 // pred_region
      _
    $region69: #{tpu_custom_call.1} parent=1 // pred_fallthru
      _
    %v57 = vld [vmem:[%s0] sm:$0xff]
    %v58 = vld [vmem:[%s0 + $0x8] sm:$0xff]
    %v59 = vld [vmem:[%s1] sm:$0x1]
    %v60 = vld [vmem:[%s2] sm:$0x1]
    %vm61 = vcmask 261120
    %v62 = vsel %vm61, %v57, 0.0
    %63 = vadd.xlane.f32.xlu0 %v62
    %v64 = vpop.xlane.xlu0 %63
    %v65 = vsel %vm61, %v58, 0.0
    %66 = vadd.xlane.f32.xlu0 %v65
    %v67 = vpop.xlane.xlu0 %66
    %v68 = vrcp.pop 32.0
    %v69 = vmul.f32 %v64, %v68
    %v70 = vmul.f32 %v67, %v68
    %v71 = vsub.f32 %v57, %v69
    %v72 = vsub.f32 %v58, %v70
    %v73 = vmul.f32 %v71, %v71
    %v74 = vmul.f32 %v72, %v72
    %v75 = vsel %vm61, %v73, 0.0
    %76 = vadd.xlane.f32.xlu0 %v75
    %v77 = vpop.xlane.xlu0 %76
    %v78 = vsel %vm61, %v74, 0.0
    %79 = vadd.xlane.f32.xlu0 %v78
    %v80 = vpop.xlane.xlu0 %79
    %v81 = vmul.f32 %v77, %v68
    %v82 = vmul.f32 %v80, %v68
    %v83 = vadd.f32 %v81, 1e-05
    %v84 = vadd.f32 %v82, 1e-05
    %v85 = vrsqrt.pop %v83
    %v86 = vrsqrt.pop %v84
    %v87 = vmul.f32 %v71, %v85
    %v88 = vmul.f32 %v72, %v86
    %v90 = vlaneseq
    %v91 = vshrl.u32 %v90, 7
    %v92 = vsub.s32 0, %v91
    %v93 = vrot.slane %v59, %v92
    %v95 = vmul.f32 %v87, %v93
    %v96 = vmul.f32 %v88, %v93
    %v98 = vlaneseq
    %v99 = vshrl.u32 %v98, 7
    %v100 = vsub.s32 0, %v99
    %v101 = vrot.slane %v60, %v100
    %v103 = vadd.f32 %v95, %v101
    %v104 = vadd.f32 %v96, %v101
    %v105 = vld [vmem:[%s3] sm:$0xff]
    %v106 = vld [vmem:[%s3 + $0x8] sm:$0xff]
    %v107 = vld [vmem:[%s3 + $0x10] sm:$0xff]
    %v108 = vld [vmem:[%s3 + $0x18] sm:$0xff]
    %v109 = vld [vmem:[%s3 + $0x20] sm:$0xff]
    %v110 = vld [vmem:[%s3 + $0x28] sm:$0xff]
    %v111 = vld [vmem:[%s3 + $0x30] sm:$0xff]
    %v112 = vld [vmem:[%s3 + $0x38] sm:$0xff]
    %v113 = vld [vmem:[%s3 + $0x40] sm:$0xff]
    %v114 = vld [vmem:[%s3 + $0x48] sm:$0xff]
    %v115 = vld [vmem:[%s3 + $0x50] sm:$0xff]
    %v116 = vld [vmem:[%s3 + $0x58] sm:$0xff]
    %v117 = vld [vmem:[%s3 + $0x60] sm:$0xff]
    %v118 = vld [vmem:[%s3 + $0x68] sm:$0xff]
    %v119 = vld [vmem:[%s3 + $0x70] sm:$0xff]
    %v120 = vld [vmem:[%s3 + $0x78] sm:$0xff]
    %v121 = vld [vmem:[%s4] sm:$0x1]
    %v122 = vld [vmem:[%s4 + $0x1] sm:$0x1]
    %v123 = vld [vmem:[%s4 + $0x2] sm:$0x1]
    %v124 = vld [vmem:[%s4 + $0x3] sm:$0x1]
    %v129 = vlaneseq
    %v130 = vshrl.u32 %v129, 7
    %v131 = vsub.s32 0, %v130
    %v132 = vrot.slane %v121, %v131
    %v133 = vlaneseq
    %v134 = vshrl.u32 %v133, 7
    %v135 = vsub.s32 0, %v134
    %v136 = vrot.slane %v122, %v135
    %v137 = vlaneseq
    %v138 = vshrl.u32 %v137, 7
    %v139 = vsub.s32 0, %v138
    %v140 = vrot.slane %v123, %v139
    %v141 = vlaneseq
    %v142 = vshrl.u32 %v141, 7
    %v143 = vsub.s32 0, %v142
    %v144 = vrot.slane %v124, %v143
    %v150 = vsel %vm61, %v103, 0
    %152 = vmatprep.subr.mxu0 0.0
    %153 = vmatpush1.msra.mxu0 %v105
    %154 = vmatprep.subr.mxu0 0.0
    %155 = vmatpush1.msra.mxu0 %v106
    %156 = vmatprep.subr.mxu0 0.0
    %157 = vmatpush1.msra.mxu0 %v107
    %158 = vmatprep.subr.mxu0 0.0
    %159 = vmatpush1.msra.mxu0 %v108
    %160 = vmatprep.subr.mxu0 0.0
    %161 = vmatpush1.msra.mxu0 0.0
    %162 = vmatprep.subr.mxu0 0.0
    %163 = vmatpush1.msra.mxu0 0.0
    %164 = vmatprep.subr.mxu0 0.0
    %165 = vmatpush1.msra.mxu0 0.0
    %166 = vmatprep.subr.mxu0 0.0
    %167 = vmatpush1.msra.mxu0 0.0
    %168 = vmatprep.subr.mxu0 0.0
    %169 = vmatpush1.msra.mxu0 0.0
    %170 = vmatprep.subr.mxu0 0.0
    %171 = vmatpush1.msra.mxu0 0.0
    %172 = vmatprep.subr.mxu0 0.0
    %173 = vmatpush1.msra.mxu0 0.0
    %174 = vmatprep.subr.mxu0 0.0
    %175 = vmatpush1.msra.mxu0 0.0
    %176 = vmatprep.subr.mxu0 0.0
    %177 = vmatpush1.msra.mxu0 0.0
    %178 = vmatprep.subr.mxu0 0.0
    %179 = vmatpush1.msra.mxu0 0.0
    %180 = vmatprep.subr.mxu0 0.0
    %181 = vmatpush1.msra.mxu0 0.0
    %182 = vmatprep.subr.mxu0 0.0
    %183 = vmatpush1.msra.mxu0 0.0
    %184 = vmatprep.subr.mxu0 0.0
    %185 = vmatpush1.msra.mxu0 0.0
    %186 = vmatprep.subr.mxu0 0.0
    %187 = vmatpush1.msra.mxu0 0.0
    %188 = vmatprep.subr.mxu0 0.0
    %189 = vmatpush1.msra.mxu0 0.0
    %190 = vmatprep.subr.mxu0 0.0
    %191 = vmatpush1.msra.mxu0 0.0
    %192 = vmatprep.subr.mxu0 0.0
    %193 = vmatpush1.msra.mxu0 0.0
    %194 = vmatprep.subr.mxu0 0.0
    %195 = vmatpush1.msra.mxu0 0.0
    %196 = vmatprep.subr.mxu0 0.0
    %197 = vmatpush1.msra.mxu0 0.0
    %198 = vmatprep.subr.mxu0 0.0
    %199 = vmatpush1.msra.mxu0 0.0
    %200 = vmatprep.subr.mxu0 0.0
    %201 = vmatpush1.msra.mxu0 0.0
    %202 = vmatprep.subr.mxu0 0.0
    %203 = vmatpush1.msra.mxu0 0.0
    %204 = vmatprep.subr.mxu0 0.0
    %205 = vmatpush1.msra.mxu0 0.0
    %206 = vmatprep.subr.mxu0 0.0
    %207 = vmatpush1.msra.mxu0 0.0
    %208 = vmatprep.subr.mxu0 0.0
    %209 = vmatpush1.msra.mxu0 0.0
    %210 = vmatprep.subr.mxu0 0.0
    %211 = vmatpush1.msra.mxu0 0.0
    %212 = vmatprep.subr.mxu0 0.0
    %213 = vmatpush1.msra.mxu0 0.0
    %214 = vmatprep.subr.mxu0 0.0
    %215 = vmatpush1.msra.mxu0 0.0
    %216 = vmatprep.mubr.f32.mxu0 0.0
    %217 = vmatmul.mubr.f32.gmra.mrb[0].mxu0 %v150
    %v218 = vpop.f32.mrb[0].mxu0
    %v219 = vadd.f32 %v132, %v218
    %v220 = vpop.f32.mrb[0].mxu0
    %221 = vdwg.mxu0
    %222 = vmatprep.subr.mxu0 0.0
    %223 = vmatpush1.msra.mxu0 %v109
    %224 = vmatprep.subr.mxu0 0.0
    %225 = vmatpush1.msra.mxu0 %v110
    %226 = vmatprep.subr.mxu0 0.0
    %227 = vmatpush1.msra.mxu0 %v111
    %228 = vmatprep.subr.mxu0 0.0
    %229 = vmatpush1.msra.mxu0 %v112
    %230 = vmatprep.subr.mxu0 0.0
    %231 = vmatpush1.msra.mxu0 0.0
    %232 = vmatprep.subr.mxu0 0.0
    %233 = vmatpush1.msra.mxu0 0.0
    %234 = vmatprep.subr.mxu0 0.0
    %235 = vmatpush1.msra.mxu0 0.0
    %236 = vmatprep.subr.mxu0 0.0
    %237 = vmatpush1.msra.mxu0 0.0
    %238 = vmatprep.subr.mxu0 0.0
    %239 = vmatpush1.msra.mxu0 0.0
    %240 = vmatprep.subr.mxu0 0.0
    %241 = vmatpush1.msra.mxu0 0.0
    %242 = vmatprep.subr.mxu0 0.0
    %243 = vmatpush1.msra.mxu0 0.0
    %244 = vmatprep.subr.mxu0 0.0
    %245 = vmatpush1.msra.mxu0 0.0
    %246 = vmatprep.subr.mxu0 0.0
    %247 = vmatpush1.msra.mxu0 0.0
    %248 = vmatprep.subr.mxu0 0.0
    %249 = vmatpush1.msra.mxu0 0.0
    %250 = vmatprep.subr.mxu0 0.0
    %251 = vmatpush1.msra.mxu0 0.0
    %252 = vmatprep.subr.mxu0 0.0
    %253 = vmatpush1.msra.mxu0 0.0
    %254 = vmatprep.subr.mxu0 0.0
    %255 = vmatpush1.msra.mxu0 0.0
    %256 = vmatprep.subr.mxu0 0.0
    %257 = vmatpush1.msra.mxu0 0.0
    %258 = vmatprep.subr.mxu0 0.0
    %259 = vmatpush1.msra.mxu0 0.0
    %260 = vmatprep.subr.mxu0 0.0
    %261 = vmatpush1.msra.mxu0 0.0
    %262 = vmatprep.subr.mxu0 0.0
    %263 = vmatpush1.msra.mxu0 0.0
    %264 = vmatprep.subr.mxu0 0.0
    %265 = vmatpush1.msra.mxu0 0.0
    %266 = vmatprep.subr.mxu0 0.0
    %267 = vmatpush1.msra.mxu0 0.0
    %268 = vmatprep.subr.mxu0 0.0
    %269 = vmatpush1.msra.mxu0 0.0
    %270 = vmatprep.subr.mxu0 0.0
    %271 = vmatpush1.msra.mxu0 0.0
    %272 = vmatprep.subr.mxu0 0.0
    %273 = vmatpush1.msra.mxu0 0.0
    %274 = vmatprep.subr.mxu0 0.0
    %275 = vmatpush1.msra.mxu0 0.0
    %276 = vmatprep.subr.mxu0 0.0
    %277 = vmatpush1.msra.mxu0 0.0
    %278 = vmatprep.subr.mxu0 0.0
    %279 = vmatpush1.msra.mxu0 0.0
    %280 = vmatprep.subr.mxu0 0.0
    %281 = vmatpush1.msra.mxu0 0.0
    %282 = vmatprep.subr.mxu0 0.0
    %283 = vmatpush1.msra.mxu0 0.0
    %284 = vmatprep.subr.mxu0 0.0
    %285 = vmatpush1.msra.mxu0 0.0
    %286 = vmatprep.mubr.f32.mxu0 0.0
    %287 = vmatmul.mubr.f32.gmra.mrb[0].mxu0 %v150
    %v288 = vpop.f32.mrb[0].mxu0
    %v289 = vadd.f32 %v136, %v288
    %v290 = vpop.f32.mrb[0].mxu0
    %291 = vdwg.mxu0
    %292 = vmatprep.subr.mxu0 0.0
    %293 = vmatpush1.msra.mxu0 %v113
    %294 = vmatprep.subr.mxu0 0.0
    %295 = vmatpush1.msra.mxu0 %v114
    %296 = vmatprep.subr.mxu0 0.0
    %297 = vmatpush1.msra.mxu0 %v115
    %298 = vmatprep.subr.mxu0 0.0
    %299 = vmatpush1.msra.mxu0 %v116
    %300 = vmatprep.subr.mxu0 0.0
    %301 = vmatpush1.msra.mxu0 0.0
    %302 = vmatprep.subr.mxu0 0.0
    %303 = vmatpush1.msra.mxu0 0.0
    %304 = vmatprep.subr.mxu0 0.0
    %305 = vmatpush1.msra.mxu0 0.0
    %306 = vmatprep.subr.mxu0 0.0
    %307 = vmatpush1.msra.mxu0 0.0
    %308 = vmatprep.subr.mxu0 0.0
    %309 = vmatpush1.msra.mxu0 0.0
    %310 = vmatprep.subr.mxu0 0.0
    %311 = vmatpush1.msra.mxu0 0.0
    %312 = vmatprep.subr.mxu0 0.0
    %313 = vmatpush1.msra.mxu0 0.0
    %314 = vmatprep.subr.mxu0 0.0
    %315 = vmatpush1.msra.mxu0 0.0
    %316 = vmatprep.subr.mxu0 0.0
    %317 = vmatpush1.msra.mxu0 0.0
    %318 = vmatprep.subr.mxu0 0.0
    %319 = vmatpush1.msra.mxu0 0.0
    %320 = vmatprep.subr.mxu0 0.0
    %321 = vmatpush1.msra.mxu0 0.0
    %322 = vmatprep.subr.mxu0 0.0
    %323 = vmatpush1.msra.mxu0 0.0
    %324 = vmatprep.subr.mxu0 0.0
    %325 = vmatpush1.msra.mxu0 0.0
    %326 = vmatprep.subr.mxu0 0.0
    %327 = vmatpush1.msra.mxu0 0.0
    %328 = vmatprep.subr.mxu0 0.0
    %329 = vmatpush1.msra.mxu0 0.0
    %330 = vmatprep.subr.mxu0 0.0
    %331 = vmatpush1.msra.mxu0 0.0
    %332 = vmatprep.subr.mxu0 0.0
    %333 = vmatpush1.msra.mxu0 0.0
    %334 = vmatprep.subr.mxu0 0.0
    %335 = vmatpush1.msra.mxu0 0.0
    %336 = vmatprep.subr.mxu0 0.0
    %337 = vmatpush1.msra.mxu0 0.0
    %338 = vmatprep.subr.mxu0 0.0
    %339 = vmatpush1.msra.mxu0 0.0
    %340 = vmatprep.subr.mxu0 0.0
    %341 = vmatpush1.msra.mxu0 0.0
    %342 = vmatprep.subr.mxu0 0.0
    %343 = vmatpush1.msra.mxu0 0.0
    %344 = vmatprep.subr.mxu0 0.0
    %345 = vmatpush1.msra.mxu0 0.0
    %346 = vmatprep.subr.mxu0 0.0
    %347 = vmatpush1.msra.mxu0 0.0
    %348 = vmatprep.subr.mxu0 0.0
    %349 = vmatpush1.msra.mxu0 0.0
    %350 = vmatprep.subr.mxu0 0.0
    %351 = vmatpush1.msra.mxu0 0.0
    %352 = vmatprep.subr.mxu0 0.0
    %353 = vmatpush1.msra.mxu0 0.0
    %354 = vmatprep.subr.mxu0 0.0
    %355 = vmatpush1.msra.mxu0 0.0
    %356 = vmatprep.mubr.f32.mxu0 0.0
    %357 = vmatmul.mubr.f32.gmra.mrb[0].mxu0 %v150
    %v358 = vpop.f32.mrb[0].mxu0
    %v359 = vadd.f32 %v140, %v358
    %v360 = vpop.f32.mrb[0].mxu0
    %361 = vdwg.mxu0
    %362 = vmatprep.subr.mxu0 0.0
    %363 = vmatpush1.msra.mxu0 %v117
    %364 = vmatprep.subr.mxu0 0.0
    %365 = vmatpush1.msra.mxu0 %v118
    %366 = vmatprep.subr.mxu0 0.0
    %367 = vmatpush1.msra.mxu0 %v119
    %368 = vmatprep.subr.mxu0 0.0
    %369 = vmatpush1.msra.mxu0 %v120
    %370 = vmatprep.subr.mxu0 0.0
    %371 = vmatpush1.msra.mxu0 0.0
    %372 = vmatprep.subr.mxu0 0.0
    %373 = vmatpush1.msra.mxu0 0.0
    %374 = vmatprep.subr.mxu0 0.0
    %375 = vmatpush1.msra.mxu0 0.0
    %376 = vmatprep.subr.mxu0 0.0
    %377 = vmatpush1.msra.mxu0 0.0
    %378 = vmatprep.subr.mxu0 0.0
    %379 = vmatpush1.msra.mxu0 0.0
    %380 = vmatprep.subr.mxu0 0.0
    %381 = vmatpush1.msra.mxu0 0.0
    %382 = vmatprep.subr.mxu0 0.0
    %383 = vmatpush1.msra.mxu0 0.0
    %384 = vmatprep.subr.mxu0 0.0
    %385 = vmatpush1.msra.mxu0 0.0
    %386 = vmatprep.subr.mxu0 0.0
    %387 = vmatpush1.msra.mxu0 0.0
    %388 = vmatprep.subr.mxu0 0.0
    %389 = vmatpush1.msra.mxu0 0.0
    %390 = vmatprep.subr.mxu0 0.0
    %391 = vmatpush1.msra.mxu0 0.0
    %392 = vmatprep.subr.mxu0 0.0
    %393 = vmatpush1.msra.mxu0 0.0
    %394 = vmatprep.subr.mxu0 0.0
    %395 = vmatpush1.msra.mxu0 0.0
    %396 = vmatprep.subr.mxu0 0.0
    %397 = vmatpush1.msra.mxu0 0.0
    %398 = vmatprep.subr.mxu0 0.0
    %399 = vmatpush1.msra.mxu0 0.0
    %400 = vmatprep.subr.mxu0 0.0
    %401 = vmatpush1.msra.mxu0 0.0
    %402 = vmatprep.subr.mxu0 0.0
    %403 = vmatpush1.msra.mxu0 0.0
    %404 = vmatprep.subr.mxu0 0.0
    %405 = vmatpush1.msra.mxu0 0.0
    %406 = vmatprep.subr.mxu0 0.0
    %407 = vmatpush1.msra.mxu0 0.0
    %408 = vmatprep.subr.mxu0 0.0
    %409 = vmatpush1.msra.mxu0 0.0
    %410 = vmatprep.subr.mxu0 0.0
    %411 = vmatpush1.msra.mxu0 0.0
    %412 = vmatprep.subr.mxu0 0.0
    %413 = vmatpush1.msra.mxu0 0.0
    %414 = vmatprep.subr.mxu0 0.0
    %415 = vmatpush1.msra.mxu0 0.0
    %416 = vmatprep.subr.mxu0 0.0
    %417 = vmatpush1.msra.mxu0 0.0
    %418 = vmatprep.subr.mxu0 0.0
    %419 = vmatpush1.msra.mxu0 0.0
    %420 = vmatprep.subr.mxu0 0.0
    %421 = vmatpush1.msra.mxu0 0.0
    %422 = vmatprep.subr.mxu0 0.0
    %423 = vmatpush1.msra.mxu0 0.0
    %424 = vmatprep.subr.mxu0 0.0
    %425 = vmatpush1.msra.mxu0 0.0
    %426 = vmatprep.mubr.f32.mxu0 0.0
    %427 = vmatmul.mubr.f32.gmra.mrb[0].mxu0 %v150
    %v428 = vpop.f32.mrb[0].mxu0
    %v429 = vadd.f32 %v144, %v428
    %v430 = vpop.f32.mrb[0].mxu0
    %431 = vdwg.mxu0
    %v433 = vsel %vm61, %v104, 0
    %435 = vmatprep.subr.mxu0 0.0
    %436 = vmatpush1.msra.mxu0 %v105
    %437 = vmatprep.subr.mxu0 0.0
    %438 = vmatpush1.msra.mxu0 %v106
    %439 = vmatprep.subr.mxu0 0.0
    %440 = vmatpush1.msra.mxu0 %v107
    %441 = vmatprep.subr.mxu0 0.0
    %442 = vmatpush1.msra.mxu0 %v108
    %443 = vmatprep.subr.mxu0 0.0
    %444 = vmatpush1.msra.mxu0 0.0
    %445 = vmatprep.subr.mxu0 0.0
    %446 = vmatpush1.msra.mxu0 0.0
    %447 = vmatprep.subr.mxu0 0.0
    %448 = vmatpush1.msra.mxu0 0.0
    %449 = vmatprep.subr.mxu0 0.0
    %450 = vmatpush1.msra.mxu0 0.0
    %451 = vmatprep.subr.mxu0 0.0
    %452 = vmatpush1.msra.mxu0 0.0
    %453 = vmatprep.subr.mxu0 0.0
    %454 = vmatpush1.msra.mxu0 0.0
    %455 = vmatprep.subr.mxu0 0.0
    %456 = vmatpush1.msra.mxu0 0.0
    %457 = vmatprep.subr.mxu0 0.0
    %458 = vmatpush1.msra.mxu0 0.0
    %459 = vmatprep.subr.mxu0 0.0
    %460 = vmatpush1.msra.mxu0 0.0
    %461 = vmatprep.subr.mxu0 0.0
    %462 = vmatpush1.msra.mxu0 0.0
    %463 = vmatprep.subr.mxu0 0.0
    %464 = vmatpush1.msra.mxu0 0.0
    %465 = vmatprep.subr.mxu0 0.0
    %466 = vmatpush1.msra.mxu0 0.0
    %467 = vmatprep.subr.mxu0 0.0
    %468 = vmatpush1.msra.mxu0 0.0
    %469 = vmatprep.subr.mxu0 0.0
    %470 = vmatpush1.msra.mxu0 0.0
    %471 = vmatprep.subr.mxu0 0.0
    %472 = vmatpush1.msra.mxu0 0.0
    %473 = vmatprep.subr.mxu0 0.0
    %474 = vmatpush1.msra.mxu0 0.0
    %475 = vmatprep.subr.mxu0 0.0
    %476 = vmatpush1.msra.mxu0 0.0
    %477 = vmatprep.subr.mxu0 0.0
    %478 = vmatpush1.msra.mxu0 0.0
    %479 = vmatprep.subr.mxu0 0.0
    %480 = vmatpush1.msra.mxu0 0.0
    %481 = vmatprep.subr.mxu0 0.0
    %482 = vmatpush1.msra.mxu0 0.0
    %483 = vmatprep.subr.mxu0 0.0
    %484 = vmatpush1.msra.mxu0 0.0
    %485 = vmatprep.subr.mxu0 0.0
    %486 = vmatpush1.msra.mxu0 0.0
    %487 = vmatprep.subr.mxu0 0.0
    %488 = vmatpush1.msra.mxu0 0.0
    %489 = vmatprep.subr.mxu0 0.0
    %490 = vmatpush1.msra.mxu0 0.0
    %491 = vmatprep.subr.mxu0 0.0
    %492 = vmatpush1.msra.mxu0 0.0
    %493 = vmatprep.subr.mxu0 0.0
    %494 = vmatpush1.msra.mxu0 0.0
    %495 = vmatprep.subr.mxu0 0.0
    %496 = vmatpush1.msra.mxu0 0.0
    %497 = vmatprep.subr.mxu0 0.0
    %498 = vmatpush1.msra.mxu0 0.0
    %499 = vmatprep.mubr.f32.mxu0 0.0
    %500 = vmatmul.mubr.f32.gmra.mrb[0].mxu0 %v433
    %v501 = vpop.f32.mrb[0].mxu0
    %v502 = vadd.f32 %v132, %v501
    %v503 = vpop.f32.mrb[0].mxu0
    %504 = vdwg.mxu0
    %505 = vmatprep.subr.mxu0 0.0
    %506 = vmatpush1.msra.mxu0 %v109
    %507 = vmatprep.subr.mxu0 0.0
    %508 = vmatpush1.msra.mxu0 %v110
    %509 = vmatprep.subr.mxu0 0.0
    %510 = vmatpush1.msra.mxu0 %v111
    %511 = vmatprep.subr.mxu0 0.0
    %512 = vmatpush1.msra.mxu0 %v112
    %513 = vmatprep.subr.mxu0 0.0
    %514 = vmatpush1.msra.mxu0 0.0
    %515 = vmatprep.subr.mxu0 0.0
    %516 = vmatpush1.msra.mxu0 0.0
    %517 = vmatprep.subr.mxu0 0.0
    %518 = vmatpush1.msra.mxu0 0.0
    %519 = vmatprep.subr.mxu0 0.0
    %520 = vmatpush1.msra.mxu0 0.0
    %521 = vmatprep.subr.mxu0 0.0
    %522 = vmatpush1.msra.mxu0 0.0
    %523 = vmatprep.subr.mxu0 0.0
    %524 = vmatpush1.msra.mxu0 0.0
    %525 = vmatprep.subr.mxu0 0.0
    %526 = vmatpush1.msra.mxu0 0.0
    %527 = vmatprep.subr.mxu0 0.0
    %528 = vmatpush1.msra.mxu0 0.0
    %529 = vmatprep.subr.mxu0 0.0
    %530 = vmatpush1.msra.mxu0 0.0
    %531 = vmatprep.subr.mxu0 0.0
    %532 = vmatpush1.msra.mxu0 0.0
    %533 = vmatprep.subr.mxu0 0.0
    %534 = vmatpush1.msra.mxu0 0.0
    %535 = vmatprep.subr.mxu0 0.0
    %536 = vmatpush1.msra.mxu0 0.0
    %537 = vmatprep.subr.mxu0 0.0
    %538 = vmatpush1.msra.mxu0 0.0
    %539 = vmatprep.subr.mxu0 0.0
    %540 = vmatpush1.msra.mxu0 0.0
    %541 = vmatprep.subr.mxu0 0.0
    %542 = vmatpush1.msra.mxu0 0.0
    %543 = vmatprep.subr.mxu0 0.0
    %544 = vmatpush1.msra.mxu0 0.0
    %545 = vmatprep.subr.mxu0 0.0
    %546 = vmatpush1.msra.mxu0 0.0
    %547 = vmatprep.subr.mxu0 0.0
    %548 = vmatpush1.msra.mxu0 0.0
    %549 = vmatprep.subr.mxu0 0.0
    %550 = vmatpush1.msra.mxu0 0.0
    %551 = vmatprep.subr.mxu0 0.0
    %552 = vmatpush1.msra.mxu0 0.0
    %553 = vmatprep.subr.mxu0 0.0
    %554 = vmatpush1.msra.mxu0 0.0
    %555 = vmatprep.subr.mxu0 0.0
    %556 = vmatpush1.msra.mxu0 0.0
    %557 = vmatprep.subr.mxu0 0.0
    %558 = vmatpush1.msra.mxu0 0.0
    %559 = vmatprep.subr.mxu0 0.0
    %560 = vmatpush1.msra.mxu0 0.0
    %561 = vmatprep.subr.mxu0 0.0
    %562 = vmatpush1.msra.mxu0 0.0
    %563 = vmatprep.subr.mxu0 0.0
    %564 = vmatpush1.msra.mxu0 0.0
    %565 = vmatprep.subr.mxu0 0.0
    %566 = vmatpush1.msra.mxu0 0.0
    %567 = vmatprep.subr.mxu0 0.0
    %568 = vmatpush1.msra.mxu0 0.0
    %569 = vmatprep.mubr.f32.mxu0 0.0
    %570 = vmatmul.mubr.f32.gmra.mrb[0].mxu0 %v433
    %v571 = vpop.f32.mrb[0].mxu0
    %v572 = vadd.f32 %v136, %v571
    %v573 = vpop.f32.mrb[0].mxu0
    %574 = vdwg.mxu0
    %575 = vmatprep.subr.mxu0 0.0
    %576 = vmatpush1.msra.mxu0 %v113
    %577 = vmatprep.subr.mxu0 0.0
    %578 = vmatpush1.msra.mxu0 %v114
    %579 = vmatprep.subr.mxu0 0.0
    %580 = vmatpush1.msra.mxu0 %v115
    %581 = vmatprep.subr.mxu0 0.0
    %582 = vmatpush1.msra.mxu0 %v116
    %583 = vmatprep.subr.mxu0 0.0
    %584 = vmatpush1.msra.mxu0 0.0
    %585 = vmatprep.subr.mxu0 0.0
    %586 = vmatpush1.msra.mxu0 0.0
    %587 = vmatprep.subr.mxu0 0.0
    %588 = vmatpush1.msra.mxu0 0.0
    %589 = vmatprep.subr.mxu0 0.0
    %590 = vmatpush1.msra.mxu0 0.0
    %591 = vmatprep.subr.mxu0 0.0
    %592 = vmatpush1.msra.mxu0 0.0
    %593 = vmatprep.subr.mxu0 0.0
    %594 = vmatpush1.msra.mxu0 0.0
    %595 = vmatprep.subr.mxu0 0.0
    %596 = vmatpush1.msra.mxu0 0.0
    %597 = vmatprep.subr.mxu0 0.0
    %598 = vmatpush1.msra.mxu0 0.0
    %599 = vmatprep.subr.mxu0 0.0
    %600 = vmatpush1.msra.mxu0 0.0
    %601 = vmatprep.subr.mxu0 0.0
    %602 = vmatpush1.msra.mxu0 0.0
    %603 = vmatprep.subr.mxu0 0.0
    %604 = vmatpush1.msra.mxu0 0.0
    %605 = vmatprep.subr.mxu0 0.0
    %606 = vmatpush1.msra.mxu0 0.0
    %607 = vmatprep.subr.mxu0 0.0
    %608 = vmatpush1.msra.mxu0 0.0
    %609 = vmatprep.subr.mxu0 0.0
    %610 = vmatpush1.msra.mxu0 0.0
    %611 = vmatprep.subr.mxu0 0.0
    %612 = vmatpush1.msra.mxu0 0.0
    %613 = vmatprep.subr.mxu0 0.0
    %614 = vmatpush1.msra.mxu0 0.0
    %615 = vmatprep.subr.mxu0 0.0
    %616 = vmatpush1.msra.mxu0 0.0
    %617 = vmatprep.subr.mxu0 0.0
    %618 = vmatpush1.msra.mxu0 0.0
    %619 = vmatprep.subr.mxu0 0.0
    %620 = vmatpush1.msra.mxu0 0.0
    %621 = vmatprep.subr.mxu0 0.0
    %622 = vmatpush1.msra.mxu0 0.0
    %623 = vmatprep.subr.mxu0 0.0
    %624 = vmatpush1.msra.mxu0 0.0
    %625 = vmatprep.subr.mxu0 0.0
    %626 = vmatpush1.msra.mxu0 0.0
    %627 = vmatprep.subr.mxu0 0.0
    %628 = vmatpush1.msra.mxu0 0.0
    %629 = vmatprep.subr.mxu0 0.0
    %630 = vmatpush1.msra.mxu0 0.0
    %631 = vmatprep.subr.mxu0 0.0
    %632 = vmatpush1.msra.mxu0 0.0
    %633 = vmatprep.subr.mxu0 0.0
    %634 = vmatpush1.msra.mxu0 0.0
    %635 = vmatprep.subr.mxu0 0.0
    %636 = vmatpush1.msra.mxu0 0.0
    %637 = vmatprep.subr.mxu0 0.0
    %638 = vmatpush1.msra.mxu0 0.0
    %639 = vmatprep.mubr.f32.mxu0 0.0
    %640 = vmatmul.mubr.f32.gmra.mrb[0].mxu0 %v433
    %v641 = vpop.f32.mrb[0].mxu0
    %v642 = vadd.f32 %v140, %v641
    %v643 = vpop.f32.mrb[0].mxu0
    %644 = vdwg.mxu0
    %645 = vmatprep.subr.mxu0 0.0
    %646 = vmatpush1.msra.mxu0 %v117
    %647 = vmatprep.subr.mxu0 0.0
    %648 = vmatpush1.msra.mxu0 %v118
    %649 = vmatprep.subr.mxu0 0.0
    %650 = vmatpush1.msra.mxu0 %v119
    %651 = vmatprep.subr.mxu0 0.0
    %652 = vmatpush1.msra.mxu0 %v120
    %653 = vmatprep.subr.mxu0 0.0
    %654 = vmatpush1.msra.mxu0 0.0
    %655 = vmatprep.subr.mxu0 0.0
    %656 = vmatpush1.msra.mxu0 0.0
    %657 = vmatprep.subr.mxu0 0.0
    %658 = vmatpush1.msra.mxu0 0.0
    %659 = vmatprep.subr.mxu0 0.0
    %660 = vmatpush1.msra.mxu0 0.0
    %661 = vmatprep.subr.mxu0 0.0
    %662 = vmatpush1.msra.mxu0 0.0
    %663 = vmatprep.subr.mxu0 0.0
    %664 = vmatpush1.msra.mxu0 0.0
    %665 = vmatprep.subr.mxu0 0.0
    %666 = vmatpush1.msra.mxu0 0.0
    %667 = vmatprep.subr.mxu0 0.0
    %668 = vmatpush1.msra.mxu0 0.0
    %669 = vmatprep.subr.mxu0 0.0
    %670 = vmatpush1.msra.mxu0 0.0
    %671 = vmatprep.subr.mxu0 0.0
    %672 = vmatpush1.msra.mxu0 0.0
    %673 = vmatprep.subr.mxu0 0.0
    %674 = vmatpush1.msra.mxu0 0.0
    %675 = vmatprep.subr.mxu0 0.0
    %676 = vmatpush1.msra.mxu0 0.0
    %677 = vmatprep.subr.mxu0 0.0
    %678 = vmatpush1.msra.mxu0 0.0
    %679 = vmatprep.subr.mxu0 0.0
    %680 = vmatpush1.msra.mxu0 0.0
    %681 = vmatprep.subr.mxu0 0.0
    %682 = vmatpush1.msra.mxu0 0.0
    %683 = vmatprep.subr.mxu0 0.0
    %684 = vmatpush1.msra.mxu0 0.0
    %685 = vmatprep.subr.mxu0 0.0
    %686 = vmatpush1.msra.mxu0 0.0
    %687 = vmatprep.subr.mxu0 0.0
    %688 = vmatpush1.msra.mxu0 0.0
    %689 = vmatprep.subr.mxu0 0.0
    %690 = vmatpush1.msra.mxu0 0.0
    %691 = vmatprep.subr.mxu0 0.0
    %692 = vmatpush1.msra.mxu0 0.0
    %693 = vmatprep.subr.mxu0 0.0
    %694 = vmatpush1.msra.mxu0 0.0
    %695 = vmatprep.subr.mxu0 0.0
    %696 = vmatpush1.msra.mxu0 0.0
    %697 = vmatprep.subr.mxu0 0.0
    %698 = vmatpush1.msra.mxu0 0.0
    %699 = vmatprep.subr.mxu0 0.0
    %700 = vmatpush1.msra.mxu0 0.0
    %701 = vmatprep.subr.mxu0 0.0
    %702 = vmatpush1.msra.mxu0 0.0
    %703 = vmatprep.subr.mxu0 0.0
    %704 = vmatpush1.msra.mxu0 0.0
    %705 = vmatprep.subr.mxu0 0.0
    %706 = vmatpush1.msra.mxu0 0.0
    %707 = vmatprep.subr.mxu0 0.0
    %708 = vmatpush1.msra.mxu0 0.0
    %709 = vmatprep.mubr.f32.mxu0 0.0
    %710 = vmatmul.mubr.f32.gmra.mrb[0].mxu0 %v433
    %v711 = vpop.f32.mrb[0].mxu0
    %v712 = vadd.f32 %v144, %v711
    %v713 = vpop.f32.mrb[0].mxu0
    %714 = vdwg.mxu0
    %v715 = vld [vmem:[%s5] sm:$0xff]
    %v716 = vld [vmem:[%s5 + $0x8] sm:$0xff]
    %v717 = vld [vmem:[%s5 + $0x10] sm:$0xff]
    %v718 = vld [vmem:[%s5 + $0x18] sm:$0xff]
    %v719 = vld [vmem:[%s5 + $0x20] sm:$0xff]
    %v720 = vld [vmem:[%s5 + $0x28] sm:$0xff]
    %v721 = vld [vmem:[%s5 + $0x30] sm:$0xff]
    %v722 = vld [vmem:[%s5 + $0x38] sm:$0xff]
    %v723 = vld [vmem:[%s5 + $0x40] sm:$0xff]
    %v724 = vld [vmem:[%s5 + $0x48] sm:$0xff]
    %v725 = vld [vmem:[%s5 + $0x50] sm:$0xff]
    %v726 = vld [vmem:[%s5 + $0x58] sm:$0xff]
    %v727 = vld [vmem:[%s5 + $0x60] sm:$0xff]
    %v728 = vld [vmem:[%s5 + $0x68] sm:$0xff]
    %v729 = vld [vmem:[%s5 + $0x70] sm:$0xff]
    %v730 = vld [vmem:[%s5 + $0x78] sm:$0xff]
    %v731 = vld [vmem:[%s6] sm:$0x1]
    %v732 = vld [vmem:[%s6 + $0x1] sm:$0x1]
    %v733 = vld [vmem:[%s6 + $0x2] sm:$0x1]
    %v734 = vld [vmem:[%s6 + $0x3] sm:$0x1]
    %v739 = vlaneseq
    %v740 = vshrl.u32 %v739, 7
    %v741 = vsub.s32 0, %v740
    %v742 = vrot.slane %v731, %v741
    %v743 = vlaneseq
    %v744 = vshrl.u32 %v743, 7
    %v745 = vsub.s32 0, %v744
    %v746 = vrot.slane %v732, %v745
    %v747 = vlaneseq
    %v748 = vshrl.u32 %v747, 7
    %v749 = vsub.s32 0, %v748
    %v750 = vrot.slane %v733, %v749
    %v751 = vlaneseq
    %v752 = vshrl.u32 %v751, 7
    %v753 = vsub.s32 0, %v752
    %v754 = vrot.slane %v734, %v753
    %759 = vmatprep.subr.mxu0 0.0
    %760 = vmatpush1.msra.mxu0 %v715
    %761 = vmatprep.subr.mxu0 0.0
    %762 = vmatpush1.msra.mxu0 %v716
    %763 = vmatprep.subr.mxu0 0.0
    %764 = vmatpush1.msra.mxu0 %v717
    %765 = vmatprep.subr.mxu0 0.0
    %766 = vmatpush1.msra.mxu0 %v718
    %767 = vmatprep.subr.mxu0 0.0
    %768 = vmatpush1.msra.mxu0 0.0
    %769 = vmatprep.subr.mxu0 0.0
    %770 = vmatpush1.msra.mxu0 0.0
    %771 = vmatprep.subr.mxu0 0.0
    %772 = vmatpush1.msra.mxu0 0.0
    %773 = vmatprep.subr.mxu0 0.0
    %774 = vmatpush1.msra.mxu0 0.0
    %775 = vmatprep.subr.mxu0 0.0
    %776 = vmatpush1.msra.mxu0 0.0
    %777 = vmatprep.subr.mxu0 0.0
    %778 = vmatpush1.msra.mxu0 0.0
    %779 = vmatprep.subr.mxu0 0.0
    %780 = vmatpush1.msra.mxu0 0.0
    %781 = vmatprep.subr.mxu0 0.0
    %782 = vmatpush1.msra.mxu0 0.0
    %783 = vmatprep.subr.mxu0 0.0
    %784 = vmatpush1.msra.mxu0 0.0
    %785 = vmatprep.subr.mxu0 0.0
    %786 = vmatpush1.msra.mxu0 0.0
    %787 = vmatprep.subr.mxu0 0.0
    %788 = vmatpush1.msra.mxu0 0.0
    %789 = vmatprep.subr.mxu0 0.0
    %790 = vmatpush1.msra.mxu0 0.0
    %791 = vmatprep.subr.mxu0 0.0
    %792 = vmatpush1.msra.mxu0 0.0
    %793 = vmatprep.subr.mxu0 0.0
    %794 = vmatpush1.msra.mxu0 0.0
    %795 = vmatprep.subr.mxu0 0.0
    %796 = vmatpush1.msra.mxu0 0.0
    %797 = vmatprep.subr.mxu0 0.0
    %798 = vmatpush1.msra.mxu0 0.0
    %799 = vmatprep.subr.mxu0 0.0
    %800 = vmatpush1.msra.mxu0 0.0
    %801 = vmatprep.subr.mxu0 0.0
    %802 = vmatpush1.msra.mxu0 0.0
    %803 = vmatprep.subr.mxu0 0.0
    %804 = vmatpush1.msra.mxu0 0.0
    %805 = vmatprep.subr.mxu0 0.0
    %806 = vmatpush1.msra.mxu0 0.0
    %807 = vmatprep.subr.mxu0 0.0
    %808 = vmatpush1.msra.mxu0 0.0
    %809 = vmatprep.subr.mxu0 0.0
    %810 = vmatpush1.msra.mxu0 0.0
    %811 = vmatprep.subr.mxu0 0.0
    %812 = vmatpush1.msra.mxu0 0.0
    %813 = vmatprep.subr.mxu0 0.0
    %814 = vmatpush1.msra.mxu0 0.0
    %815 = vmatprep.subr.mxu0 0.0
    %816 = vmatpush1.msra.mxu0 0.0
    %817 = vmatprep.subr.mxu0 0.0
    %818 = vmatpush1.msra.mxu0 0.0
    %819 = vmatprep.subr.mxu0 0.0
    %820 = vmatpush1.msra.mxu0 0.0
    %821 = vmatprep.subr.mxu0 0.0
    %822 = vmatpush1.msra.mxu0 0.0
    %823 = vmatprep.mubr.f32.mxu0 0.0
    %824 = vmatmul.mubr.f32.gmra.mrb[0].mxu0 %v150
    %v825 = vpop.f32.mrb[0].mxu0
    %v826 = vadd.f32 %v742, %v825
    %v827 = vpop.f32.mrb[0].mxu0
    %828 = vdwg.mxu0
    %829 = vmatprep.subr.mxu0 0.0
    %830 = vmatpush1.msra.mxu0 %v719
    %831 = vmatprep.subr.mxu0 0.0
    %832 = vmatpush1.msra.mxu0 %v720
    %833 = vmatprep.subr.mxu0 0.0
    %834 = vmatpush1.msra.mxu0 %v721
    %835 = vmatprep.subr.mxu0 0.0
    %836 = vmatpush1.msra.mxu0 %v722
    %837 = vmatprep.subr.mxu0 0.0
    %838 = vmatpush1.msra.mxu0 0.0
    %839 = vmatprep.subr.mxu0 0.0
    %840 = vmatpush1.msra.mxu0 0.0
    %841 = vmatprep.subr.mxu0 0.0
    %842 = vmatpush1.msra.mxu0 0.0
    %843 = vmatprep.subr.mxu0 0.0
    %844 = vmatpush1.msra.mxu0 0.0
    %845 = vmatprep.subr.mxu0 0.0
    %846 = vmatpush1.msra.mxu0 0.0
    %847 = vmatprep.subr.mxu0 0.0
    %848 = vmatpush1.msra.mxu0 0.0
    %849 = vmatprep.subr.mxu0 0.0
    %850 = vmatpush1.msra.mxu0 0.0
    %851 = vmatprep.subr.mxu0 0.0
    %852 = vmatpush1.msra.mxu0 0.0
    %853 = vmatprep.subr.mxu0 0.0
    %854 = vmatpush1.msra.mxu0 0.0
    %855 = vmatprep.subr.mxu0 0.0
    %856 = vmatpush1.msra.mxu0 0.0
    %857 = vmatprep.subr.mxu0 0.0
    %858 = vmatpush1.msra.mxu0 0.0
    %859 = vmatprep.subr.mxu0 0.0
    %860 = vmatpush1.msra.mxu0 0.0
    %861 = vmatprep.subr.mxu0 0.0
    %862 = vmatpush1.msra.mxu0 0.0
    %863 = vmatprep.subr.mxu0 0.0
    %864 = vmatpush1.msra.mxu0 0.0
    %865 = vmatprep.subr.mxu0 0.0
    %866 = vmatpush1.msra.mxu0 0.0
    %867 = vmatprep.subr.mxu0 0.0
    %868 = vmatpush1.msra.mxu0 0.0
    %869 = vmatprep.subr.mxu0 0.0
    %870 = vmatpush1.msra.mxu0 0.0
    %871 = vmatprep.subr.mxu0 0.0
    %872 = vmatpush1.msra.mxu0 0.0
    %873 = vmatprep.subr.mxu0 0.0
    %874 = vmatpush1.msra.mxu0 0.0
    %875 = vmatprep.subr.mxu0 0.0
    %876 = vmatpush1.msra.mxu0 0.0
    %877 = vmatprep.subr.mxu0 0.0
    %878 = vmatpush1.msra.mxu0 0.0
    %879 = vmatprep.subr.mxu0 0.0
    %880 = vmatpush1.msra.mxu0 0.0
    %881 = vmatprep.subr.mxu0 0.0
    %882 = vmatpush1.msra.mxu0 0.0
    %883 = vmatprep.subr.mxu0 0.0
    %884 = vmatpush1.msra.mxu0 0.0
    %885 = vmatprep.subr.mxu0 0.0
    %886 = vmatpush1.msra.mxu0 0.0
    %887 = vmatprep.subr.mxu0 0.0
    %888 = vmatpush1.msra.mxu0 0.0
    %889 = vmatprep.subr.mxu0 0.0
    %890 = vmatpush1.msra.mxu0 0.0
    %891 = vmatprep.subr.mxu0 0.0
    %892 = vmatpush1.msra.mxu0 0.0
    %893 = vmatprep.mubr.f32.mxu0 0.0
    %894 = vmatmul.mubr.f32.gmra.mrb[0].mxu0 %v150
    %v895 = vpop.f32.mrb[0].mxu0
    %v896 = vadd.f32 %v746, %v895
    %v897 = vpop.f32.mrb[0].mxu0
    %898 = vdwg.mxu0
    %899 = vmatprep.subr.mxu0 0.0
    %900 = vmatpush1.msra.mxu0 %v723
    %901 = vmatprep.subr.mxu0 0.0
    %902 = vmatpush1.msra.mxu0 %v724
    %903 = vmatprep.subr.mxu0 0.0
    %904 = vmatpush1.msra.mxu0 %v725
    %905 = vmatprep.subr.mxu0 0.0
    %906 = vmatpush1.msra.mxu0 %v726
    %907 = vmatprep.subr.mxu0 0.0
    %908 = vmatpush1.msra.mxu0 0.0
    %909 = vmatprep.subr.mxu0 0.0
    %910 = vmatpush1.msra.mxu0 0.0
    %911 = vmatprep.subr.mxu0 0.0
    %912 = vmatpush1.msra.mxu0 0.0
    %913 = vmatprep.subr.mxu0 0.0
    %914 = vmatpush1.msra.mxu0 0.0
    %915 = vmatprep.subr.mxu0 0.0
    %916 = vmatpush1.msra.mxu0 0.0
    %917 = vmatprep.subr.mxu0 0.0
    %918 = vmatpush1.msra.mxu0 0.0
    %919 = vmatprep.subr.mxu0 0.0
    %920 = vmatpush1.msra.mxu0 0.0
    %921 = vmatprep.subr.mxu0 0.0
    %922 = vmatpush1.msra.mxu0 0.0
    %923 = vmatprep.subr.mxu0 0.0
    %924 = vmatpush1.msra.mxu0 0.0
    %925 = vmatprep.subr.mxu0 0.0
    %926 = vmatpush1.msra.mxu0 0.0
    %927 = vmatprep.subr.mxu0 0.0
    %928 = vmatpush1.msra.mxu0 0.0
    %929 = vmatprep.subr.mxu0 0.0
    %930 = vmatpush1.msra.mxu0 0.0
    %931 = vmatprep.subr.mxu0 0.0
    %932 = vmatpush1.msra.mxu0 0.0
    %933 = vmatprep.subr.mxu0 0.0
    %934 = vmatpush1.msra.mxu0 0.0
    %935 = vmatprep.subr.mxu0 0.0
    %936 = vmatpush1.msra.mxu0 0.0
    %937 = vmatprep.subr.mxu0 0.0
    %938 = vmatpush1.msra.mxu0 0.0
    %939 = vmatprep.subr.mxu0 0.0
    %940 = vmatpush1.msra.mxu0 0.0
    %941 = vmatprep.subr.mxu0 0.0
    %942 = vmatpush1.msra.mxu0 0.0
    %943 = vmatprep.subr.mxu0 0.0
    %944 = vmatpush1.msra.mxu0 0.0
    %945 = vmatprep.subr.mxu0 0.0
    %946 = vmatpush1.msra.mxu0 0.0
    %947 = vmatprep.subr.mxu0 0.0
    %948 = vmatpush1.msra.mxu0 0.0
    %949 = vmatprep.subr.mxu0 0.0
    %950 = vmatpush1.msra.mxu0 0.0
    %951 = vmatprep.subr.mxu0 0.0
    %952 = vmatpush1.msra.mxu0 0.0
    %953 = vmatprep.subr.mxu0 0.0
    %954 = vmatpush1.msra.mxu0 0.0
    %955 = vmatprep.subr.mxu0 0.0
    %956 = vmatpush1.msra.mxu0 0.0
    %957 = vmatprep.subr.mxu0 0.0
    %958 = vmatpush1.msra.mxu0 0.0
    %959 = vmatprep.subr.mxu0 0.0
    %960 = vmatpush1.msra.mxu0 0.0
    %961 = vmatprep.subr.mxu0 0.0
    %962 = vmatpush1.msra.mxu0 0.0
    %963 = vmatprep.mubr.f32.mxu0 0.0
    %964 = vmatmul.mubr.f32.gmra.mrb[0].mxu0 %v150
    %v965 = vpop.f32.mrb[0].mxu0
    %v966 = vadd.f32 %v750, %v965
    %v967 = vpop.f32.mrb[0].mxu0
    %968 = vdwg.mxu0
    %969 = vmatprep.subr.mxu0 0.0
    %970 = vmatpush1.msra.mxu0 %v727
    %971 = vmatprep.subr.mxu0 0.0
    %972 = vmatpush1.msra.mxu0 %v728
    %973 = vmatprep.subr.mxu0 0.0
    %974 = vmatpush1.msra.mxu0 %v729
    %975 = vmatprep.subr.mxu0 0.0
    %976 = vmatpush1.msra.mxu0 %v730
    %977 = vmatprep.subr.mxu0 0.0
    %978 = vmatpush1.msra.mxu0 0.0
    %979 = vmatprep.subr.mxu0 0.0
    %980 = vmatpush1.msra.mxu0 0.0
    %981 = vmatprep.subr.mxu0 0.0
    %982 = vmatpush1.msra.mxu0 0.0
    %983 = vmatprep.subr.mxu0 0.0
    %984 = vmatpush1.msra.mxu0 0.0
    %985 = vmatprep.subr.mxu0 0.0
    %986 = vmatpush1.msra.mxu0 0.0
    %987 = vmatprep.subr.mxu0 0.0
    %988 = vmatpush1.msra.mxu0 0.0
    %989 = vmatprep.subr.mxu0 0.0
    %990 = vmatpush1.msra.mxu0 0.0
    %991 = vmatprep.subr.mxu0 0.0
    %992 = vmatpush1.msra.mxu0 0.0
    %993 = vmatprep.subr.mxu0 0.0
    %994 = vmatpush1.msra.mxu0 0.0
    %995 = vmatprep.subr.mxu0 0.0
    %996 = vmatpush1.msra.mxu0 0.0
    %997 = vmatprep.subr.mxu0 0.0
    %998 = vmatpush1.msra.mxu0 0.0
    %999 = vmatprep.subr.mxu0 0.0
    %1000 = vmatpush1.msra.mxu0 0.0
    %1001 = vmatprep.subr.mxu0 0.0
    %1002 = vmatpush1.msra.mxu0 0.0
    %1003 = vmatprep.subr.mxu0 0.0
    %1004 = vmatpush1.msra.mxu0 0.0
    %1005 = vmatprep.subr.mxu0 0.0
    %1006 = vmatpush1.msra.mxu0 0.0
    %1007 = vmatprep.subr.mxu0 0.0
    %1008 = vmatpush1.msra.mxu0 0.0
    %1009 = vmatprep.subr.mxu0 0.0
    %1010 = vmatpush1.msra.mxu0 0.0
    %1011 = vmatprep.subr.mxu0 0.0
    %1012 = vmatpush1.msra.mxu0 0.0
    %1013 = vmatprep.subr.mxu0 0.0
    %1014 = vmatpush1.msra.mxu0 0.0
    %1015 = vmatprep.subr.mxu0 0.0
    %1016 = vmatpush1.msra.mxu0 0.0
    %1017 = vmatprep.subr.mxu0 0.0
    %1018 = vmatpush1.msra.mxu0 0.0
    %1019 = vmatprep.subr.mxu0 0.0
    %1020 = vmatpush1.msra.mxu0 0.0
    %1021 = vmatprep.subr.mxu0 0.0
    %1022 = vmatpush1.msra.mxu0 0.0
    %1023 = vmatprep.subr.mxu0 0.0
    %1024 = vmatpush1.msra.mxu0 0.0
    %1025 = vmatprep.subr.mxu0 0.0
    %1026 = vmatpush1.msra.mxu0 0.0
    %1027 = vmatprep.subr.mxu0 0.0
    %1028 = vmatpush1.msra.mxu0 0.0
    %1029 = vmatprep.subr.mxu0 0.0
    %1030 = vmatpush1.msra.mxu0 0.0
    %1031 = vmatprep.subr.mxu0 0.0
    %1032 = vmatpush1.msra.mxu0 0.0
    %1033 = vmatprep.mubr.f32.mxu0 0.0
    %1034 = vmatmul.mubr.f32.gmra.mrb[0].mxu0 %v150
    %v1035 = vpop.f32.mrb[0].mxu0
    %v1036 = vadd.f32 %v754, %v1035
    %v1037 = vpop.f32.mrb[0].mxu0
    %1038 = vdwg.mxu0
    %1039 = vmatprep.subr.mxu0 0.0
    %1040 = vmatpush1.msra.mxu0 %v715
    %1041 = vmatprep.subr.mxu0 0.0
    %1042 = vmatpush1.msra.mxu0 %v716
    %1043 = vmatprep.subr.mxu0 0.0
    %1044 = vmatpush1.msra.mxu0 %v717
    %1045 = vmatprep.subr.mxu0 0.0
    %1046 = vmatpush1.msra.mxu0 %v718
    %1047 = vmatprep.subr.mxu0 0.0
    %1048 = vmatpush1.msra.mxu0 0.0
    %1049 = vmatprep.subr.mxu0 0.0
    %1050 = vmatpush1.msra.mxu0 0.0
    %1051 = vmatprep.subr.mxu0 0.0
    %1052 = vmatpush1.msra.mxu0 0.0
    %1053 = vmatprep.subr.mxu0 0.0
    %1054 = vmatpush1.msra.mxu0 0.0
    %1055 = vmatprep.subr.mxu0 0.0
    %1056 = vmatpush1.msra.mxu0 0.0
    %1057 = vmatprep.subr.mxu0 0.0
    %1058 = vmatpush1.msra.mxu0 0.0
    %1059 = vmatprep.subr.mxu0 0.0
    %1060 = vmatpush1.msra.mxu0 0.0
    %1061 = vmatprep.subr.mxu0 0.0
    %1062 = vmatpush1.msra.mxu0 0.0
    %1063 = vmatprep.subr.mxu0 0.0
    %1064 = vmatpush1.msra.mxu0 0.0
    %1065 = vmatprep.subr.mxu0 0.0
    %1066 = vmatpush1.msra.mxu0 0.0
    %1067 = vmatprep.subr.mxu0 0.0
    %1068 = vmatpush1.msra.mxu0 0.0
    %1069 = vmatprep.subr.mxu0 0.0
    %1070 = vmatpush1.msra.mxu0 0.0
    %1071 = vmatprep.subr.mxu0 0.0
    %1072 = vmatpush1.msra.mxu0 0.0
    %1073 = vmatprep.subr.mxu0 0.0
    %1074 = vmatpush1.msra.mxu0 0.0
    %1075 = vmatprep.subr.mxu0 0.0
    %1076 = vmatpush1.msra.mxu0 0.0
    %1077 = vmatprep.subr.mxu0 0.0
    %1078 = vmatpush1.msra.mxu0 0.0
    %1079 = vmatprep.subr.mxu0 0.0
    %1080 = vmatpush1.msra.mxu0 0.0
    %1081 = vmatprep.subr.mxu0 0.0
    %1082 = vmatpush1.msra.mxu0 0.0
    %1083 = vmatprep.subr.mxu0 0.0
    %1084 = vmatpush1.msra.mxu0 0.0
    %1085 = vmatprep.subr.mxu0 0.0
    %1086 = vmatpush1.msra.mxu0 0.0
    %1087 = vmatprep.subr.mxu0 0.0
    %1088 = vmatpush1.msra.mxu0 0.0
    %1089 = vmatprep.subr.mxu0 0.0
    %1090 = vmatpush1.msra.mxu0 0.0
    %1091 = vmatprep.subr.mxu0 0.0
    %1092 = vmatpush1.msra.mxu0 0.0
    %1093 = vmatprep.subr.mxu0 0.0
    %1094 = vmatpush1.msra.mxu0 0.0
    %1095 = vmatprep.subr.mxu0 0.0
    %1096 = vmatpush1.msra.mxu0 0.0
    %1097 = vmatprep.subr.mxu0 0.0
    %1098 = vmatpush1.msra.mxu0 0.0
    %1099 = vmatprep.subr.mxu0 0.0
    %1100 = vmatpush1.msra.mxu0 0.0
    %1101 = vmatprep.subr.mxu0 0.0
    %1102 = vmatpush1.msra.mxu0 0.0
    %1103 = vmatprep.mubr.f32.mxu0 0.0
    %1104 = vmatmul.mubr.f32.gmra.mrb[0].mxu0 %v433
    %v1105 = vpop.f32.mrb[0].mxu0
    %v1106 = vadd.f32 %v742, %v1105
    %v1107 = vpop.f32.mrb[0].mxu0
    %1108 = vdwg.mxu0
    %1109 = vmatprep.subr.mxu0 0.0
    %1110 = vmatpush1.msra.mxu0 %v719
    %1111 = vmatprep.subr.mxu0 0.0
    %1112 = vmatpush1.msra.mxu0 %v720
    %1113 = vmatprep.subr.mxu0 0.0
    %1114 = vmatpush1.msra.mxu0 %v721
    %1115 = vmatprep.subr.mxu0 0.0
    %1116 = vmatpush1.msra.mxu0 %v722
    %1117 = vmatprep.subr.mxu0 0.0
    %1118 = vmatpush1.msra.mxu0 0.0
    %1119 = vmatprep.subr.mxu0 0.0
    %1120 = vmatpush1.msra.mxu0 0.0
    %1121 = vmatprep.subr.mxu0 0.0
    %1122 = vmatpush1.msra.mxu0 0.0
    %1123 = vmatprep.subr.mxu0 0.0
    %1124 = vmatpush1.msra.mxu0 0.0
    %1125 = vmatprep.subr.mxu0 0.0
    %1126 = vmatpush1.msra.mxu0 0.0
    %1127 = vmatprep.subr.mxu0 0.0
    %1128 = vmatpush1.msra.mxu0 0.0
    %1129 = vmatprep.subr.mxu0 0.0
    %1130 = vmatpush1.msra.mxu0 0.0
    %1131 = vmatprep.subr.mxu0 0.0
    %1132 = vmatpush1.msra.mxu0 0.0
    %1133 = vmatprep.subr.mxu0 0.0
    %1134 = vmatpush1.msra.mxu0 0.0
    %1135 = vmatprep.subr.mxu0 0.0
    %1136 = vmatpush1.msra.mxu0 0.0
    %1137 = vmatprep.subr.mxu0 0.0
    %1138 = vmatpush1.msra.mxu0 0.0
    %1139 = vmatprep.subr.mxu0 0.0
    %1140 = vmatpush1.msra.mxu0 0.0
    %1141 = vmatprep.subr.mxu0 0.0
    %1142 = vmatpush1.msra.mxu0 0.0
    %1143 = vmatprep.subr.mxu0 0.0
    %1144 = vmatpush1.msra.mxu0 0.0
    %1145 = vmatprep.subr.mxu0 0.0
    %1146 = vmatpush1.msra.mxu0 0.0
    %1147 = vmatprep.subr.mxu0 0.0
    %1148 = vmatpush1.msra.mxu0 0.0
    %1149 = vmatprep.subr.mxu0 0.0
    %1150 = vmatpush1.msra.mxu0 0.0
    %1151 = vmatprep.subr.mxu0 0.0
    %1152 = vmatpush1.msra.mxu0 0.0
    %1153 = vmatprep.subr.mxu0 0.0
    %1154 = vmatpush1.msra.mxu0 0.0
    %1155 = vmatprep.subr.mxu0 0.0
    %1156 = vmatpush1.msra.mxu0 0.0
    %1157 = vmatprep.subr.mxu0 0.0
    %1158 = vmatpush1.msra.mxu0 0.0
    %1159 = vmatprep.subr.mxu0 0.0
    %1160 = vmatpush1.msra.mxu0 0.0
    %1161 = vmatprep.subr.mxu0 0.0
    %1162 = vmatpush1.msra.mxu0 0.0
    %1163 = vmatprep.subr.mxu0 0.0
    %1164 = vmatpush1.msra.mxu0 0.0
    %1165 = vmatprep.subr.mxu0 0.0
    %1166 = vmatpush1.msra.mxu0 0.0
    %1167 = vmatprep.subr.mxu0 0.0
    %1168 = vmatpush1.msra.mxu0 0.0
    %1169 = vmatprep.subr.mxu0 0.0
    %1170 = vmatpush1.msra.mxu0 0.0
    %1171 = vmatprep.subr.mxu0 0.0
    %1172 = vmatpush1.msra.mxu0 0.0
    %1173 = vmatprep.mubr.f32.mxu0 0.0
    %1174 = vmatmul.mubr.f32.gmra.mrb[0].mxu0 %v433
    %v1175 = vpop.f32.mrb[0].mxu0
    %v1176 = vadd.f32 %v746, %v1175
    %v1177 = vpop.f32.mrb[0].mxu0
    %1178 = vdwg.mxu0
    %1179 = vmatprep.subr.mxu0 0.0
    %1180 = vmatpush1.msra.mxu0 %v723
    %1181 = vmatprep.subr.mxu0 0.0
    %1182 = vmatpush1.msra.mxu0 %v724
    %1183 = vmatprep.subr.mxu0 0.0
    %1184 = vmatpush1.msra.mxu0 %v725
    %1185 = vmatprep.subr.mxu0 0.0
    %1186 = vmatpush1.msra.mxu0 %v726
    %1187 = vmatprep.subr.mxu0 0.0
    %1188 = vmatpush1.msra.mxu0 0.0
    %1189 = vmatprep.subr.mxu0 0.0
    %1190 = vmatpush1.msra.mxu0 0.0
    %1191 = vmatprep.subr.mxu0 0.0
    %1192 = vmatpush1.msra.mxu0 0.0
    %1193 = vmatprep.subr.mxu0 0.0
    %1194 = vmatpush1.msra.mxu0 0.0
    %1195 = vmatprep.subr.mxu0 0.0
    %1196 = vmatpush1.msra.mxu0 0.0
    %1197 = vmatprep.subr.mxu0 0.0
    %1198 = vmatpush1.msra.mxu0 0.0
    %1199 = vmatprep.subr.mxu0 0.0
    %1200 = vmatpush1.msra.mxu0 0.0
    %1201 = vmatprep.subr.mxu0 0.0
    %1202 = vmatpush1.msra.mxu0 0.0
    %1203 = vmatprep.subr.mxu0 0.0
    %1204 = vmatpush1.msra.mxu0 0.0
    %1205 = vmatprep.subr.mxu0 0.0
    %1206 = vmatpush1.msra.mxu0 0.0
    %1207 = vmatprep.subr.mxu0 0.0
    %1208 = vmatpush1.msra.mxu0 0.0
    %1209 = vmatprep.subr.mxu0 0.0
    %1210 = vmatpush1.msra.mxu0 0.0
    %1211 = vmatprep.subr.mxu0 0.0
    %1212 = vmatpush1.msra.mxu0 0.0
    %1213 = vmatprep.subr.mxu0 0.0
    %1214 = vmatpush1.msra.mxu0 0.0
    %1215 = vmatprep.subr.mxu0 0.0
    %1216 = vmatpush1.msra.mxu0 0.0
    %1217 = vmatprep.subr.mxu0 0.0
    %1218 = vmatpush1.msra.mxu0 0.0
    %1219 = vmatprep.subr.mxu0 0.0
    %1220 = vmatpush1.msra.mxu0 0.0
    %1221 = vmatprep.subr.mxu0 0.0
    %1222 = vmatpush1.msra.mxu0 0.0
    %1223 = vmatprep.subr.mxu0 0.0
    %1224 = vmatpush1.msra.mxu0 0.0
    %1225 = vmatprep.subr.mxu0 0.0
    %1226 = vmatpush1.msra.mxu0 0.0
    %1227 = vmatprep.subr.mxu0 0.0
    %1228 = vmatpush1.msra.mxu0 0.0
    %1229 = vmatprep.subr.mxu0 0.0
    %1230 = vmatpush1.msra.mxu0 0.0
    %1231 = vmatprep.subr.mxu0 0.0
    %1232 = vmatpush1.msra.mxu0 0.0
    %1233 = vmatprep.subr.mxu0 0.0
    %1234 = vmatpush1.msra.mxu0 0.0
    %1235 = vmatprep.subr.mxu0 0.0
    %1236 = vmatpush1.msra.mxu0 0.0
    %1237 = vmatprep.subr.mxu0 0.0
    %1238 = vmatpush1.msra.mxu0 0.0
    %1239 = vmatprep.subr.mxu0 0.0
    %1240 = vmatpush1.msra.mxu0 0.0
    %1241 = vmatprep.subr.mxu0 0.0
    %1242 = vmatpush1.msra.mxu0 0.0
    %1243 = vmatprep.mubr.f32.mxu0 0.0
    %1244 = vmatmul.mubr.f32.gmra.mrb[0].mxu0 %v433
    %v1245 = vpop.f32.mrb[0].mxu0
    %v1246 = vadd.f32 %v750, %v1245
    %v1247 = vpop.f32.mrb[0].mxu0
    %1248 = vdwg.mxu0
    %1249 = vmatprep.subr.mxu0 0.0
    %1250 = vmatpush1.msra.mxu0 %v727
    %1251 = vmatprep.subr.mxu0 0.0
    %1252 = vmatpush1.msra.mxu0 %v728
    %1253 = vmatprep.subr.mxu0 0.0
    %1254 = vmatpush1.msra.mxu0 %v729
    %1255 = vmatprep.subr.mxu0 0.0
    %1256 = vmatpush1.msra.mxu0 %v730
    %1257 = vmatprep.subr.mxu0 0.0
    %1258 = vmatpush1.msra.mxu0 0.0
    %1259 = vmatprep.subr.mxu0 0.0
    %1260 = vmatpush1.msra.mxu0 0.0
    %1261 = vmatprep.subr.mxu0 0.0
    %1262 = vmatpush1.msra.mxu0 0.0
    %1263 = vmatprep.subr.mxu0 0.0
    %1264 = vmatpush1.msra.mxu0 0.0
    %1265 = vmatprep.subr.mxu0 0.0
    %1266 = vmatpush1.msra.mxu0 0.0
    %1267 = vmatprep.subr.mxu0 0.0
    %1268 = vmatpush1.msra.mxu0 0.0
    %1269 = vmatprep.subr.mxu0 0.0
    %1270 = vmatpush1.msra.mxu0 0.0
    %1271 = vmatprep.subr.mxu0 0.0
    %1272 = vmatpush1.msra.mxu0 0.0
    %1273 = vmatprep.subr.mxu0 0.0
    %1274 = vmatpush1.msra.mxu0 0.0
    %1275 = vmatprep.subr.mxu0 0.0
    %1276 = vmatpush1.msra.mxu0 0.0
    %1277 = vmatprep.subr.mxu0 0.0
    %1278 = vmatpush1.msra.mxu0 0.0
    %1279 = vmatprep.subr.mxu0 0.0
    %1280 = vmatpush1.msra.mxu0 0.0
    %1281 = vmatprep.subr.mxu0 0.0
    %1282 = vmatpush1.msra.mxu0 0.0
    %1283 = vmatprep.subr.mxu0 0.0
    %1284 = vmatpush1.msra.mxu0 0.0
    %1285 = vmatprep.subr.mxu0 0.0
    %1286 = vmatpush1.msra.mxu0 0.0
    %1287 = vmatprep.subr.mxu0 0.0
    %1288 = vmatpush1.msra.mxu0 0.0
    %1289 = vmatprep.subr.mxu0 0.0
    %1290 = vmatpush1.msra.mxu0 0.0
    %1291 = vmatprep.subr.mxu0 0.0
    %1292 = vmatpush1.msra.mxu0 0.0
    %1293 = vmatprep.subr.mxu0 0.0
    %1294 = vmatpush1.msra.mxu0 0.0
    %1295 = vmatprep.subr.mxu0 0.0
    %1296 = vmatpush1.msra.mxu0 0.0
    %1297 = vmatprep.subr.mxu0 0.0
    %1298 = vmatpush1.msra.mxu0 0.0
    %1299 = vmatprep.subr.mxu0 0.0
    %1300 = vmatpush1.msra.mxu0 0.0
    %1301 = vmatprep.subr.mxu0 0.0
    %1302 = vmatpush1.msra.mxu0 0.0
    %1303 = vmatprep.subr.mxu0 0.0
    %1304 = vmatpush1.msra.mxu0 0.0
    %1305 = vmatprep.subr.mxu0 0.0
    %1306 = vmatpush1.msra.mxu0 0.0
    %1307 = vmatprep.subr.mxu0 0.0
    %1308 = vmatpush1.msra.mxu0 0.0
    %1309 = vmatprep.subr.mxu0 0.0
    %1310 = vmatpush1.msra.mxu0 0.0
    %1311 = vmatprep.subr.mxu0 0.0
    %1312 = vmatpush1.msra.mxu0 0.0
    %1313 = vmatprep.mubr.f32.mxu0 0.0
    %1314 = vmatmul.mubr.f32.gmra.mrb[0].mxu0 %v433
    %v1315 = vpop.f32.mrb[0].mxu0
    %v1316 = vadd.f32 %v754, %v1315
    %v1317 = vpop.f32.mrb[0].mxu0
    %1318 = vdwg.mxu0
    %v1319 = vld [vmem:[%s7] sm:$0xff]
    %v1320 = vld [vmem:[%s7 + $0x8] sm:$0xff]
    %v1321 = vld [vmem:[%s7 + $0x10] sm:$0xff]
    %v1322 = vld [vmem:[%s7 + $0x18] sm:$0xff]
    %v1323 = vld [vmem:[%s7 + $0x20] sm:$0xff]
    %v1324 = vld [vmem:[%s7 + $0x28] sm:$0xff]
    %v1325 = vld [vmem:[%s7 + $0x30] sm:$0xff]
    %v1326 = vld [vmem:[%s7 + $0x38] sm:$0xff]
    %v1327 = vld [vmem:[%s7 + $0x40] sm:$0xff]
    %v1328 = vld [vmem:[%s7 + $0x48] sm:$0xff]
    %v1329 = vld [vmem:[%s7 + $0x50] sm:$0xff]
    %v1330 = vld [vmem:[%s7 + $0x58] sm:$0xff]
    %v1331 = vld [vmem:[%s7 + $0x60] sm:$0xff]
    %v1332 = vld [vmem:[%s7 + $0x68] sm:$0xff]
    %v1333 = vld [vmem:[%s7 + $0x70] sm:$0xff]
    %v1334 = vld [vmem:[%s7 + $0x78] sm:$0xff]
    %v1335 = vld [vmem:[%s8] sm:$0x1]
    %v1336 = vld [vmem:[%s8 + $0x1] sm:$0x1]
    %v1337 = vld [vmem:[%s8 + $0x2] sm:$0x1]
    %v1338 = vld [vmem:[%s8 + $0x3] sm:$0x1]
    %v1343 = vlaneseq
    %v1344 = vshrl.u32 %v1343, 7
    %v1345 = vsub.s32 0, %v1344
    %v1346 = vrot.slane %v1335, %v1345
    %v1347 = vlaneseq
    %v1348 = vshrl.u32 %v1347, 7
    %v1349 = vsub.s32 0, %v1348
    %v1350 = vrot.slane %v1336, %v1349
    %v1351 = vlaneseq
    %v1352 = vshrl.u32 %v1351, 7
    %v1353 = vsub.s32 0, %v1352
    %v1354 = vrot.slane %v1337, %v1353
    %v1355 = vlaneseq
    %v1356 = vshrl.u32 %v1355, 7
    %v1357 = vsub.s32 0, %v1356
    %v1358 = vrot.slane %v1338, %v1357
    %1363 = vmatprep.subr.mxu0 0.0
    %1364 = vmatpush1.msra.mxu0 %v1319
    %1365 = vmatprep.subr.mxu0 0.0
    %1366 = vmatpush1.msra.mxu0 %v1320
    %1367 = vmatprep.subr.mxu0 0.0
    %1368 = vmatpush1.msra.mxu0 %v1321
    %1369 = vmatprep.subr.mxu0 0.0
    %1370 = vmatpush1.msra.mxu0 %v1322
    %1371 = vmatprep.subr.mxu0 0.0
    %1372 = vmatpush1.msra.mxu0 0.0
    %1373 = vmatprep.subr.mxu0 0.0
    %1374 = vmatpush1.msra.mxu0 0.0
    %1375 = vmatprep.subr.mxu0 0.0
    %1376 = vmatpush1.msra.mxu0 0.0
    %1377 = vmatprep.subr.mxu0 0.0
    %1378 = vmatpush1.msra.mxu0 0.0
    %1379 = vmatprep.subr.mxu0 0.0
    %1380 = vmatpush1.msra.mxu0 0.0
    %1381 = vmatprep.subr.mxu0 0.0
    %1382 = vmatpush1.msra.mxu0 0.0
    %1383 = vmatprep.subr.mxu0 0.0
    %1384 = vmatpush1.msra.mxu0 0.0
    %1385 = vmatprep.subr.mxu0 0.0
    %1386 = vmatpush1.msra.mxu0 0.0
    %1387 = vmatprep.subr.mxu0 0.0
    %1388 = vmatpush1.msra.mxu0 0.0
    %1389 = vmatprep.subr.mxu0 0.0
    %1390 = vmatpush1.msra.mxu0 0.0
    %1391 = vmatprep.subr.mxu0 0.0
    %1392 = vmatpush1.msra.mxu0 0.0
    %1393 = vmatprep.subr.mxu0 0.0
    %1394 = vmatpush1.msra.mxu0 0.0
    %1395 = vmatprep.subr.mxu0 0.0
    %1396 = vmatpush1.msra.mxu0 0.0
    %1397 = vmatprep.subr.mxu0 0.0
    %1398 = vmatpush1.msra.mxu0 0.0
    %1399 = vmatprep.subr.mxu0 0.0
    %1400 = vmatpush1.msra.mxu0 0.0
    %1401 = vmatprep.subr.mxu0 0.0
    %1402 = vmatpush1.msra.mxu0 0.0
    %1403 = vmatprep.subr.mxu0 0.0
    %1404 = vmatpush1.msra.mxu0 0.0
    %1405 = vmatprep.subr.mxu0 0.0
    %1406 = vmatpush1.msra.mxu0 0.0
    %1407 = vmatprep.subr.mxu0 0.0
    %1408 = vmatpush1.msra.mxu0 0.0
    %1409 = vmatprep.subr.mxu0 0.0
    %1410 = vmatpush1.msra.mxu0 0.0
    %1411 = vmatprep.subr.mxu0 0.0
    %1412 = vmatpush1.msra.mxu0 0.0
    %1413 = vmatprep.subr.mxu0 0.0
    %1414 = vmatpush1.msra.mxu0 0.0
    %1415 = vmatprep.subr.mxu0 0.0
    %1416 = vmatpush1.msra.mxu0 0.0
    %1417 = vmatprep.subr.mxu0 0.0
    %1418 = vmatpush1.msra.mxu0 0.0
    %1419 = vmatprep.subr.mxu0 0.0
    %1420 = vmatpush1.msra.mxu0 0.0
    %1421 = vmatprep.subr.mxu0 0.0
    %1422 = vmatpush1.msra.mxu0 0.0
    %1423 = vmatprep.subr.mxu0 0.0
    %1424 = vmatpush1.msra.mxu0 0.0
    %1425 = vmatprep.subr.mxu0 0.0
    %1426 = vmatpush1.msra.mxu0 0.0
    %1427 = vmatprep.mubr.f32.mxu0 0.0
    %1428 = vmatmul.mubr.f32.gmra.mrb[0].mxu0 %v150
    %v1429 = vpop.f32.mrb[0].mxu0
    %v1430 = vadd.f32 %v1346, %v1429
    %v1431 = vpop.f32.mrb[0].mxu0
    %1432 = vdwg.mxu0
    %1433 = vmatprep.subr.mxu0 0.0
    %1434 = vmatpush1.msra.mxu0 %v1323
    %1435 = vmatprep.subr.mxu0 0.0
    %1436 = vmatpush1.msra.mxu0 %v1324
    %1437 = vmatprep.subr.mxu0 0.0
    %1438 = vmatpush1.msra.mxu0 %v1325
    %1439 = vmatprep.subr.mxu0 0.0
    %1440 = vmatpush1.msra.mxu0 %v1326
    %1441 = vmatprep.subr.mxu0 0.0
    %1442 = vmatpush1.msra.mxu0 0.0
    %1443 = vmatprep.subr.mxu0 0.0
    %1444 = vmatpush1.msra.mxu0 0.0
    %1445 = vmatprep.subr.mxu0 0.0
    %1446 = vmatpush1.msra.mxu0 0.0
    %1447 = vmatprep.subr.mxu0 0.0
    %1448 = vmatpush1.msra.mxu0 0.0
    %1449 = vmatprep.subr.mxu0 0.0
    %1450 = vmatpush1.msra.mxu0 0.0
    %1451 = vmatprep.subr.mxu0 0.0
    %1452 = vmatpush1.msra.mxu0 0.0
    %1453 = vmatprep.subr.mxu0 0.0
    %1454 = vmatpush1.msra.mxu0 0.0
    %1455 = vmatprep.subr.mxu0 0.0
    %1456 = vmatpush1.msra.mxu0 0.0
    %1457 = vmatprep.subr.mxu0 0.0
    %1458 = vmatpush1.msra.mxu0 0.0
    %1459 = vmatprep.subr.mxu0 0.0
    %1460 = vmatpush1.msra.mxu0 0.0
    %1461 = vmatprep.subr.mxu0 0.0
    %1462 = vmatpush1.msra.mxu0 0.0
    %1463 = vmatprep.subr.mxu0 0.0
    %1464 = vmatpush1.msra.mxu0 0.0
    %1465 = vmatprep.subr.mxu0 0.0
    %1466 = vmatpush1.msra.mxu0 0.0
    %1467 = vmatprep.subr.mxu0 0.0
    %1468 = vmatpush1.msra.mxu0 0.0
    %1469 = vmatprep.subr.mxu0 0.0
    %1470 = vmatpush1.msra.mxu0 0.0
    %1471 = vmatprep.subr.mxu0 0.0
    %1472 = vmatpush1.msra.mxu0 0.0
    %1473 = vmatprep.subr.mxu0 0.0
    %1474 = vmatpush1.msra.mxu0 0.0
    %1475 = vmatprep.subr.mxu0 0.0
    %1476 = vmatpush1.msra.mxu0 0.0
    %1477 = vmatprep.subr.mxu0 0.0
    %1478 = vmatpush1.msra.mxu0 0.0
    %1479 = vmatprep.subr.mxu0 0.0
    %1480 = vmatpush1.msra.mxu0 0.0
    %1481 = vmatprep.subr.mxu0 0.0
    %1482 = vmatpush1.msra.mxu0 0.0
    %1483 = vmatprep.subr.mxu0 0.0
    %1484 = vmatpush1.msra.mxu0 0.0
    %1485 = vmatprep.subr.mxu0 0.0
    %1486 = vmatpush1.msra.mxu0 0.0
    %1487 = vmatprep.subr.mxu0 0.0
    %1488 = vmatpush1.msra.mxu0 0.0
    %1489 = vmatprep.subr.mxu0 0.0
    %1490 = vmatpush1.msra.mxu0 0.0
    %1491 = vmatprep.subr.mxu0 0.0
    %1492 = vmatpush1.msra.mxu0 0.0
    %1493 = vmatprep.subr.mxu0 0.0
    %1494 = vmatpush1.msra.mxu0 0.0
    %1495 = vmatprep.subr.mxu0 0.0
    %1496 = vmatpush1.msra.mxu0 0.0
    %1497 = vmatprep.mubr.f32.mxu0 0.0
    %1498 = vmatmul.mubr.f32.gmra.mrb[0].mxu0 %v150
    %v1499 = vpop.f32.mrb[0].mxu0
    %v1500 = vadd.f32 %v1350, %v1499
    %v1501 = vpop.f32.mrb[0].mxu0
    %1502 = vdwg.mxu0
    %1503 = vmatprep.subr.mxu0 0.0
    %1504 = vmatpush1.msra.mxu0 %v1327
    %1505 = vmatprep.subr.mxu0 0.0
    %1506 = vmatpush1.msra.mxu0 %v1328
    %1507 = vmatprep.subr.mxu0 0.0
    %1508 = vmatpush1.msra.mxu0 %v1329
    %1509 = vmatprep.subr.mxu0 0.0
    %1510 = vmatpush1.msra.mxu0 %v1330
    %1511 = vmatprep.subr.mxu0 0.0
    %1512 = vmatpush1.msra.mxu0 0.0
    %1513 = vmatprep.subr.mxu0 0.0
    %1514 = vmatpush1.msra.mxu0 0.0
    %1515 = vmatprep.subr.mxu0 0.0
    %1516 = vmatpush1.msra.mxu0 0.0
    %1517 = vmatprep.subr.mxu0 0.0
    %1518 = vmatpush1.msra.mxu0 0.0
    %1519 = vmatprep.subr.mxu0 0.0
    %1520 = vmatpush1.msra.mxu0 0.0
    %1521 = vmatprep.subr.mxu0 0.0
    %1522 = vmatpush1.msra.mxu0 0.0
    %1523 = vmatprep.subr.mxu0 0.0
    %1524 = vmatpush1.msra.mxu0 0.0
    %1525 = vmatprep.subr.mxu0 0.0
    %1526 = vmatpush1.msra.mxu0 0.0
    %1527 = vmatprep.subr.mxu0 0.0
    %1528 = vmatpush1.msra.mxu0 0.0
    %1529 = vmatprep.subr.mxu0 0.0
    %1530 = vmatpush1.msra.mxu0 0.0
    %1531 = vmatprep.subr.mxu0 0.0
    %1532 = vmatpush1.msra.mxu0 0.0
    %1533 = vmatprep.subr.mxu0 0.0
    %1534 = vmatpush1.msra.mxu0 0.0
    %1535 = vmatprep.subr.mxu0 0.0
    %1536 = vmatpush1.msra.mxu0 0.0
    %1537 = vmatprep.subr.mxu0 0.0
    %1538 = vmatpush1.msra.mxu0 0.0
    %1539 = vmatprep.subr.mxu0 0.0
    %1540 = vmatpush1.msra.mxu0 0.0
    %1541 = vmatprep.subr.mxu0 0.0
    %1542 = vmatpush1.msra.mxu0 0.0
    %1543 = vmatprep.subr.mxu0 0.0
    %1544 = vmatpush1.msra.mxu0 0.0
    %1545 = vmatprep.subr.mxu0 0.0
    %1546 = vmatpush1.msra.mxu0 0.0
    %1547 = vmatprep.subr.mxu0 0.0
    %1548 = vmatpush1.msra.mxu0 0.0
    %1549 = vmatprep.subr.mxu0 0.0
    %1550 = vmatpush1.msra.mxu0 0.0
    %1551 = vmatprep.subr.mxu0 0.0
    %1552 = vmatpush1.msra.mxu0 0.0
    %1553 = vmatprep.subr.mxu0 0.0
    %1554 = vmatpush1.msra.mxu0 0.0
    %1555 = vmatprep.subr.mxu0 0.0
    %1556 = vmatpush1.msra.mxu0 0.0
    %1557 = vmatprep.subr.mxu0 0.0
    %1558 = vmatpush1.msra.mxu0 0.0
    %1559 = vmatprep.subr.mxu0 0.0
    %1560 = vmatpush1.msra.mxu0 0.0
    %1561 = vmatprep.subr.mxu0 0.0
    %1562 = vmatpush1.msra.mxu0 0.0
    %1563 = vmatprep.subr.mxu0 0.0
    %1564 = vmatpush1.msra.mxu0 0.0
    %1565 = vmatprep.subr.mxu0 0.0
    %1566 = vmatpush1.msra.mxu0 0.0
    %1567 = vmatprep.mubr.f32.mxu0 0.0
    %1568 = vmatmul.mubr.f32.gmra.mrb[0].mxu0 %v150
    %v1569 = vpop.f32.mrb[0].mxu0
    %v1570 = vadd.f32 %v1354, %v1569
    %v1571 = vpop.f32.mrb[0].mxu0
    %1572 = vdwg.mxu0
    %1573 = vmatprep.subr.mxu0 0.0
    %1574 = vmatpush1.msra.mxu0 %v1331
    %1575 = vmatprep.subr.mxu0 0.0
    %1576 = vmatpush1.msra.mxu0 %v1332
    %1577 = vmatprep.subr.mxu0 0.0
    %1578 = vmatpush1.msra.mxu0 %v1333
    %1579 = vmatprep.subr.mxu0 0.0
    %1580 = vmatpush1.msra.mxu0 %v1334
    %1581 = vmatprep.subr.mxu0 0.0
    %1582 = vmatpush1.msra.mxu0 0.0
    %1583 = vmatprep.subr.mxu0 0.0
    %1584 = vmatpush1.msra.mxu0 0.0
    %1585 = vmatprep.subr.mxu0 0.0
    %1586 = vmatpush1.msra.mxu0 0.0
    %1587 = vmatprep.subr.mxu0 0.0
    %1588 = vmatpush1.msra.mxu0 0.0
    %1589 = vmatprep.subr.mxu0 0.0
    %1590 = vmatpush1.msra.mxu0 0.0
    %1591 = vmatprep.subr.mxu0 0.0
    %1592 = vmatpush1.msra.mxu0 0.0
    %1593 = vmatprep.subr.mxu0 0.0
    %1594 = vmatpush1.msra.mxu0 0.0
    %1595 = vmatprep.subr.mxu0 0.0
    %1596 = vmatpush1.msra.mxu0 0.0
    %1597 = vmatprep.subr.mxu0 0.0
    %1598 = vmatpush1.msra.mxu0 0.0
    %1599 = vmatprep.subr.mxu0 0.0
    %1600 = vmatpush1.msra.mxu0 0.0
    %1601 = vmatprep.subr.mxu0 0.0
    %1602 = vmatpush1.msra.mxu0 0.0
    %1603 = vmatprep.subr.mxu0 0.0
    %1604 = vmatpush1.msra.mxu0 0.0
    %1605 = vmatprep.subr.mxu0 0.0
    %1606 = vmatpush1.msra.mxu0 0.0
    %1607 = vmatprep.subr.mxu0 0.0
    %1608 = vmatpush1.msra.mxu0 0.0
    %1609 = vmatprep.subr.mxu0 0.0
    %1610 = vmatpush1.msra.mxu0 0.0
    %1611 = vmatprep.subr.mxu0 0.0
    %1612 = vmatpush1.msra.mxu0 0.0
    %1613 = vmatprep.subr.mxu0 0.0
    %1614 = vmatpush1.msra.mxu0 0.0
    %1615 = vmatprep.subr.mxu0 0.0
    %1616 = vmatpush1.msra.mxu0 0.0
    %1617 = vmatprep.subr.mxu0 0.0
    %1618 = vmatpush1.msra.mxu0 0.0
    %1619 = vmatprep.subr.mxu0 0.0
    %1620 = vmatpush1.msra.mxu0 0.0
    %1621 = vmatprep.subr.mxu0 0.0
    %1622 = vmatpush1.msra.mxu0 0.0
    %1623 = vmatprep.subr.mxu0 0.0
    %1624 = vmatpush1.msra.mxu0 0.0
    %1625 = vmatprep.subr.mxu0 0.0
    %1626 = vmatpush1.msra.mxu0 0.0
    %1627 = vmatprep.subr.mxu0 0.0
    %1628 = vmatpush1.msra.mxu0 0.0
    %1629 = vmatprep.subr.mxu0 0.0
    %1630 = vmatpush1.msra.mxu0 0.0
    %1631 = vmatprep.subr.mxu0 0.0
    %1632 = vmatpush1.msra.mxu0 0.0
    %1633 = vmatprep.subr.mxu0 0.0
    %1634 = vmatpush1.msra.mxu0 0.0
    %1635 = vmatprep.subr.mxu0 0.0
    %1636 = vmatpush1.msra.mxu0 0.0
    %1637 = vmatprep.mubr.f32.mxu0 0.0
    %1638 = vmatmul.mubr.f32.gmra.mrb[0].mxu0 %v150
    %v1639 = vpop.f32.mrb[0].mxu0
    %v1640 = vadd.f32 %v1358, %v1639
    %v1641 = vpop.f32.mrb[0].mxu0
    %1642 = vdwg.mxu0
    %1643 = vmatprep.subr.mxu0 0.0
    %1644 = vmatpush1.msra.mxu0 %v1319
    %1645 = vmatprep.subr.mxu0 0.0
    %1646 = vmatpush1.msra.mxu0 %v1320
    %1647 = vmatprep.subr.mxu0 0.0
    %1648 = vmatpush1.msra.mxu0 %v1321
    %1649 = vmatprep.subr.mxu0 0.0
    %1650 = vmatpush1.msra.mxu0 %v1322
    %1651 = vmatprep.subr.mxu0 0.0
    %1652 = vmatpush1.msra.mxu0 0.0
    %1653 = vmatprep.subr.mxu0 0.0
    %1654 = vmatpush1.msra.mxu0 0.0
    %1655 = vmatprep.subr.mxu0 0.0
    %1656 = vmatpush1.msra.mxu0 0.0
    %1657 = vmatprep.subr.mxu0 0.0
    %1658 = vmatpush1.msra.mxu0 0.0
    %1659 = vmatprep.subr.mxu0 0.0
    %1660 = vmatpush1.msra.mxu0 0.0
    %1661 = vmatprep.subr.mxu0 0.0
    %1662 = vmatpush1.msra.mxu0 0.0
    %1663 = vmatprep.subr.mxu0 0.0
    %1664 = vmatpush1.msra.mxu0 0.0
    %1665 = vmatprep.subr.mxu0 0.0
    %1666 = vmatpush1.msra.mxu0 0.0
    %1667 = vmatprep.subr.mxu0 0.0
    %1668 = vmatpush1.msra.mxu0 0.0
    %1669 = vmatprep.subr.mxu0 0.0
    %1670 = vmatpush1.msra.mxu0 0.0
    %1671 = vmatprep.subr.mxu0 0.0
    %1672 = vmatpush1.msra.mxu0 0.0
    %1673 = vmatprep.subr.mxu0 0.0
    %1674 = vmatpush1.msra.mxu0 0.0
    %1675 = vmatprep.subr.mxu0 0.0
    %1676 = vmatpush1.msra.mxu0 0.0
    %1677 = vmatprep.subr.mxu0 0.0
    %1678 = vmatpush1.msra.mxu0 0.0
    %1679 = vmatprep.subr.mxu0 0.0
    %1680 = vmatpush1.msra.mxu0 0.0
    %1681 = vmatprep.subr.mxu0 0.0
    %1682 = vmatpush1.msra.mxu0 0.0
    %1683 = vmatprep.subr.mxu0 0.0
    %1684 = vmatpush1.msra.mxu0 0.0
    %1685 = vmatprep.subr.mxu0 0.0
    %1686 = vmatpush1.msra.mxu0 0.0
    %1687 = vmatprep.subr.mxu0 0.0
    %1688 = vmatpush1.msra.mxu0 0.0
    %1689 = vmatprep.subr.mxu0 0.0
    %1690 = vmatpush1.msra.mxu0 0.0
    %1691 = vmatprep.subr.mxu0 0.0
    %1692 = vmatpush1.msra.mxu0 0.0
    %1693 = vmatprep.subr.mxu0 0.0
    %1694 = vmatpush1.msra.mxu0 0.0
    %1695 = vmatprep.subr.mxu0 0.0
    %1696 = vmatpush1.msra.mxu0 0.0
    %1697 = vmatprep.subr.mxu0 0.0
    %1698 = vmatpush1.msra.mxu0 0.0
    %1699 = vmatprep.subr.mxu0 0.0
    %1700 = vmatpush1.msra.mxu0 0.0
    %1701 = vmatprep.subr.mxu0 0.0
    %1702 = vmatpush1.msra.mxu0 0.0
    %1703 = vmatprep.subr.mxu0 0.0
    %1704 = vmatpush1.msra.mxu0 0.0
    %1705 = vmatprep.subr.mxu0 0.0
    %1706 = vmatpush1.msra.mxu0 0.0
    %1707 = vmatprep.mubr.f32.mxu0 0.0
    %1708 = vmatmul.mubr.f32.gmra.mrb[0].mxu0 %v433
    %v1709 = vpop.f32.mrb[0].mxu0
    %v1710 = vadd.f32 %v1346, %v1709
    %v1711 = vpop.f32.mrb[0].mxu0
    %1712 = vdwg.mxu0
    %1713 = vmatprep.subr.mxu0 0.0
    %1714 = vmatpush1.msra.mxu0 %v1323
    %1715 = vmatprep.subr.mxu0 0.0
    %1716 = vmatpush1.msra.mxu0 %v1324
    %1717 = vmatprep.subr.mxu0 0.0
    %1718 = vmatpush1.msra.mxu0 %v1325
    %1719 = vmatprep.subr.mxu0 0.0
    %1720 = vmatpush1.msra.mxu0 %v1326
    %1721 = vmatprep.subr.mxu0 0.0
    %1722 = vmatpush1.msra.mxu0 0.0
    %1723 = vmatprep.subr.mxu0 0.0
    %1724 = vmatpush1.msra.mxu0 0.0
    %1725 = vmatprep.subr.mxu0 0.0
    %1726 = vmatpush1.msra.mxu0 0.0
    %1727 = vmatprep.subr.mxu0 0.0
    %1728 = vmatpush1.msra.mxu0 0.0
    %1729 = vmatprep.subr.mxu0 0.0
    %1730 = vmatpush1.msra.mxu0 0.0
    %1731 = vmatprep.subr.mxu0 0.0
    %1732 = vmatpush1.msra.mxu0 0.0
    %1733 = vmatprep.subr.mxu0 0.0
    %1734 = vmatpush1.msra.mxu0 0.0
    %1735 = vmatprep.subr.mxu0 0.0
    %1736 = vmatpush1.msra.mxu0 0.0
    %1737 = vmatprep.subr.mxu0 0.0
    %1738 = vmatpush1.msra.mxu0 0.0
    %1739 = vmatprep.subr.mxu0 0.0
    %1740 = vmatpush1.msra.mxu0 0.0
    %1741 = vmatprep.subr.mxu0 0.0
    %1742 = vmatpush1.msra.mxu0 0.0
    %1743 = vmatprep.subr.mxu0 0.0
    %1744 = vmatpush1.msra.mxu0 0.0
    %1745 = vmatprep.subr.mxu0 0.0
    %1746 = vmatpush1.msra.mxu0 0.0
    %1747 = vmatprep.subr.mxu0 0.0
    %1748 = vmatpush1.msra.mxu0 0.0
    %1749 = vmatprep.subr.mxu0 0.0
    %1750 = vmatpush1.msra.mxu0 0.0
    %1751 = vmatprep.subr.mxu0 0.0
    %1752 = vmatpush1.msra.mxu0 0.0
    %1753 = vmatprep.subr.mxu0 0.0
    %1754 = vmatpush1.msra.mxu0 0.0
    %1755 = vmatprep.subr.mxu0 0.0
    %1756 = vmatpush1.msra.mxu0 0.0
    %1757 = vmatprep.subr.mxu0 0.0
    %1758 = vmatpush1.msra.mxu0 0.0
    %1759 = vmatprep.subr.mxu0 0.0
    %1760 = vmatpush1.msra.mxu0 0.0
    %1761 = vmatprep.subr.mxu0 0.0
    %1762 = vmatpush1.msra.mxu0 0.0
    %1763 = vmatprep.subr.mxu0 0.0
    %1764 = vmatpush1.msra.mxu0 0.0
    %1765 = vmatprep.subr.mxu0 0.0
    %1766 = vmatpush1.msra.mxu0 0.0
    %1767 = vmatprep.subr.mxu0 0.0
    %1768 = vmatpush1.msra.mxu0 0.0
    %1769 = vmatprep.subr.mxu0 0.0
    %1770 = vmatpush1.msra.mxu0 0.0
    %1771 = vmatprep.subr.mxu0 0.0
    %1772 = vmatpush1.msra.mxu0 0.0
    %1773 = vmatprep.subr.mxu0 0.0
    %1774 = vmatpush1.msra.mxu0 0.0
    %1775 = vmatprep.subr.mxu0 0.0
    %1776 = vmatpush1.msra.mxu0 0.0
    %1777 = vmatprep.mubr.f32.mxu0 0.0
    %1778 = vmatmul.mubr.f32.gmra.mrb[0].mxu0 %v433
    %v1779 = vpop.f32.mrb[0].mxu0
    %v1780 = vadd.f32 %v1350, %v1779
    %v1781 = vpop.f32.mrb[0].mxu0
    %1782 = vdwg.mxu0
    %1783 = vmatprep.subr.mxu0 0.0
    %1784 = vmatpush1.msra.mxu0 %v1327
    %1785 = vmatprep.subr.mxu0 0.0
    %1786 = vmatpush1.msra.mxu0 %v1328
    %1787 = vmatprep.subr.mxu0 0.0
    %1788 = vmatpush1.msra.mxu0 %v1329
    %1789 = vmatprep.subr.mxu0 0.0
    %1790 = vmatpush1.msra.mxu0 %v1330
    %1791 = vmatprep.subr.mxu0 0.0
    %1792 = vmatpush1.msra.mxu0 0.0
    %1793 = vmatprep.subr.mxu0 0.0
    %1794 = vmatpush1.msra.mxu0 0.0
    %1795 = vmatprep.subr.mxu0 0.0
    %1796 = vmatpush1.msra.mxu0 0.0
    %1797 = vmatprep.subr.mxu0 0.0
    %1798 = vmatpush1.msra.mxu0 0.0
    %1799 = vmatprep.subr.mxu0 0.0
    %1800 = vmatpush1.msra.mxu0 0.0
    %1801 = vmatprep.subr.mxu0 0.0
    %1802 = vmatpush1.msra.mxu0 0.0
    %1803 = vmatprep.subr.mxu0 0.0
    %1804 = vmatpush1.msra.mxu0 0.0
    %1805 = vmatprep.subr.mxu0 0.0
    %1806 = vmatpush1.msra.mxu0 0.0
    %1807 = vmatprep.subr.mxu0 0.0
    %1808 = vmatpush1.msra.mxu0 0.0
    %1809 = vmatprep.subr.mxu0 0.0
    %1810 = vmatpush1.msra.mxu0 0.0
    %1811 = vmatprep.subr.mxu0 0.0
    %1812 = vmatpush1.msra.mxu0 0.0
    %1813 = vmatprep.subr.mxu0 0.0
    %1814 = vmatpush1.msra.mxu0 0.0
    %1815 = vmatprep.subr.mxu0 0.0
    %1816 = vmatpush1.msra.mxu0 0.0
    %1817 = vmatprep.subr.mxu0 0.0
    %1818 = vmatpush1.msra.mxu0 0.0
    %1819 = vmatprep.subr.mxu0 0.0
    %1820 = vmatpush1.msra.mxu0 0.0
    %1821 = vmatprep.subr.mxu0 0.0
    %1822 = vmatpush1.msra.mxu0 0.0
    %1823 = vmatprep.subr.mxu0 0.0
    %1824 = vmatpush1.msra.mxu0 0.0
    %1825 = vmatprep.subr.mxu0 0.0
    %1826 = vmatpush1.msra.mxu0 0.0
    %1827 = vmatprep.subr.mxu0 0.0
    %1828 = vmatpush1.msra.mxu0 0.0
    %1829 = vmatprep.subr.mxu0 0.0
    %1830 = vmatpush1.msra.mxu0 0.0
    %1831 = vmatprep.subr.mxu0 0.0
    %1832 = vmatpush1.msra.mxu0 0.0
    %1833 = vmatprep.subr.mxu0 0.0
    %1834 = vmatpush1.msra.mxu0 0.0
    %1835 = vmatprep.subr.mxu0 0.0
    %1836 = vmatpush1.msra.mxu0 0.0
    %1837 = vmatprep.subr.mxu0 0.0
    %1838 = vmatpush1.msra.mxu0 0.0
    %1839 = vmatprep.subr.mxu0 0.0
    %1840 = vmatpush1.msra.mxu0 0.0
    %1841 = vmatprep.subr.mxu0 0.0
    %1842 = vmatpush1.msra.mxu0 0.0
    %1843 = vmatprep.subr.mxu0 0.0
    %1844 = vmatpush1.msra.mxu0 0.0
    %1845 = vmatprep.subr.mxu0 0.0
    %1846 = vmatpush1.msra.mxu0 0.0
    %1847 = vmatprep.mubr.f32.mxu0 0.0
    %1848 = vmatmul.mubr.f32.gmra.mrb[0].mxu0 %v433
    %v1849 = vpop.f32.mrb[0].mxu0
    %v1850 = vadd.f32 %v1354, %v1849
    %v1851 = vpop.f32.mrb[0].mxu0
    %1852 = vdwg.mxu0
    %1853 = vmatprep.subr.mxu0 0.0
    %1854 = vmatpush1.msra.mxu0 %v1331
    %1855 = vmatprep.subr.mxu0 0.0
    %1856 = vmatpush1.msra.mxu0 %v1332
    %1857 = vmatprep.subr.mxu0 0.0
    %1858 = vmatpush1.msra.mxu0 %v1333
    %1859 = vmatprep.subr.mxu0 0.0
    %1860 = vmatpush1.msra.mxu0 %v1334
    %1861 = vmatprep.subr.mxu0 0.0
    %1862 = vmatpush1.msra.mxu0 0.0
    %1863 = vmatprep.subr.mxu0 0.0
    %1864 = vmatpush1.msra.mxu0 0.0
    %1865 = vmatprep.subr.mxu0 0.0
    %1866 = vmatpush1.msra.mxu0 0.0
    %1867 = vmatprep.subr.mxu0 0.0
    %1868 = vmatpush1.msra.mxu0 0.0
    %1869 = vmatprep.subr.mxu0 0.0
    %1870 = vmatpush1.msra.mxu0 0.0
    %1871 = vmatprep.subr.mxu0 0.0
    %1872 = vmatpush1.msra.mxu0 0.0
    %1873 = vmatprep.subr.mxu0 0.0
    %1874 = vmatpush1.msra.mxu0 0.0
    %1875 = vmatprep.subr.mxu0 0.0
    %1876 = vmatpush1.msra.mxu0 0.0
    %1877 = vmatprep.subr.mxu0 0.0
    %1878 = vmatpush1.msra.mxu0 0.0
    %1879 = vmatprep.subr.mxu0 0.0
    %1880 = vmatpush1.msra.mxu0 0.0
    %1881 = vmatprep.subr.mxu0 0.0
    %1882 = vmatpush1.msra.mxu0 0.0
    %1883 = vmatprep.subr.mxu0 0.0
    %1884 = vmatpush1.msra.mxu0 0.0
    %1885 = vmatprep.subr.mxu0 0.0
    %1886 = vmatpush1.msra.mxu0 0.0
    %1887 = vmatprep.subr.mxu0 0.0
    %1888 = vmatpush1.msra.mxu0 0.0
    %1889 = vmatprep.subr.mxu0 0.0
    %1890 = vmatpush1.msra.mxu0 0.0
    %1891 = vmatprep.subr.mxu0 0.0
    %1892 = vmatpush1.msra.mxu0 0.0
    %1893 = vmatprep.subr.mxu0 0.0
    %1894 = vmatpush1.msra.mxu0 0.0
    %1895 = vmatprep.subr.mxu0 0.0
    %1896 = vmatpush1.msra.mxu0 0.0
    %1897 = vmatprep.subr.mxu0 0.0
    %1898 = vmatpush1.msra.mxu0 0.0
    %1899 = vmatprep.subr.mxu0 0.0
    %1900 = vmatpush1.msra.mxu0 0.0
    %1901 = vmatprep.subr.mxu0 0.0
    %1902 = vmatpush1.msra.mxu0 0.0
    %1903 = vmatprep.subr.mxu0 0.0
    %1904 = vmatpush1.msra.mxu0 0.0
    %1905 = vmatprep.subr.mxu0 0.0
    %1906 = vmatpush1.msra.mxu0 0.0
    %1907 = vmatprep.subr.mxu0 0.0
    %1908 = vmatpush1.msra.mxu0 0.0
    %1909 = vmatprep.subr.mxu0 0.0
    %1910 = vmatpush1.msra.mxu0 0.0
    %1911 = vmatprep.subr.mxu0 0.0
    %1912 = vmatpush1.msra.mxu0 0.0
    %1913 = vmatprep.subr.mxu0 0.0
    %1914 = vmatpush1.msra.mxu0 0.0
    %1915 = vmatprep.subr.mxu0 0.0
    %1916 = vmatpush1.msra.mxu0 0.0
    %1917 = vmatprep.mubr.f32.mxu0 0.0
    %1918 = vmatmul.mubr.f32.gmra.mrb[0].mxu0 %v433
    %v1919 = vpop.f32.mrb[0].mxu0
    %v1920 = vadd.f32 %v1358, %v1919
    %v1921 = vpop.f32.mrb[0].mxu0
    %1922 = vdwg.mxu0
    %vm1923 = vcmask 64512
    %v1925 = vsel %vm1923, %v219, 0
    %v1928 = vsel %vm1923, %v826, 0
    %1930 = vmatprep.subr.mxu0 0.0
    %1931 = vmatpush1.xpose.msra.mxu0 %v1928
    %1932 = vmatprep.subr.mxu0 0.0
    %1933 = vmatpush1.xpose.msra.mxu0 0.0
    %1934 = vmatprep.subr.mxu0 0.0
    %1935 = vmatpush1.xpose.msra.mxu0 0.0
    %1936 = vmatprep.subr.mxu0 0.0
    %1937 = vmatpush1.xpose.msra.mxu0 0.0
    %1938 = vmatprep.subr.mxu0 0.0
    %1939 = vmatpush1.xpose.msra.mxu0 0.0
    %1940 = vmatprep.subr.mxu0 0.0
    %1941 = vmatpush1.xpose.msra.mxu0 0.0
    %1942 = vmatprep.subr.mxu0 0.0
    %1943 = vmatpush1.xpose.msra.mxu0 0.0
    %1944 = vmatprep.subr.mxu0 0.0
    %1945 = vmatpush1.xpose.msra.mxu0 0.0
    %1946 = vmatprep.subr.mxu0 0.0
    %1947 = vmatpush1.xpose.msra.mxu0 0.0
    %1948 = vmatprep.subr.mxu0 0.0
    %1949 = vmatpush1.xpose.msra.mxu0 0.0
    %1950 = vmatprep.subr.mxu0 0.0
    %1951 = vmatpush1.xpose.msra.mxu0 0.0
    %1952 = vmatprep.subr.mxu0 0.0
    %1953 = vmatpush1.xpose.msra.mxu0 0.0
    %1954 = vmatprep.subr.mxu0 0.0
    %1955 = vmatpush1.xpose.msra.mxu0 0.0
    %1956 = vmatprep.subr.mxu0 0.0
    %1957 = vmatpush1.xpose.msra.mxu0 0.0
    %1958 = vmatprep.subr.mxu0 0.0
    %1959 = vmatpush1.xpose.msra.mxu0 0.0
    %1960 = vmatprep.subr.mxu0 0.0
    %1961 = vmatpush1.xpose.msra.mxu0 0.0
    %1962 = vmatprep.subr.mxu0 0.0
    %1963 = vmatpush1.xpose.msra.mxu0 0.0
    %1964 = vmatprep.subr.mxu0 0.0
    %1965 = vmatpush1.xpose.msra.mxu0 0.0
    %1966 = vmatprep.subr.mxu0 0.0
    %1967 = vmatpush1.xpose.msra.mxu0 0.0
    %1968 = vmatprep.subr.mxu0 0.0
    %1969 = vmatpush1.xpose.msra.mxu0 0.0
    %1970 = vmatprep.subr.mxu0 0.0
    %1971 = vmatpush1.xpose.msra.mxu0 0.0
    %1972 = vmatprep.subr.mxu0 0.0
    %1973 = vmatpush1.xpose.msra.mxu0 0.0
    %1974 = vmatprep.subr.mxu0 0.0
    %1975 = vmatpush1.xpose.msra.mxu0 0.0
    %1976 = vmatprep.subr.mxu0 0.0
    %1977 = vmatpush1.xpose.msra.mxu0 0.0
    %1978 = vmatprep.subr.mxu0 0.0
    %1979 = vmatpush1.xpose.msra.mxu0 0.0
    %1980 = vmatprep.subr.mxu0 0.0
    %1981 = vmatpush1.xpose.msra.mxu0 0.0
    %1982 = vmatprep.subr.mxu0 0.0
    %1983 = vmatpush1.xpose.msra.mxu0 0.0
    %1984 = vmatprep.subr.mxu0 0.0
    %1985 = vmatpush1.xpose.msra.mxu0 0.0
    %1986 = vmatprep.subr.mxu0 0.0
    %1987 = vmatpush1.xpose.msra.mxu0 0.0
    %1988 = vmatprep.subr.mxu0 0.0
    %1989 = vmatpush1.xpose.msra.mxu0 0.0
    %1990 = vmatprep.subr.mxu0 0.0
    %1991 = vmatpush1.xpose.msra.mxu0 0.0
    %1992 = vmatprep.subr.mxu0 0.0
    %1993 = vmatpush1.xpose.msra.mxu0 0.0
    %1994 = vmatprep.mubr.f32.mxu0 0.0
    %1995 = vmatmul.mubr.f32.gmra.mrb[0].mxu0 %v1925
    %v1996 = vpop.f32.mrb[0].mxu0
    %v1997 = vadd.f32 0.0, %v1996
    %v1998 = vpop.f32.mrb[0].mxu0
    %1999 = vdwg.mxu0
    %v2001 = vsel %vm1923, %v289, 0
    %v2004 = vsel %vm1923, %v896, 0
    %2006 = vmatprep.subr.mxu0 0.0
    %2007 = vmatpush1.xpose.msra.mxu0 %v2004
    %2008 = vmatprep.subr.mxu0 0.0
    %2009 = vmatpush1.xpose.msra.mxu0 0.0
    %2010 = vmatprep.subr.mxu0 0.0
    %2011 = vmatpush1.xpose.msra.mxu0 0.0
    %2012 = vmatprep.subr.mxu0 0.0
    %2013 = vmatpush1.xpose.msra.mxu0 0.0
    %2014 = vmatprep.subr.mxu0 0.0
    %2015 = vmatpush1.xpose.msra.mxu0 0.0
    %2016 = vmatprep.subr.mxu0 0.0
    %2017 = vmatpush1.xpose.msra.mxu0 0.0
    %2018 = vmatprep.subr.mxu0 0.0
    %2019 = vmatpush1.xpose.msra.mxu0 0.0
    %2020 = vmatprep.subr.mxu0 0.0
    %2021 = vmatpush1.xpose.msra.mxu0 0.0
    %2022 = vmatprep.subr.mxu0 0.0
    %2023 = vmatpush1.xpose.msra.mxu0 0.0
    %2024 = vmatprep.subr.mxu0 0.0
    %2025 = vmatpush1.xpose.msra.mxu0 0.0
    %2026 = vmatprep.subr.mxu0 0.0
    %2027 = vmatpush1.xpose.msra.mxu0 0.0
    %2028 = vmatprep.subr.mxu0 0.0
    %2029 = vmatpush1.xpose.msra.mxu0 0.0
    %2030 = vmatprep.subr.mxu0 0.0
    %2031 = vmatpush1.xpose.msra.mxu0 0.0
    %2032 = vmatprep.subr.mxu0 0.0
    %2033 = vmatpush1.xpose.msra.mxu0 0.0
    %2034 = vmatprep.subr.mxu0 0.0
    %2035 = vmatpush1.xpose.msra.mxu0 0.0
    %2036 = vmatprep.subr.mxu0 0.0
    %2037 = vmatpush1.xpose.msra.mxu0 0.0
    %2038 = vmatprep.subr.mxu0 0.0
    %2039 = vmatpush1.xpose.msra.mxu0 0.0
    %2040 = vmatprep.subr.mxu0 0.0
    %2041 = vmatpush1.xpose.msra.mxu0 0.0
    %2042 = vmatprep.subr.mxu0 0.0
    %2043 = vmatpush1.xpose.msra.mxu0 0.0
    %2044 = vmatprep.subr.mxu0 0.0
    %2045 = vmatpush1.xpose.msra.mxu0 0.0
    %2046 = vmatprep.subr.mxu0 0.0
    %2047 = vmatpush1.xpose.msra.mxu0 0.0
    %2048 = vmatprep.subr.mxu0 0.0
    %2049 = vmatpush1.xpose.msra.mxu0 0.0
    %2050 = vmatprep.subr.mxu0 0.0
    %2051 = vmatpush1.xpose.msra.mxu0 0.0
    %2052 = vmatprep.subr.mxu0 0.0
    %2053 = vmatpush1.xpose.msra.mxu0 0.0
    %2054 = vmatprep.subr.mxu0 0.0
    %2055 = vmatpush1.xpose.msra.mxu0 0.0
    %2056 = vmatprep.subr.mxu0 0.0
    %2057 = vmatpush1.xpose.msra.mxu0 0.0
    %2058 = vmatprep.subr.mxu0 0.0
    %2059 = vmatpush1.xpose.msra.mxu0 0.0
    %2060 = vmatprep.subr.mxu0 0.0
    %2061 = vmatpush1.xpose.msra.mxu0 0.0
    %2062 = vmatprep.subr.mxu0 0.0
    %2063 = vmatpush1.xpose.msra.mxu0 0.0
    %2064 = vmatprep.subr.mxu0 0.0
    %2065 = vmatpush1.xpose.msra.mxu0 0.0
    %2066 = vmatprep.subr.mxu0 0.0
    %2067 = vmatpush1.xpose.msra.mxu0 0.0
    %2068 = vmatprep.subr.mxu0 0.0
    %2069 = vmatpush1.xpose.msra.mxu0 0.0
    %2070 = vmatprep.mubr.f32.mxu0 0.0
    %2071 = vmatmul.mubr.f32.gmra.mrb[0].mxu0 %v2001
    %v2072 = vpop.f32.mrb[0].mxu0
    %v2073 = vadd.f32 0.0, %v2072
    %v2074 = vpop.f32.mrb[0].mxu0
    %2075 = vdwg.mxu0
    %v2077 = vsel %vm1923, %v359, 0
    %v2080 = vsel %vm1923, %v966, 0
    %2082 = vmatprep.subr.mxu0 0.0
    %2083 = vmatpush1.xpose.msra.mxu0 %v2080
    %2084 = vmatprep.subr.mxu0 0.0
    %2085 = vmatpush1.xpose.msra.mxu0 0.0
    %2086 = vmatprep.subr.mxu0 0.0
    %2087 = vmatpush1.xpose.msra.mxu0 0.0
    %2088 = vmatprep.subr.mxu0 0.0
    %2089 = vmatpush1.xpose.msra.mxu0 0.0
    %2090 = vmatprep.subr.mxu0 0.0
    %2091 = vmatpush1.xpose.msra.mxu0 0.0
    %2092 = vmatprep.subr.mxu0 0.0
    %2093 = vmatpush1.xpose.msra.mxu0 0.0
    %2094 = vmatprep.subr.mxu0 0.0
    %2095 = vmatpush1.xpose.msra.mxu0 0.0
    %2096 = vmatprep.subr.mxu0 0.0
    %2097 = vmatpush1.xpose.msra.mxu0 0.0
    %2098 = vmatprep.subr.mxu0 0.0
    %2099 = vmatpush1.xpose.msra.mxu0 0.0
    %2100 = vmatprep.subr.mxu0 0.0
    %2101 = vmatpush1.xpose.msra.mxu0 0.0
    %2102 = vmatprep.subr.mxu0 0.0
    %2103 = vmatpush1.xpose.msra.mxu0 0.0
    %2104 = vmatprep.subr.mxu0 0.0
    %2105 = vmatpush1.xpose.msra.mxu0 0.0
    %2106 = vmatprep.subr.mxu0 0.0
    %2107 = vmatpush1.xpose.msra.mxu0 0.0
    %2108 = vmatprep.subr.mxu0 0.0
    %2109 = vmatpush1.xpose.msra.mxu0 0.0
    %2110 = vmatprep.subr.mxu0 0.0
    %2111 = vmatpush1.xpose.msra.mxu0 0.0
    %2112 = vmatprep.subr.mxu0 0.0
    %2113 = vmatpush1.xpose.msra.mxu0 0.0
    %2114 = vmatprep.subr.mxu0 0.0
    %2115 = vmatpush1.xpose.msra.mxu0 0.0
    %2116 = vmatprep.subr.mxu0 0.0
    %2117 = vmatpush1.xpose.msra.mxu0 0.0
    %2118 = vmatprep.subr.mxu0 0.0
    %2119 = vmatpush1.xpose.msra.mxu0 0.0
    %2120 = vmatprep.subr.mxu0 0.0
    %2121 = vmatpush1.xpose.msra.mxu0 0.0
    %2122 = vmatprep.subr.mxu0 0.0
    %2123 = vmatpush1.xpose.msra.mxu0 0.0
    %2124 = vmatprep.subr.mxu0 0.0
    %2125 = vmatpush1.xpose.msra.mxu0 0.0
    %2126 = vmatprep.subr.mxu0 0.0
    %2127 = vmatpush1.xpose.msra.mxu0 0.0
    %2128 = vmatprep.subr.mxu0 0.0
    %2129 = vmatpush1.xpose.msra.mxu0 0.0
    %2130 = vmatprep.subr.mxu0 0.0
    %2131 = vmatpush1.xpose.msra.mxu0 0.0
    %2132 = vmatprep.subr.mxu0 0.0
    %2133 = vmatpush1.xpose.msra.mxu0 0.0
    %2134 = vmatprep.subr.mxu0 0.0
    %2135 = vmatpush1.xpose.msra.mxu0 0.0
    %2136 = vmatprep.subr.mxu0 0.0
    %2137 = vmatpush1.xpose.msra.mxu0 0.0
    %2138 = vmatprep.subr.mxu0 0.0
    %2139 = vmatpush1.xpose.msra.mxu0 0.0
    %2140 = vmatprep.subr.mxu0 0.0
    %2141 = vmatpush1.xpose.msra.mxu0 0.0
    %2142 = vmatprep.subr.mxu0 0.0
    %2143 = vmatpush1.xpose.msra.mxu0 0.0
    %2144 = vmatprep.subr.mxu0 0.0
    %2145 = vmatpush1.xpose.msra.mxu0 0.0
    %2146 = vmatprep.mubr.f32.mxu0 0.0
    %2147 = vmatmul.mubr.f32.gmra.mrb[0].mxu0 %v2077
    %v2148 = vpop.f32.mrb[0].mxu0
    %v2149 = vadd.f32 0.0, %v2148
    %v2150 = vpop.f32.mrb[0].mxu0
    %2151 = vdwg.mxu0
    %v2153 = vsel %vm1923, %v429, 0
    %v2156 = vsel %vm1923, %v1036, 0
    %2158 = vmatprep.subr.mxu0 0.0
    %2159 = vmatpush1.xpose.msra.mxu0 %v2156
    %2160 = vmatprep.subr.mxu0 0.0
    %2161 = vmatpush1.xpose.msra.mxu0 0.0
    %2162 = vmatprep.subr.mxu0 0.0
    %2163 = vmatpush1.xpose.msra.mxu0 0.0
    %2164 = vmatprep.subr.mxu0 0.0
    %2165 = vmatpush1.xpose.msra.mxu0 0.0
    %2166 = vmatprep.subr.mxu0 0.0
    %2167 = vmatpush1.xpose.msra.mxu0 0.0
    %2168 = vmatprep.subr.mxu0 0.0
    %2169 = vmatpush1.xpose.msra.mxu0 0.0
    %2170 = vmatprep.subr.mxu0 0.0
    %2171 = vmatpush1.xpose.msra.mxu0 0.0
    %2172 = vmatprep.subr.mxu0 0.0
    %2173 = vmatpush1.xpose.msra.mxu0 0.0
    %2174 = vmatprep.subr.mxu0 0.0
    %2175 = vmatpush1.xpose.msra.mxu0 0.0
    %2176 = vmatprep.subr.mxu0 0.0
    %2177 = vmatpush1.xpose.msra.mxu0 0.0
    %2178 = vmatprep.subr.mxu0 0.0
    %2179 = vmatpush1.xpose.msra.mxu0 0.0
    %2180 = vmatprep.subr.mxu0 0.0
    %2181 = vmatpush1.xpose.msra.mxu0 0.0
    %2182 = vmatprep.subr.mxu0 0.0
    %2183 = vmatpush1.xpose.msra.mxu0 0.0
    %2184 = vmatprep.subr.mxu0 0.0
    %2185 = vmatpush1.xpose.msra.mxu0 0.0
    %2186 = vmatprep.subr.mxu0 0.0
    %2187 = vmatpush1.xpose.msra.mxu0 0.0
    %2188 = vmatprep.subr.mxu0 0.0
    %2189 = vmatpush1.xpose.msra.mxu0 0.0
    %2190 = vmatprep.subr.mxu0 0.0
    %2191 = vmatpush1.xpose.msra.mxu0 0.0
    %2192 = vmatprep.subr.mxu0 0.0
    %2193 = vmatpush1.xpose.msra.mxu0 0.0
    %2194 = vmatprep.subr.mxu0 0.0
    %2195 = vmatpush1.xpose.msra.mxu0 0.0
    %2196 = vmatprep.subr.mxu0 0.0
    %2197 = vmatpush1.xpose.msra.mxu0 0.0
    %2198 = vmatprep.subr.mxu0 0.0
    %2199 = vmatpush1.xpose.msra.mxu0 0.0
    %2200 = vmatprep.subr.mxu0 0.0
    %2201 = vmatpush1.xpose.msra.mxu0 0.0
    %2202 = vmatprep.subr.mxu0 0.0
    %2203 = vmatpush1.xpose.msra.mxu0 0.0
    %2204 = vmatprep.subr.mxu0 0.0
    %2205 = vmatpush1.xpose.msra.mxu0 0.0
    %2206 = vmatprep.subr.mxu0 0.0
    %2207 = vmatpush1.xpose.msra.mxu0 0.0
    %2208 = vmatprep.subr.mxu0 0.0
    %2209 = vmatpush1.xpose.msra.mxu0 0.0
    %2210 = vmatprep.subr.mxu0 0.0
    %2211 = vmatpush1.xpose.msra.mxu0 0.0
    %2212 = vmatprep.subr.mxu0 0.0
    %2213 = vmatpush1.xpose.msra.mxu0 0.0
    %2214 = vmatprep.subr.mxu0 0.0
    %2215 = vmatpush1.xpose.msra.mxu0 0.0
    %2216 = vmatprep.subr.mxu0 0.0
    %2217 = vmatpush1.xpose.msra.mxu0 0.0
    %2218 = vmatprep.subr.mxu0 0.0
    %2219 = vmatpush1.xpose.msra.mxu0 0.0
    %2220 = vmatprep.subr.mxu0 0.0
    %2221 = vmatpush1.xpose.msra.mxu0 0.0
    %2222 = vmatprep.mubr.f32.mxu0 0.0
    %2223 = vmatmul.mubr.f32.gmra.mrb[0].mxu0 %v2153
    %v2224 = vpop.f32.mrb[0].mxu0
    %v2225 = vadd.f32 0.0, %v2224
    %v2226 = vpop.f32.mrb[0].mxu0
    %2227 = vdwg.mxu0
    %v2229 = vsel %vm1923, %v502, 0
    %v2232 = vsel %vm1923, %v1106, 0
    %2234 = vmatprep.subr.mxu0 0.0
    %2235 = vmatpush1.xpose.msra.mxu0 %v2232
    %2236 = vmatprep.subr.mxu0 0.0
    %2237 = vmatpush1.xpose.msra.mxu0 0.0
    %2238 = vmatprep.subr.mxu0 0.0
    %2239 = vmatpush1.xpose.msra.mxu0 0.0
    %2240 = vmatprep.subr.mxu0 0.0
    %2241 = vmatpush1.xpose.msra.mxu0 0.0
    %2242 = vmatprep.subr.mxu0 0.0
    %2243 = vmatpush1.xpose.msra.mxu0 0.0
    %2244 = vmatprep.subr.mxu0 0.0
    %2245 = vmatpush1.xpose.msra.mxu0 0.0
    %2246 = vmatprep.subr.mxu0 0.0
    %2247 = vmatpush1.xpose.msra.mxu0 0.0
    %2248 = vmatprep.subr.mxu0 0.0
    %2249 = vmatpush1.xpose.msra.mxu0 0.0
    %2250 = vmatprep.subr.mxu0 0.0
    %2251 = vmatpush1.xpose.msra.mxu0 0.0
    %2252 = vmatprep.subr.mxu0 0.0
    %2253 = vmatpush1.xpose.msra.mxu0 0.0
    %2254 = vmatprep.subr.mxu0 0.0
    %2255 = vmatpush1.xpose.msra.mxu0 0.0
    %2256 = vmatprep.subr.mxu0 0.0
    %2257 = vmatpush1.xpose.msra.mxu0 0.0
    %2258 = vmatprep.subr.mxu0 0.0
    %2259 = vmatpush1.xpose.msra.mxu0 0.0
    %2260 = vmatprep.subr.mxu0 0.0
    %2261 = vmatpush1.xpose.msra.mxu0 0.0
    %2262 = vmatprep.subr.mxu0 0.0
    %2263 = vmatpush1.xpose.msra.mxu0 0.0
    %2264 = vmatprep.subr.mxu0 0.0
    %2265 = vmatpush1.xpose.msra.mxu0 0.0
    %2266 = vmatprep.subr.mxu0 0.0
    %2267 = vmatpush1.xpose.msra.mxu0 0.0
    %2268 = vmatprep.subr.mxu0 0.0
    %2269 = vmatpush1.xpose.msra.mxu0 0.0
    %2270 = vmatprep.subr.mxu0 0.0
    %2271 = vmatpush1.xpose.msra.mxu0 0.0
    %2272 = vmatprep.subr.mxu0 0.0
    %2273 = vmatpush1.xpose.msra.mxu0 0.0
    %2274 = vmatprep.subr.mxu0 0.0
    %2275 = vmatpush1.xpose.msra.mxu0 0.0
    %2276 = vmatprep.subr.mxu0 0.0
    %2277 = vmatpush1.xpose.msra.mxu0 0.0
    %2278 = vmatprep.subr.mxu0 0.0
    %2279 = vmatpush1.xpose.msra.mxu0 0.0
    %2280 = vmatprep.subr.mxu0 0.0
    %2281 = vmatpush1.xpose.msra.mxu0 0.0
    %2282 = vmatprep.subr.mxu0 0.0
    %2283 = vmatpush1.xpose.msra.mxu0 0.0
    %2284 = vmatprep.subr.mxu0 0.0
    %2285 = vmatpush1.xpose.msra.mxu0 0.0
    %2286 = vmatprep.subr.mxu0 0.0
    %2287 = vmatpush1.xpose.msra.mxu0 0.0
    %2288 = vmatprep.subr.mxu0 0.0
    %2289 = vmatpush1.xpose.msra.mxu0 0.0
    %2290 = vmatprep.subr.mxu0 0.0
    %2291 = vmatpush1.xpose.msra.mxu0 0.0
    %2292 = vmatprep.subr.mxu0 0.0
    %2293 = vmatpush1.xpose.msra.mxu0 0.0
    %2294 = vmatprep.subr.mxu0 0.0
    %2295 = vmatpush1.xpose.msra.mxu0 0.0
    %2296 = vmatprep.subr.mxu0 0.0
    %2297 = vmatpush1.xpose.msra.mxu0 0.0
    %2298 = vmatprep.mubr.f32.mxu0 0.0
    %2299 = vmatmul.mubr.f32.gmra.mrb[0].mxu0 %v2229
    %v2300 = vpop.f32.mrb[0].mxu0
    %v2301 = vadd.f32 0.0, %v2300
    %v2302 = vpop.f32.mrb[0].mxu0
    %2303 = vdwg.mxu0
    %v2305 = vsel %vm1923, %v572, 0
    %v2308 = vsel %vm1923, %v1176, 0
    %2310 = vmatprep.subr.mxu0 0.0
    %2311 = vmatpush1.xpose.msra.mxu0 %v2308
    %2312 = vmatprep.subr.mxu0 0.0
    %2313 = vmatpush1.xpose.msra.mxu0 0.0
    %2314 = vmatprep.subr.mxu0 0.0
    %2315 = vmatpush1.xpose.msra.mxu0 0.0
    %2316 = vmatprep.subr.mxu0 0.0
    %2317 = vmatpush1.xpose.msra.mxu0 0.0
    %2318 = vmatprep.subr.mxu0 0.0
    %2319 = vmatpush1.xpose.msra.mxu0 0.0
    %2320 = vmatprep.subr.mxu0 0.0
    %2321 = vmatpush1.xpose.msra.mxu0 0.0
    %2322 = vmatprep.subr.mxu0 0.0
    %2323 = vmatpush1.xpose.msra.mxu0 0.0
    %2324 = vmatprep.subr.mxu0 0.0
    %2325 = vmatpush1.xpose.msra.mxu0 0.0
    %2326 = vmatprep.subr.mxu0 0.0
    %2327 = vmatpush1.xpose.msra.mxu0 0.0
    %2328 = vmatprep.subr.mxu0 0.0
    %2329 = vmatpush1.xpose.msra.mxu0 0.0
    %2330 = vmatprep.subr.mxu0 0.0
    %2331 = vmatpush1.xpose.msra.mxu0 0.0
    %2332 = vmatprep.subr.mxu0 0.0
    %2333 = vmatpush1.xpose.msra.mxu0 0.0
    %2334 = vmatprep.subr.mxu0 0.0
    %2335 = vmatpush1.xpose.msra.mxu0 0.0
    %2336 = vmatprep.subr.mxu0 0.0
    %2337 = vmatpush1.xpose.msra.mxu0 0.0
    %2338 = vmatprep.subr.mxu0 0.0
    %2339 = vmatpush1.xpose.msra.mxu0 0.0
    %2340 = vmatprep.subr.mxu0 0.0
    %2341 = vmatpush1.xpose.msra.mxu0 0.0
    %2342 = vmatprep.subr.mxu0 0.0
    %2343 = vmatpush1.xpose.msra.mxu0 0.0
    %2344 = vmatprep.subr.mxu0 0.0
    %2345 = vmatpush1.xpose.msra.mxu0 0.0
    %2346 = vmatprep.subr.mxu0 0.0
    %2347 = vmatpush1.xpose.msra.mxu0 0.0
    %2348 = vmatprep.subr.mxu0 0.0
    %2349 = vmatpush1.xpose.msra.mxu0 0.0
    %2350 = vmatprep.subr.mxu0 0.0
    %2351 = vmatpush1.xpose.msra.mxu0 0.0
    %2352 = vmatprep.subr.mxu0 0.0
    %2353 = vmatpush1.xpose.msra.mxu0 0.0
    %2354 = vmatprep.subr.mxu0 0.0
    %2355 = vmatpush1.xpose.msra.mxu0 0.0
    %2356 = vmatprep.subr.mxu0 0.0
    %2357 = vmatpush1.xpose.msra.mxu0 0.0
    %2358 = vmatprep.subr.mxu0 0.0
    %2359 = vmatpush1.xpose.msra.mxu0 0.0
    %2360 = vmatprep.subr.mxu0 0.0
    %2361 = vmatpush1.xpose.msra.mxu0 0.0
    %2362 = vmatprep.subr.mxu0 0.0
    %2363 = vmatpush1.xpose.msra.mxu0 0.0
    %2364 = vmatprep.subr.mxu0 0.0
    %2365 = vmatpush1.xpose.msra.mxu0 0.0
    %2366 = vmatprep.subr.mxu0 0.0
    %2367 = vmatpush1.xpose.msra.mxu0 0.0
    %2368 = vmatprep.subr.mxu0 0.0
    %2369 = vmatpush1.xpose.msra.mxu0 0.0
    %2370 = vmatprep.subr.mxu0 0.0
    %2371 = vmatpush1.xpose.msra.mxu0 0.0
    %2372 = vmatprep.subr.mxu0 0.0
    %2373 = vmatpush1.xpose.msra.mxu0 0.0
    %2374 = vmatprep.mubr.f32.mxu0 0.0
    %2375 = vmatmul.mubr.f32.gmra.mrb[0].mxu0 %v2305
    %v2376 = vpop.f32.mrb[0].mxu0
    %v2377 = vadd.f32 0.0, %v2376
    %v2378 = vpop.f32.mrb[0].mxu0
    %2379 = vdwg.mxu0
    %v2381 = vsel %vm1923, %v642, 0
    %v2384 = vsel %vm1923, %v1246, 0
    %2386 = vmatprep.subr.mxu0 0.0
    %2387 = vmatpush1.xpose.msra.mxu0 %v2384
    %2388 = vmatprep.subr.mxu0 0.0
    %2389 = vmatpush1.xpose.msra.mxu0 0.0
    %2390 = vmatprep.subr.mxu0 0.0
    %2391 = vmatpush1.xpose.msra.mxu0 0.0
    %2392 = vmatprep.subr.mxu0 0.0
    %2393 = vmatpush1.xpose.msra.mxu0 0.0
    %2394 = vmatprep.subr.mxu0 0.0
    %2395 = vmatpush1.xpose.msra.mxu0 0.0
    %2396 = vmatprep.subr.mxu0 0.0
    %2397 = vmatpush1.xpose.msra.mxu0 0.0
    %2398 = vmatprep.subr.mxu0 0.0
    %2399 = vmatpush1.xpose.msra.mxu0 0.0
    %2400 = vmatprep.subr.mxu0 0.0
    %2401 = vmatpush1.xpose.msra.mxu0 0.0
    %2402 = vmatprep.subr.mxu0 0.0
    %2403 = vmatpush1.xpose.msra.mxu0 0.0
    %2404 = vmatprep.subr.mxu0 0.0
    %2405 = vmatpush1.xpose.msra.mxu0 0.0
    %2406 = vmatprep.subr.mxu0 0.0
    %2407 = vmatpush1.xpose.msra.mxu0 0.0
    %2408 = vmatprep.subr.mxu0 0.0
    %2409 = vmatpush1.xpose.msra.mxu0 0.0
    %2410 = vmatprep.subr.mxu0 0.0
    %2411 = vmatpush1.xpose.msra.mxu0 0.0
    %2412 = vmatprep.subr.mxu0 0.0
    %2413 = vmatpush1.xpose.msra.mxu0 0.0
    %2414 = vmatprep.subr.mxu0 0.0
    %2415 = vmatpush1.xpose.msra.mxu0 0.0
    %2416 = vmatprep.subr.mxu0 0.0
    %2417 = vmatpush1.xpose.msra.mxu0 0.0
    %2418 = vmatprep.subr.mxu0 0.0
    %2419 = vmatpush1.xpose.msra.mxu0 0.0
    %2420 = vmatprep.subr.mxu0 0.0
    %2421 = vmatpush1.xpose.msra.mxu0 0.0
    %2422 = vmatprep.subr.mxu0 0.0
    %2423 = vmatpush1.xpose.msra.mxu0 0.0
    %2424 = vmatprep.subr.mxu0 0.0
    %2425 = vmatpush1.xpose.msra.mxu0 0.0
    %2426 = vmatprep.subr.mxu0 0.0
    %2427 = vmatpush1.xpose.msra.mxu0 0.0
    %2428 = vmatprep.subr.mxu0 0.0
    %2429 = vmatpush1.xpose.msra.mxu0 0.0
    %2430 = vmatprep.subr.mxu0 0.0
    %2431 = vmatpush1.xpose.msra.mxu0 0.0
    %2432 = vmatprep.subr.mxu0 0.0
    %2433 = vmatpush1.xpose.msra.mxu0 0.0
    %2434 = vmatprep.subr.mxu0 0.0
    %2435 = vmatpush1.xpose.msra.mxu0 0.0
    %2436 = vmatprep.subr.mxu0 0.0
    %2437 = vmatpush1.xpose.msra.mxu0 0.0
    %2438 = vmatprep.subr.mxu0 0.0
    %2439 = vmatpush1.xpose.msra.mxu0 0.0
    %2440 = vmatprep.subr.mxu0 0.0
    %2441 = vmatpush1.xpose.msra.mxu0 0.0
    %2442 = vmatprep.subr.mxu0 0.0
    %2443 = vmatpush1.xpose.msra.mxu0 0.0
    %2444 = vmatprep.subr.mxu0 0.0
    %2445 = vmatpush1.xpose.msra.mxu0 0.0
    %2446 = vmatprep.subr.mxu0 0.0
    %2447 = vmatpush1.xpose.msra.mxu0 0.0
    %2448 = vmatprep.subr.mxu0 0.0
    %2449 = vmatpush1.xpose.msra.mxu0 0.0
    %2450 = vmatprep.mubr.f32.mxu0 0.0
    %2451 = vmatmul.mubr.f32.gmra.mrb[0].mxu0 %v2381
    %v2452 = vpop.f32.mrb[0].mxu0
    %v2453 = vadd.f32 0.0, %v2452
    %v2454 = vpop.f32.mrb[0].mxu0
    %2455 = vdwg.mxu0
    %v2457 = vsel %vm1923, %v712, 0
    %v2460 = vsel %vm1923, %v1316, 0
    %2462 = vmatprep.subr.mxu0 0.0
    %2463 = vmatpush1.xpose.msra.mxu0 %v2460
    %2464 = vmatprep.subr.mxu0 0.0
    %2465 = vmatpush1.xpose.msra.mxu0 0.0
    %2466 = vmatprep.subr.mxu0 0.0
    %2467 = vmatpush1.xpose.msra.mxu0 0.0
    %2468 = vmatprep.subr.mxu0 0.0
    %2469 = vmatpush1.xpose.msra.mxu0 0.0
    %2470 = vmatprep.subr.mxu0 0.0
    %2471 = vmatpush1.xpose.msra.mxu0 0.0
    %2472 = vmatprep.subr.mxu0 0.0
    %2473 = vmatpush1.xpose.msra.mxu0 0.0
    %2474 = vmatprep.subr.mxu0 0.0
    %2475 = vmatpush1.xpose.msra.mxu0 0.0
    %2476 = vmatprep.subr.mxu0 0.0
    %2477 = vmatpush1.xpose.msra.mxu0 0.0
    %2478 = vmatprep.subr.mxu0 0.0
    %2479 = vmatpush1.xpose.msra.mxu0 0.0
    %2480 = vmatprep.subr.mxu0 0.0
    %2481 = vmatpush1.xpose.msra.mxu0 0.0
    %2482 = vmatprep.subr.mxu0 0.0
    %2483 = vmatpush1.xpose.msra.mxu0 0.0
    %2484 = vmatprep.subr.mxu0 0.0
    %2485 = vmatpush1.xpose.msra.mxu0 0.0
    %2486 = vmatprep.subr.mxu0 0.0
    %2487 = vmatpush1.xpose.msra.mxu0 0.0
    %2488 = vmatprep.subr.mxu0 0.0
    %2489 = vmatpush1.xpose.msra.mxu0 0.0
    %2490 = vmatprep.subr.mxu0 0.0
    %2491 = vmatpush1.xpose.msra.mxu0 0.0
    %2492 = vmatprep.subr.mxu0 0.0
    %2493 = vmatpush1.xpose.msra.mxu0 0.0
    %2494 = vmatprep.subr.mxu0 0.0
    %2495 = vmatpush1.xpose.msra.mxu0 0.0
    %2496 = vmatprep.subr.mxu0 0.0
    %2497 = vmatpush1.xpose.msra.mxu0 0.0
    %2498 = vmatprep.subr.mxu0 0.0
    %2499 = vmatpush1.xpose.msra.mxu0 0.0
    %2500 = vmatprep.subr.mxu0 0.0
    %2501 = vmatpush1.xpose.msra.mxu0 0.0
    %2502 = vmatprep.subr.mxu0 0.0
    %2503 = vmatpush1.xpose.msra.mxu0 0.0
    %2504 = vmatprep.subr.mxu0 0.0
    %2505 = vmatpush1.xpose.msra.mxu0 0.0
    %2506 = vmatprep.subr.mxu0 0.0
    %2507 = vmatpush1.xpose.msra.mxu0 0.0
    %2508 = vmatprep.subr.mxu0 0.0
    %2509 = vmatpush1.xpose.msra.mxu0 0.0
    %2510 = vmatprep.subr.mxu0 0.0
    %2511 = vmatpush1.xpose.msra.mxu0 0.0
    %2512 = vmatprep.subr.mxu0 0.0
    %2513 = vmatpush1.xpose.msra.mxu0 0.0
    %2514 = vmatprep.subr.mxu0 0.0
    %2515 = vmatpush1.xpose.msra.mxu0 0.0
    %2516 = vmatprep.subr.mxu0 0.0
    %2517 = vmatpush1.xpose.msra.mxu0 0.0
    %2518 = vmatprep.subr.mxu0 0.0
    %2519 = vmatpush1.xpose.msra.mxu0 0.0
    %2520 = vmatprep.subr.mxu0 0.0
    %2521 = vmatpush1.xpose.msra.mxu0 0.0
    %2522 = vmatprep.subr.mxu0 0.0
    %2523 = vmatpush1.xpose.msra.mxu0 0.0
    %2524 = vmatprep.subr.mxu0 0.0
    %2525 = vmatpush1.xpose.msra.mxu0 0.0
    %2526 = vmatprep.mubr.f32.mxu0 0.0
    %2527 = vmatmul.mubr.f32.gmra.mrb[0].mxu0 %v2457
    %v2528 = vpop.f32.mrb[0].mxu0
    %v2529 = vadd.f32 0.0, %v2528
    %v2530 = vpop.f32.mrb[0].mxu0
    %2531 = vdwg.mxu0
    %v2532 = vlaneseq
    %v2533 = vshrl.u32 %v2532, 7
    %v2534 = vlaneseq
    %v2535 = vand.u32 %v2534, 127
    %vm2536 = vcmp.le.s32.totalorder %v2535, %v2533
    %v2537 = vsel %vm2536, 1, 0
    %vm2538 = vcmp.eq.s32.totalorder %v2537, 1
    %v2539 = vsel %vm2538, %v1997, -10000.0
    %v2540 = vsel %vm2538, %v2073, -10000.0
    %v2541 = vsel %vm2538, %v2149, -10000.0
    %v2542 = vsel %vm2538, %v2225, -10000.0
    %v2543 = vsel %vm2538, %v2301, -10000.0
    %v2544 = vsel %vm2538, %v2377, -10000.0
    %v2545 = vsel %vm2538, %v2453, -10000.0
    %v2546 = vsel %vm2538, %v2529, -10000.0
    %v2547 = vsel %vm1923, %v2539, -inf
    %2548 = vmax.xlane.f32.xlu0 %v2547
    %v2549 = vpop.xlane.xlu0 %2548
    %v2550 = vsel %vm1923, %v2540, -inf
    %2551 = vmax.xlane.f32.xlu0 %v2550
    %v2552 = vpop.xlane.xlu0 %2551
    %v2553 = vsel %vm1923, %v2541, -inf
    %2554 = vmax.xlane.f32.xlu0 %v2553
    %v2555 = vpop.xlane.xlu0 %2554
    %v2556 = vsel %vm1923, %v2542, -inf
    %2557 = vmax.xlane.f32.xlu0 %v2556
    %v2558 = vpop.xlane.xlu0 %2557
    %v2559 = vsel %vm1923, %v2543, -inf
    %2560 = vmax.xlane.f32.xlu0 %v2559
    %v2561 = vpop.xlane.xlu0 %2560
    %v2562 = vsel %vm1923, %v2544, -inf
    %2563 = vmax.xlane.f32.xlu0 %v2562
    %v2564 = vpop.xlane.xlu0 %2563
    %v2565 = vsel %vm1923, %v2545, -inf
    %2566 = vmax.xlane.f32.xlu0 %v2565
    %v2567 = vpop.xlane.xlu0 %2566
    %v2568 = vsel %vm1923, %v2546, -inf
    %2569 = vmax.xlane.f32.xlu0 %v2568
    %v2570 = vpop.xlane.xlu0 %2569
    %v2571 = vsub.f32 %v2539, %v2549
    %v2572 = vsub.f32 %v2540, %v2552
    %v2573 = vsub.f32 %v2541, %v2555
    %v2574 = vsub.f32 %v2542, %v2558
    %v2575 = vsub.f32 %v2543, %v2561
    %v2576 = vsub.f32 %v2544, %v2564
    %v2577 = vsub.f32 %v2545, %v2567
    %v2578 = vsub.f32 %v2546, %v2570
    %v2579 = vmul.f32 %v2571, 1.442695
    %v2580 = vpow.pop %v2579
    %v2581 = vmul.f32 %v2572, 1.442695
    %v2582 = vpow.pop %v2581
    %v2583 = vmul.f32 %v2573, 1.442695
    %v2584 = vpow.pop %v2583
    %v2585 = vmul.f32 %v2574, 1.442695
    %v2586 = vpow.pop %v2585
    %v2587 = vmul.f32 %v2575, 1.442695
    %v2588 = vpow.pop %v2587
    %v2589 = vmul.f32 %v2576, 1.442695
    %v2590 = vpow.pop %v2589
    %v2591 = vmul.f32 %v2577, 1.442695
    %v2592 = vpow.pop %v2591
    %v2593 = vmul.f32 %v2578, 1.442695
    %v2594 = vpow.pop %v2593
    %v2595 = vsel %vm1923, %v2580, 0.0
    %2596 = vadd.xlane.f32.xlu0 %v2595
    %v2597 = vpop.xlane.xlu0 %2596
    %v2598 = vsel %vm1923, %v2582, 0.0
    %2599 = vadd.xlane.f32.xlu0 %v2598
    %v2600 = vpop.xlane.xlu0 %2599
    %v2601 = vsel %vm1923, %v2584, 0.0
    %2602 = vadd.xlane.f32.xlu0 %v2601
    %v2603 = vpop.xlane.xlu0 %2602
    %v2604 = vsel %vm1923, %v2586, 0.0
    %2605 = vadd.xlane.f32.xlu0 %v2604
    %v2606 = vpop.xlane.xlu0 %2605
    %v2607 = vsel %vm1923, %v2588, 0.0
    %2608 = vadd.xlane.f32.xlu0 %v2607
    %v2609 = vpop.xlane.xlu0 %2608
    %v2610 = vsel %vm1923, %v2590, 0.0
    %2611 = vadd.xlane.f32.xlu0 %v2610
    %v2612 = vpop.xlane.xlu0 %2611
    %v2613 = vsel %vm1923, %v2592, 0.0
    %2614 = vadd.xlane.f32.xlu0 %v2613
    %v2615 = vpop.xlane.xlu0 %2614
    %v2616 = vsel %vm1923, %v2594, 0.0
    %2617 = vadd.xlane.f32.xlu0 %v2616
    %v2618 = vpop.xlane.xlu0 %2617
    %v2619 = vrcp.pop %v2597
    %v2620 = vrcp.pop %v2600
    %v2621 = vrcp.pop %v2603
    %v2622 = vrcp.pop %v2606
    %v2623 = vrcp.pop %v2609
    %v2624 = vrcp.pop %v2612
    %v2625 = vrcp.pop %v2615
    %v2626 = vrcp.pop %v2618
    %v2627 = vmul.f32 %v2580, %v2619
    %v2628 = vmul.f32 %v2582, %v2620
    %v2629 = vmul.f32 %v2584, %v2621
    %v2630 = vmul.f32 %v2586, %v2622
    %v2631 = vmul.f32 %v2588, %v2623
    %v2632 = vmul.f32 %v2590, %v2624
    %v2633 = vmul.f32 %v2592, %v2625
    %v2634 = vmul.f32 %v2594, %v2626
    %v2636 = vsel %vm1923, %v2627, 0
    %2638 = vmatprep.subr.mxu0 0.0
    %2639 = vmatpush1.msra.mxu0 %v1430
    %2640 = vmatprep.subr.mxu0 0.0
    %2641 = vmatpush1.msra.mxu0 0.0
    %2642 = vmatprep.subr.mxu0 0.0
    %2643 = vmatpush1.msra.mxu0 0.0
    %2644 = vmatprep.subr.mxu0 0.0
    %2645 = vmatpush1.msra.mxu0 0.0
    %2646 = vmatprep.subr.mxu0 0.0
    %2647 = vmatpush1.msra.mxu0 0.0
    %2648 = vmatprep.subr.mxu0 0.0
    %2649 = vmatpush1.msra.mxu0 0.0
    %2650 = vmatprep.subr.mxu0 0.0
    %2651 = vmatpush1.msra.mxu0 0.0
    %2652 = vmatprep.subr.mxu0 0.0
    %2653 = vmatpush1.msra.mxu0 0.0
    %2654 = vmatprep.subr.mxu0 0.0
    %2655 = vmatpush1.msra.mxu0 0.0
    %2656 = vmatprep.subr.mxu0 0.0
    %2657 = vmatpush1.msra.mxu0 0.0
    %2658 = vmatprep.subr.mxu0 0.0
    %2659 = vmatpush1.msra.mxu0 0.0
    %2660 = vmatprep.subr.mxu0 0.0
    %2661 = vmatpush1.msra.mxu0 0.0
    %2662 = vmatprep.subr.mxu0 0.0
    %2663 = vmatpush1.msra.mxu0 0.0
    %2664 = vmatprep.subr.mxu0 0.0
    %2665 = vmatpush1.msra.mxu0 0.0
    %2666 = vmatprep.subr.mxu0 0.0
    %2667 = vmatpush1.msra.mxu0 0.0
    %2668 = vmatprep.subr.mxu0 0.0
    %2669 = vmatpush1.msra.mxu0 0.0
    %2670 = vmatprep.subr.mxu0 0.0
    %2671 = vmatpush1.msra.mxu0 0.0
    %2672 = vmatprep.subr.mxu0 0.0
    %2673 = vmatpush1.msra.mxu0 0.0
    %2674 = vmatprep.subr.mxu0 0.0
    %2675 = vmatpush1.msra.mxu0 0.0
    %2676 = vmatprep.subr.mxu0 0.0
    %2677 = vmatpush1.msra.mxu0 0.0
    %2678 = vmatprep.subr.mxu0 0.0
    %2679 = vmatpush1.msra.mxu0 0.0
    %2680 = vmatprep.subr.mxu0 0.0
    %2681 = vmatpush1.msra.mxu0 0.0
    %2682 = vmatprep.subr.mxu0 0.0
    %2683 = vmatpush1.msra.mxu0 0.0
    %2684 = vmatprep.subr.mxu0 0.0
    %2685 = vmatpush1.msra.mxu0 0.0
    %2686 = vmatprep.subr.mxu0 0.0
    %2687 = vmatpush1.msra.mxu0 0.0
    %2688 = vmatprep.subr.mxu0 0.0
    %2689 = vmatpush1.msra.mxu0 0.0
    %2690 = vmatprep.subr.mxu0 0.0
    %2691 = vmatpush1.msra.mxu0 0.0
    %2692 = vmatprep.subr.mxu0 0.0
    %2693 = vmatpush1.msra.mxu0 0.0
    %2694 = vmatprep.subr.mxu0 0.0
    %2695 = vmatpush1.msra.mxu0 0.0
    %2696 = vmatprep.subr.mxu0 0.0
    %2697 = vmatpush1.msra.mxu0 0.0
    %2698 = vmatprep.subr.mxu0 0.0
    %2699 = vmatpush1.msra.mxu0 0.0
    %2700 = vmatprep.subr.mxu0 0.0
    %2701 = vmatpush1.msra.mxu0 0.0
    %2702 = vmatprep.mubr.f32.mxu0 0.0
    %2703 = vmatmul.mubr.f32.gmra.mrb[0].mxu0 %v2636
    %v2704 = vpop.f32.mrb[0].mxu0
    %v2705 = vadd.f32 0.0, %v2704
    %v2706 = vpop.f32.mrb[0].mxu0
    %2707 = vdwg.mxu0
    %v2709 = vsel %vm1923, %v2628, 0
    %2711 = vmatprep.subr.mxu0 0.0
    %2712 = vmatpush1.msra.mxu0 %v1500
    %2713 = vmatprep.subr.mxu0 0.0
    %2714 = vmatpush1.msra.mxu0 0.0
    %2715 = vmatprep.subr.mxu0 0.0
    %2716 = vmatpush1.msra.mxu0 0.0
    %2717 = vmatprep.subr.mxu0 0.0
    %2718 = vmatpush1.msra.mxu0 0.0
    %2719 = vmatprep.subr.mxu0 0.0
    %2720 = vmatpush1.msra.mxu0 0.0
    %2721 = vmatprep.subr.mxu0 0.0
    %2722 = vmatpush1.msra.mxu0 0.0
    %2723 = vmatprep.subr.mxu0 0.0
    %2724 = vmatpush1.msra.mxu0 0.0
    %2725 = vmatprep.subr.mxu0 0.0
    %2726 = vmatpush1.msra.mxu0 0.0
    %2727 = vmatprep.subr.mxu0 0.0
    %2728 = vmatpush1.msra.mxu0 0.0
    %2729 = vmatprep.subr.mxu0 0.0
    %2730 = vmatpush1.msra.mxu0 0.0
    %2731 = vmatprep.subr.mxu0 0.0
    %2732 = vmatpush1.msra.mxu0 0.0
    %2733 = vmatprep.subr.mxu0 0.0
    %2734 = vmatpush1.msra.mxu0 0.0
    %2735 = vmatprep.subr.mxu0 0.0
    %2736 = vmatpush1.msra.mxu0 0.0
    %2737 = vmatprep.subr.mxu0 0.0
    %2738 = vmatpush1.msra.mxu0 0.0
    %2739 = vmatprep.subr.mxu0 0.0
    %2740 = vmatpush1.msra.mxu0 0.0
    %2741 = vmatprep.subr.mxu0 0.0
    %2742 = vmatpush1.msra.mxu0 0.0
    %2743 = vmatprep.subr.mxu0 0.0
    %2744 = vmatpush1.msra.mxu0 0.0
    %2745 = vmatprep.subr.mxu0 0.0
    %2746 = vmatpush1.msra.mxu0 0.0
    %2747 = vmatprep.subr.mxu0 0.0
    %2748 = vmatpush1.msra.mxu0 0.0
    %2749 = vmatprep.subr.mxu0 0.0
    %2750 = vmatpush1.msra.mxu0 0.0
    %2751 = vmatprep.subr.mxu0 0.0
    %2752 = vmatpush1.msra.mxu0 0.0
    %2753 = vmatprep.subr.mxu0 0.0
    %2754 = vmatpush1.msra.mxu0 0.0
    %2755 = vmatprep.subr.mxu0 0.0
    %2756 = vmatpush1.msra.mxu0 0.0
    %2757 = vmatprep.subr.mxu0 0.0
    %2758 = vmatpush1.msra.mxu0 0.0
    %2759 = vmatprep.subr.mxu0 0.0
    %2760 = vmatpush1.msra.mxu0 0.0
    %2761 = vmatprep.subr.mxu0 0.0
    %2762 = vmatpush1.msra.mxu0 0.0
    %2763 = vmatprep.subr.mxu0 0.0
    %2764 = vmatpush1.msra.mxu0 0.0
    %2765 = vmatprep.subr.mxu0 0.0
    %2766 = vmatpush1.msra.mxu0 0.0
    %2767 = vmatprep.subr.mxu0 0.0
    %2768 = vmatpush1.msra.mxu0 0.0
    %2769 = vmatprep.subr.mxu0 0.0
    %2770 = vmatpush1.msra.mxu0 0.0
    %2771 = vmatprep.subr.mxu0 0.0
    %2772 = vmatpush1.msra.mxu0 0.0
    %2773 = vmatprep.subr.mxu0 0.0
    %2774 = vmatpush1.msra.mxu0 0.0
    %2775 = vmatprep.mubr.f32.mxu0 0.0
    %2776 = vmatmul.mubr.f32.gmra.mrb[0].mxu0 %v2709
    %v2777 = vpop.f32.mrb[0].mxu0
    %v2778 = vadd.f32 0.0, %v2777
    %v2779 = vpop.f32.mrb[0].mxu0
    %2780 = vdwg.mxu0
    %v2782 = vsel %vm1923, %v2629, 0
    %2784 = vmatprep.subr.mxu0 0.0
    %2785 = vmatpush1.msra.mxu0 %v1570
    %2786 = vmatprep.subr.mxu0 0.0
    %2787 = vmatpush1.msra.mxu0 0.0
    %2788 = vmatprep.subr.mxu0 0.0
    %2789 = vmatpush1.msra.mxu0 0.0
    %2790 = vmatprep.subr.mxu0 0.0
    %2791 = vmatpush1.msra.mxu0 0.0
    %2792 = vmatprep.subr.mxu0 0.0
    %2793 = vmatpush1.msra.mxu0 0.0
    %2794 = vmatprep.subr.mxu0 0.0
    %2795 = vmatpush1.msra.mxu0 0.0
    %2796 = vmatprep.subr.mxu0 0.0
    %2797 = vmatpush1.msra.mxu0 0.0
    %2798 = vmatprep.subr.mxu0 0.0
    %2799 = vmatpush1.msra.mxu0 0.0
    %2800 = vmatprep.subr.mxu0 0.0
    %2801 = vmatpush1.msra.mxu0 0.0
    %2802 = vmatprep.subr.mxu0 0.0
    %2803 = vmatpush1.msra.mxu0 0.0
    %2804 = vmatprep.subr.mxu0 0.0
    %2805 = vmatpush1.msra.mxu0 0.0
    %2806 = vmatprep.subr.mxu0 0.0
    %2807 = vmatpush1.msra.mxu0 0.0
    %2808 = vmatprep.subr.mxu0 0.0
    %2809 = vmatpush1.msra.mxu0 0.0
    %2810 = vmatprep.subr.mxu0 0.0
    %2811 = vmatpush1.msra.mxu0 0.0
    %2812 = vmatprep.subr.mxu0 0.0
    %2813 = vmatpush1.msra.mxu0 0.0
    %2814 = vmatprep.subr.mxu0 0.0
    %2815 = vmatpush1.msra.mxu0 0.0
    %2816 = vmatprep.subr.mxu0 0.0
    %2817 = vmatpush1.msra.mxu0 0.0
    %2818 = vmatprep.subr.mxu0 0.0
    %2819 = vmatpush1.msra.mxu0 0.0
    %2820 = vmatprep.subr.mxu0 0.0
    %2821 = vmatpush1.msra.mxu0 0.0
    %2822 = vmatprep.subr.mxu0 0.0
    %2823 = vmatpush1.msra.mxu0 0.0
    %2824 = vmatprep.subr.mxu0 0.0
    %2825 = vmatpush1.msra.mxu0 0.0
    %2826 = vmatprep.subr.mxu0 0.0
    %2827 = vmatpush1.msra.mxu0 0.0
    %2828 = vmatprep.subr.mxu0 0.0
    %2829 = vmatpush1.msra.mxu0 0.0
    %2830 = vmatprep.subr.mxu0 0.0
    %2831 = vmatpush1.msra.mxu0 0.0
    %2832 = vmatprep.subr.mxu0 0.0
    %2833 = vmatpush1.msra.mxu0 0.0
    %2834 = vmatprep.subr.mxu0 0.0
    %2835 = vmatpush1.msra.mxu0 0.0
    %2836 = vmatprep.subr.mxu0 0.0
    %2837 = vmatpush1.msra.mxu0 0.0
    %2838 = vmatprep.subr.mxu0 0.0
    %2839 = vmatpush1.msra.mxu0 0.0
    %2840 = vmatprep.subr.mxu0 0.0
    %2841 = vmatpush1.msra.mxu0 0.0
    %2842 = vmatprep.subr.mxu0 0.0
    %2843 = vmatpush1.msra.mxu0 0.0
    %2844 = vmatprep.subr.mxu0 0.0
    %2845 = vmatpush1.msra.mxu0 0.0
    %2846 = vmatprep.subr.mxu0 0.0
    %2847 = vmatpush1.msra.mxu0 0.0
    %2848 = vmatprep.mubr.f32.mxu0 0.0
    %2849 = vmatmul.mubr.f32.gmra.mrb[0].mxu0 %v2782
    %v2850 = vpop.f32.mrb[0].mxu0
    %v2851 = vadd.f32 0.0, %v2850
    %v2852 = vpop.f32.mrb[0].mxu0
    %2853 = vdwg.mxu0
    %v2855 = vsel %vm1923, %v2630, 0
    %2857 = vmatprep.subr.mxu0 0.0
    %2858 = vmatpush1.msra.mxu0 %v1640
    %2859 = vmatprep.subr.mxu0 0.0
    %2860 = vmatpush1.msra.mxu0 0.0
    %2861 = vmatprep.subr.mxu0 0.0
    %2862 = vmatpush1.msra.mxu0 0.0
    %2863 = vmatprep.subr.mxu0 0.0
    %2864 = vmatpush1.msra.mxu0 0.0
    %2865 = vmatprep.subr.mxu0 0.0
    %2866 = vmatpush1.msra.mxu0 0.0
    %2867 = vmatprep.subr.mxu0 0.0
    %2868 = vmatpush1.msra.mxu0 0.0
    %2869 = vmatprep.subr.mxu0 0.0
    %2870 = vmatpush1.msra.mxu0 0.0
    %2871 = vmatprep.subr.mxu0 0.0
    %2872 = vmatpush1.msra.mxu0 0.0
    %2873 = vmatprep.subr.mxu0 0.0
    %2874 = vmatpush1.msra.mxu0 0.0
    %2875 = vmatprep.subr.mxu0 0.0
    %2876 = vmatpush1.msra.mxu0 0.0
    %2877 = vmatprep.subr.mxu0 0.0
    %2878 = vmatpush1.msra.mxu0 0.0
    %2879 = vmatprep.subr.mxu0 0.0
    %2880 = vmatpush1.msra.mxu0 0.0
    %2881 = vmatprep.subr.mxu0 0.0
    %2882 = vmatpush1.msra.mxu0 0.0
    %2883 = vmatprep.subr.mxu0 0.0
    %2884 = vmatpush1.msra.mxu0 0.0
    %2885 = vmatprep.subr.mxu0 0.0
    %2886 = vmatpush1.msra.mxu0 0.0
    %2887 = vmatprep.subr.mxu0 0.0
    %2888 = vmatpush1.msra.mxu0 0.0
    %2889 = vmatprep.subr.mxu0 0.0
    %2890 = vmatpush1.msra.mxu0 0.0
    %2891 = vmatprep.subr.mxu0 0.0
    %2892 = vmatpush1.msra.mxu0 0.0
    %2893 = vmatprep.subr.mxu0 0.0
    %2894 = vmatpush1.msra.mxu0 0.0
    %2895 = vmatprep.subr.mxu0 0.0
    %2896 = vmatpush1.msra.mxu0 0.0
    %2897 = vmatprep.subr.mxu0 0.0
    %2898 = vmatpush1.msra.mxu0 0.0
    %2899 = vmatprep.subr.mxu0 0.0
    %2900 = vmatpush1.msra.mxu0 0.0
    %2901 = vmatprep.subr.mxu0 0.0
    %2902 = vmatpush1.msra.mxu0 0.0
    %2903 = vmatprep.subr.mxu0 0.0
    %2904 = vmatpush1.msra.mxu0 0.0
    %2905 = vmatprep.subr.mxu0 0.0
    %2906 = vmatpush1.msra.mxu0 0.0
    %2907 = vmatprep.subr.mxu0 0.0
    %2908 = vmatpush1.msra.mxu0 0.0
    %2909 = vmatprep.subr.mxu0 0.0
    %2910 = vmatpush1.msra.mxu0 0.0
    %2911 = vmatprep.subr.mxu0 0.0
    %2912 = vmatpush1.msra.mxu0 0.0
    %2913 = vmatprep.subr.mxu0 0.0
    %2914 = vmatpush1.msra.mxu0 0.0
    %2915 = vmatprep.subr.mxu0 0.0
    %2916 = vmatpush1.msra.mxu0 0.0
    %2917 = vmatprep.subr.mxu0 0.0
    %2918 = vmatpush1.msra.mxu0 0.0
    %2919 = vmatprep.subr.mxu0 0.0
    %2920 = vmatpush1.msra.mxu0 0.0
    %2921 = vmatprep.mubr.f32.mxu0 0.0
    %2922 = vmatmul.mubr.f32.gmra.mrb[0].mxu0 %v2855
    %v2923 = vpop.f32.mrb[0].mxu0
    %v2924 = vadd.f32 0.0, %v2923
    %v2925 = vpop.f32.mrb[0].mxu0
    %2926 = vdwg.mxu0
    %v2928 = vsel %vm1923, %v2631, 0
    %2930 = vmatprep.subr.mxu0 0.0
    %2931 = vmatpush1.msra.mxu0 %v1710
    %2932 = vmatprep.subr.mxu0 0.0
    %2933 = vmatpush1.msra.mxu0 0.0
    %2934 = vmatprep.subr.mxu0 0.0
    %2935 = vmatpush1.msra.mxu0 0.0
    %2936 = vmatprep.subr.mxu0 0.0
    %2937 = vmatpush1.msra.mxu0 0.0
    %2938 = vmatprep.subr.mxu0 0.0
    %2939 = vmatpush1.msra.mxu0 0.0
    %2940 = vmatprep.subr.mxu0 0.0
    %2941 = vmatpush1.msra.mxu0 0.0
    %2942 = vmatprep.subr.mxu0 0.0
    %2943 = vmatpush1.msra.mxu0 0.0
    %2944 = vmatprep.subr.mxu0 0.0
    %2945 = vmatpush1.msra.mxu0 0.0
    %2946 = vmatprep.subr.mxu0 0.0
    %2947 = vmatpush1.msra.mxu0 0.0
    %2948 = vmatprep.subr.mxu0 0.0
    %2949 = vmatpush1.msra.mxu0 0.0
    %2950 = vmatprep.subr.mxu0 0.0
    %2951 = vmatpush1.msra.mxu0 0.0
    %2952 = vmatprep.subr.mxu0 0.0
    %2953 = vmatpush1.msra.mxu0 0.0
    %2954 = vmatprep.subr.mxu0 0.0
    %2955 = vmatpush1.msra.mxu0 0.0
    %2956 = vmatprep.subr.mxu0 0.0
    %2957 = vmatpush1.msra.mxu0 0.0
    %2958 = vmatprep.subr.mxu0 0.0
    %2959 = vmatpush1.msra.mxu0 0.0
    %2960 = vmatprep.subr.mxu0 0.0
    %2961 = vmatpush1.msra.mxu0 0.0
    %2962 = vmatprep.subr.mxu0 0.0
    %2963 = vmatpush1.msra.mxu0 0.0
    %2964 = vmatprep.subr.mxu0 0.0
    %2965 = vmatpush1.msra.mxu0 0.0
    %2966 = vmatprep.subr.mxu0 0.0
    %2967 = vmatpush1.msra.mxu0 0.0
    %2968 = vmatprep.subr.mxu0 0.0
    %2969 = vmatpush1.msra.mxu0 0.0
    %2970 = vmatprep.subr.mxu0 0.0
    %2971 = vmatpush1.msra.mxu0 0.0
    %2972 = vmatprep.subr.mxu0 0.0
    %2973 = vmatpush1.msra.mxu0 0.0
    %2974 = vmatprep.subr.mxu0 0.0
    %2975 = vmatpush1.msra.mxu0 0.0
    %2976 = vmatprep.subr.mxu0 0.0
    %2977 = vmatpush1.msra.mxu0 0.0
    %2978 = vmatprep.subr.mxu0 0.0
    %2979 = vmatpush1.msra.mxu0 0.0
    %2980 = vmatprep.subr.mxu0 0.0
    %2981 = vmatpush1.msra.mxu0 0.0
    %2982 = vmatprep.subr.mxu0 0.0
    %2983 = vmatpush1.msra.mxu0 0.0
    %2984 = vmatprep.subr.mxu0 0.0
    %2985 = vmatpush1.msra.mxu0 0.0
    %2986 = vmatprep.subr.mxu0 0.0
    %2987 = vmatpush1.msra.mxu0 0.0
    %2988 = vmatprep.subr.mxu0 0.0
    %2989 = vmatpush1.msra.mxu0 0.0
    %2990 = vmatprep.subr.mxu0 0.0
    %2991 = vmatpush1.msra.mxu0 0.0
    %2992 = vmatprep.subr.mxu0 0.0
    %2993 = vmatpush1.msra.mxu0 0.0
    %2994 = vmatprep.mubr.f32.mxu0 0.0
    %2995 = vmatmul.mubr.f32.gmra.mrb[0].mxu0 %v2928
    %v2996 = vpop.f32.mrb[0].mxu0
    %v2997 = vadd.f32 0.0, %v2996
    %v2998 = vpop.f32.mrb[0].mxu0
    %2999 = vdwg.mxu0
    %v3001 = vsel %vm1923, %v2632, 0
    %3003 = vmatprep.subr.mxu0 0.0
    %3004 = vmatpush1.msra.mxu0 %v1780
    %3005 = vmatprep.subr.mxu0 0.0
    %3006 = vmatpush1.msra.mxu0 0.0
    %3007 = vmatprep.subr.mxu0 0.0
    %3008 = vmatpush1.msra.mxu0 0.0
    %3009 = vmatprep.subr.mxu0 0.0
    %3010 = vmatpush1.msra.mxu0 0.0
    %3011 = vmatprep.subr.mxu0 0.0
    %3012 = vmatpush1.msra.mxu0 0.0
    %3013 = vmatprep.subr.mxu0 0.0
    %3014 = vmatpush1.msra.mxu0 0.0
    %3015 = vmatprep.subr.mxu0 0.0
    %3016 = vmatpush1.msra.mxu0 0.0
    %3017 = vmatprep.subr.mxu0 0.0
    %3018 = vmatpush1.msra.mxu0 0.0
    %3019 = vmatprep.subr.mxu0 0.0
    %3020 = vmatpush1.msra.mxu0 0.0
    %3021 = vmatprep.subr.mxu0 0.0
    %3022 = vmatpush1.msra.mxu0 0.0
    %3023 = vmatprep.subr.mxu0 0.0
    %3024 = vmatpush1.msra.mxu0 0.0
    %3025 = vmatprep.subr.mxu0 0.0
    %3026 = vmatpush1.msra.mxu0 0.0
    %3027 = vmatprep.subr.mxu0 0.0
    %3028 = vmatpush1.msra.mxu0 0.0
    %3029 = vmatprep.subr.mxu0 0.0
    %3030 = vmatpush1.msra.mxu0 0.0
    %3031 = vmatprep.subr.mxu0 0.0
    %3032 = vmatpush1.msra.mxu0 0.0
    %3033 = vmatprep.subr.mxu0 0.0
    %3034 = vmatpush1.msra.mxu0 0.0
    %3035 = vmatprep.subr.mxu0 0.0
    %3036 = vmatpush1.msra.mxu0 0.0
    %3037 = vmatprep.subr.mxu0 0.0
    %3038 = vmatpush1.msra.mxu0 0.0
    %3039 = vmatprep.subr.mxu0 0.0
    %3040 = vmatpush1.msra.mxu0 0.0
    %3041 = vmatprep.subr.mxu0 0.0
    %3042 = vmatpush1.msra.mxu0 0.0
    %3043 = vmatprep.subr.mxu0 0.0
    %3044 = vmatpush1.msra.mxu0 0.0
    %3045 = vmatprep.subr.mxu0 0.0
    %3046 = vmatpush1.msra.mxu0 0.0
    %3047 = vmatprep.subr.mxu0 0.0
    %3048 = vmatpush1.msra.mxu0 0.0
    %3049 = vmatprep.subr.mxu0 0.0
    %3050 = vmatpush1.msra.mxu0 0.0
    %3051 = vmatprep.subr.mxu0 0.0
    %3052 = vmatpush1.msra.mxu0 0.0
    %3053 = vmatprep.subr.mxu0 0.0
    %3054 = vmatpush1.msra.mxu0 0.0
    %3055 = vmatprep.subr.mxu0 0.0
    %3056 = vmatpush1.msra.mxu0 0.0
    %3057 = vmatprep.subr.mxu0 0.0
    %3058 = vmatpush1.msra.mxu0 0.0
    %3059 = vmatprep.subr.mxu0 0.0
    %3060 = vmatpush1.msra.mxu0 0.0
    %3061 = vmatprep.subr.mxu0 0.0
    %3062 = vmatpush1.msra.mxu0 0.0
    %3063 = vmatprep.subr.mxu0 0.0
    %3064 = vmatpush1.msra.mxu0 0.0
    %3065 = vmatprep.subr.mxu0 0.0
    %3066 = vmatpush1.msra.mxu0 0.0
    %3067 = vmatprep.mubr.f32.mxu0 0.0
    %3068 = vmatmul.mubr.f32.gmra.mrb[0].mxu0 %v3001
    %v3069 = vpop.f32.mrb[0].mxu0
    %v3070 = vadd.f32 0.0, %v3069
    %v3071 = vpop.f32.mrb[0].mxu0
    %3072 = vdwg.mxu0
    %v3074 = vsel %vm1923, %v2633, 0
    %3076 = vmatprep.subr.mxu0 0.0
    %3077 = vmatpush1.msra.mxu0 %v1850
    %3078 = vmatprep.subr.mxu0 0.0
    %3079 = vmatpush1.msra.mxu0 0.0
    %3080 = vmatprep.subr.mxu0 0.0
    %3081 = vmatpush1.msra.mxu0 0.0
    %3082 = vmatprep.subr.mxu0 0.0
    %3083 = vmatpush1.msra.mxu0 0.0
    %3084 = vmatprep.subr.mxu0 0.0
    %3085 = vmatpush1.msra.mxu0 0.0
    %3086 = vmatprep.subr.mxu0 0.0
    %3087 = vmatpush1.msra.mxu0 0.0
    %3088 = vmatprep.subr.mxu0 0.0
    %3089 = vmatpush1.msra.mxu0 0.0
    %3090 = vmatprep.subr.mxu0 0.0
    %3091 = vmatpush1.msra.mxu0 0.0
    %3092 = vmatprep.subr.mxu0 0.0
    %3093 = vmatpush1.msra.mxu0 0.0
    %3094 = vmatprep.subr.mxu0 0.0
    %3095 = vmatpush1.msra.mxu0 0.0
    %3096 = vmatprep.subr.mxu0 0.0
    %3097 = vmatpush1.msra.mxu0 0.0
    %3098 = vmatprep.subr.mxu0 0.0
    %3099 = vmatpush1.msra.mxu0 0.0
    %3100 = vmatprep.subr.mxu0 0.0
    %3101 = vmatpush1.msra.mxu0 0.0
    %3102 = vmatprep.subr.mxu0 0.0
    %3103 = vmatpush1.msra.mxu0 0.0
    %3104 = vmatprep.subr.mxu0 0.0
    %3105 = vmatpush1.msra.mxu0 0.0
    %3106 = vmatprep.subr.mxu0 0.0
    %3107 = vmatpush1.msra.mxu0 0.0
    %3108 = vmatprep.subr.mxu0 0.0
    %3109 = vmatpush1.msra.mxu0 0.0
    %3110 = vmatprep.subr.mxu0 0.0
    %3111 = vmatpush1.msra.mxu0 0.0
    %3112 = vmatprep.subr.mxu0 0.0
    %3113 = vmatpush1.msra.mxu0 0.0
    %3114 = vmatprep.subr.mxu0 0.0
    %3115 = vmatpush1.msra.mxu0 0.0
    %3116 = vmatprep.subr.mxu0 0.0
    %3117 = vmatpush1.msra.mxu0 0.0
    %3118 = vmatprep.subr.mxu0 0.0
    %3119 = vmatpush1.msra.mxu0 0.0
    %3120 = vmatprep.subr.mxu0 0.0
    %3121 = vmatpush1.msra.mxu0 0.0
    %3122 = vmatprep.subr.mxu0 0.0
    %3123 = vmatpush1.msra.mxu0 0.0
    %3124 = vmatprep.subr.mxu0 0.0
    %3125 = vmatpush1.msra.mxu0 0.0
    %3126 = vmatprep.subr.mxu0 0.0
    %3127 = vmatpush1.msra.mxu0 0.0
    %3128 = vmatprep.subr.mxu0 0.0
    %3129 = vmatpush1.msra.mxu0 0.0
    %3130 = vmatprep.subr.mxu0 0.0
    %3131 = vmatpush1.msra.mxu0 0.0
    %3132 = vmatprep.subr.mxu0 0.0
    %3133 = vmatpush1.msra.mxu0 0.0
    %3134 = vmatprep.subr.mxu0 0.0
    %3135 = vmatpush1.msra.mxu0 0.0
    %3136 = vmatprep.subr.mxu0 0.0
    %3137 = vmatpush1.msra.mxu0 0.0
    %3138 = vmatprep.subr.mxu0 0.0
    %3139 = vmatpush1.msra.mxu0 0.0
    %3140 = vmatprep.mubr.f32.mxu0 0.0
    %3141 = vmatmul.mubr.f32.gmra.mrb[0].mxu0 %v3074
    %v3142 = vpop.f32.mrb[0].mxu0
    %v3143 = vadd.f32 0.0, %v3142
    %v3144 = vpop.f32.mrb[0].mxu0
    %3145 = vdwg.mxu0
    %v3147 = vsel %vm1923, %v2634, 0
    %3149 = vmatprep.subr.mxu0 0.0
    %3150 = vmatpush1.msra.mxu0 %v1920
    %3151 = vmatprep.subr.mxu0 0.0
    %3152 = vmatpush1.msra.mxu0 0.0
    %3153 = vmatprep.subr.mxu0 0.0
    %3154 = vmatpush1.msra.mxu0 0.0
    %3155 = vmatprep.subr.mxu0 0.0
    %3156 = vmatpush1.msra.mxu0 0.0
    %3157 = vmatprep.subr.mxu0 0.0
    %3158 = vmatpush1.msra.mxu0 0.0
    %3159 = vmatprep.subr.mxu0 0.0
    %3160 = vmatpush1.msra.mxu0 0.0
    %3161 = vmatprep.subr.mxu0 0.0
    %3162 = vmatpush1.msra.mxu0 0.0
    %3163 = vmatprep.subr.mxu0 0.0
    %3164 = vmatpush1.msra.mxu0 0.0
    %3165 = vmatprep.subr.mxu0 0.0
    %3166 = vmatpush1.msra.mxu0 0.0
    %3167 = vmatprep.subr.mxu0 0.0
    %3168 = vmatpush1.msra.mxu0 0.0
    %3169 = vmatprep.subr.mxu0 0.0
    %3170 = vmatpush1.msra.mxu0 0.0
    %3171 = vmatprep.subr.mxu0 0.0
    %3172 = vmatpush1.msra.mxu0 0.0
    %3173 = vmatprep.subr.mxu0 0.0
    %3174 = vmatpush1.msra.mxu0 0.0
    %3175 = vmatprep.subr.mxu0 0.0
    %3176 = vmatpush1.msra.mxu0 0.0
    %3177 = vmatprep.subr.mxu0 0.0
    %3178 = vmatpush1.msra.mxu0 0.0
    %3179 = vmatprep.subr.mxu0 0.0
    %3180 = vmatpush1.msra.mxu0 0.0
    %3181 = vmatprep.subr.mxu0 0.0
    %3182 = vmatpush1.msra.mxu0 0.0
    %3183 = vmatprep.subr.mxu0 0.0
    %3184 = vmatpush1.msra.mxu0 0.0
    %3185 = vmatprep.subr.mxu0 0.0
    %3186 = vmatpush1.msra.mxu0 0.0
    %3187 = vmatprep.subr.mxu0 0.0
    %3188 = vmatpush1.msra.mxu0 0.0
    %3189 = vmatprep.subr.mxu0 0.0
    %3190 = vmatpush1.msra.mxu0 0.0
    %3191 = vmatprep.subr.mxu0 0.0
    %3192 = vmatpush1.msra.mxu0 0.0
    %3193 = vmatprep.subr.mxu0 0.0
    %3194 = vmatpush1.msra.mxu0 0.0
    %3195 = vmatprep.subr.mxu0 0.0
    %3196 = vmatpush1.msra.mxu0 0.0
    %3197 = vmatprep.subr.mxu0 0.0
    %3198 = vmatpush1.msra.mxu0 0.0
    %3199 = vmatprep.subr.mxu0 0.0
    %3200 = vmatpush1.msra.mxu0 0.0
    %3201 = vmatprep.subr.mxu0 0.0
    %3202 = vmatpush1.msra.mxu0 0.0
    %3203 = vmatprep.subr.mxu0 0.0
    %3204 = vmatpush1.msra.mxu0 0.0
    %3205 = vmatprep.subr.mxu0 0.0
    %3206 = vmatpush1.msra.mxu0 0.0
    %3207 = vmatprep.subr.mxu0 0.0
    %3208 = vmatpush1.msra.mxu0 0.0
    %3209 = vmatprep.subr.mxu0 0.0
    %3210 = vmatpush1.msra.mxu0 0.0
    %3211 = vmatprep.subr.mxu0 0.0
    %3212 = vmatpush1.msra.mxu0 0.0
    %3213 = vmatprep.mubr.f32.mxu0 0.0
    %3214 = vmatmul.mubr.f32.gmra.mrb[0].mxu0 %v3147
    %v3215 = vpop.f32.mrb[0].mxu0
    %v3216 = vadd.f32 0.0, %v3215
    %v3217 = vpop.f32.mrb[0].mxu0
    %3218 = vdwg.mxu0
    %v3219 = vld [vmem:[%s9] sm:$0xff]
    %v3220 = vld [vmem:[%s9 + $0x8] sm:$0xff]
    %v3221 = vld [vmem:[%s9 + $0x10] sm:$0xff]
    %v3222 = vld [vmem:[%s9 + $0x18] sm:$0xff]
    %v3224 = vsel %vm1923, %v2705, 0
    %3226 = vmatprep.subr.mxu0 0.0
    %3227 = vmatpush1.msra.mxu0 %v3219
    %3228 = vmatprep.subr.mxu0 0.0
    %3229 = vmatpush1.msra.mxu0 0.0
    %3230 = vmatprep.subr.mxu0 0.0
    %3231 = vmatpush1.msra.mxu0 0.0
    %3232 = vmatprep.subr.mxu0 0.0
    %3233 = vmatpush1.msra.mxu0 0.0
    %3234 = vmatprep.subr.mxu0 0.0
    %3235 = vmatpush1.msra.mxu0 0.0
    %3236 = vmatprep.subr.mxu0 0.0
    %3237 = vmatpush1.msra.mxu0 0.0
    %3238 = vmatprep.subr.mxu0 0.0
    %3239 = vmatpush1.msra.mxu0 0.0
    %3240 = vmatprep.subr.mxu0 0.0
    %3241 = vmatpush1.msra.mxu0 0.0
    %3242 = vmatprep.subr.mxu0 0.0
    %3243 = vmatpush1.msra.mxu0 0.0
    %3244 = vmatprep.subr.mxu0 0.0
    %3245 = vmatpush1.msra.mxu0 0.0
    %3246 = vmatprep.subr.mxu0 0.0
    %3247 = vmatpush1.msra.mxu0 0.0
    %3248 = vmatprep.subr.mxu0 0.0
    %3249 = vmatpush1.msra.mxu0 0.0
    %3250 = vmatprep.subr.mxu0 0.0
    %3251 = vmatpush1.msra.mxu0 0.0
    %3252 = vmatprep.subr.mxu0 0.0
    %3253 = vmatpush1.msra.mxu0 0.0
    %3254 = vmatprep.subr.mxu0 0.0
    %3255 = vmatpush1.msra.mxu0 0.0
    %3256 = vmatprep.subr.mxu0 0.0
    %3257 = vmatpush1.msra.mxu0 0.0
    %3258 = vmatprep.subr.mxu0 0.0
    %3259 = vmatpush1.msra.mxu0 0.0
    %3260 = vmatprep.subr.mxu0 0.0
    %3261 = vmatpush1.msra.mxu0 0.0
    %3262 = vmatprep.subr.mxu0 0.0
    %3263 = vmatpush1.msra.mxu0 0.0
    %3264 = vmatprep.subr.mxu0 0.0
    %3265 = vmatpush1.msra.mxu0 0.0
    %3266 = vmatprep.subr.mxu0 0.0
    %3267 = vmatpush1.msra.mxu0 0.0
    %3268 = vmatprep.subr.mxu0 0.0
    %3269 = vmatpush1.msra.mxu0 0.0
    %3270 = vmatprep.subr.mxu0 0.0
    %3271 = vmatpush1.msra.mxu0 0.0
    %3272 = vmatprep.subr.mxu0 0.0
    %3273 = vmatpush1.msra.mxu0 0.0
    %3274 = vmatprep.subr.mxu0 0.0
    %3275 = vmatpush1.msra.mxu0 0.0
    %3276 = vmatprep.subr.mxu0 0.0
    %3277 = vmatpush1.msra.mxu0 0.0
    %3278 = vmatprep.subr.mxu0 0.0
    %3279 = vmatpush1.msra.mxu0 0.0
    %3280 = vmatprep.subr.mxu0 0.0
    %3281 = vmatpush1.msra.mxu0 0.0
    %3282 = vmatprep.subr.mxu0 0.0
    %3283 = vmatpush1.msra.mxu0 0.0
    %3284 = vmatprep.subr.mxu0 0.0
    %3285 = vmatpush1.msra.mxu0 0.0
    %3286 = vmatprep.subr.mxu0 0.0
    %3287 = vmatpush1.msra.mxu0 0.0
    %3288 = vmatprep.subr.mxu0 0.0
    %3289 = vmatpush1.msra.mxu0 0.0
    %3290 = vmatprep.mubr.f32.mxu0 0.0
    %3291 = vmatmul.mubr.f32.gmra.mrb[0].mxu0 %v3224
    %v3292 = vpop.f32.mrb[0].mxu0
    %v3293 = vadd.f32 0.0, %v3292
    %v3294 = vpop.f32.mrb[0].mxu0
    %3295 = vdwg.mxu0
    %v3297 = vsel %vm1923, %v2778, 0
    %3299 = vmatprep.subr.mxu0 0.0
    %3300 = vmatpush1.msra.mxu0 %v3220
    %3301 = vmatprep.subr.mxu0 0.0
    %3302 = vmatpush1.msra.mxu0 0.0
    %3303 = vmatprep.subr.mxu0 0.0
    %3304 = vmatpush1.msra.mxu0 0.0
    %3305 = vmatprep.subr.mxu0 0.0
    %3306 = vmatpush1.msra.mxu0 0.0
    %3307 = vmatprep.subr.mxu0 0.0
    %3308 = vmatpush1.msra.mxu0 0.0
    %3309 = vmatprep.subr.mxu0 0.0
    %3310 = vmatpush1.msra.mxu0 0.0
    %3311 = vmatprep.subr.mxu0 0.0
    %3312 = vmatpush1.msra.mxu0 0.0
    %3313 = vmatprep.subr.mxu0 0.0
    %3314 = vmatpush1.msra.mxu0 0.0
    %3315 = vmatprep.subr.mxu0 0.0
    %3316 = vmatpush1.msra.mxu0 0.0
    %3317 = vmatprep.subr.mxu0 0.0
    %3318 = vmatpush1.msra.mxu0 0.0
    %3319 = vmatprep.subr.mxu0 0.0
    %3320 = vmatpush1.msra.mxu0 0.0
    %3321 = vmatprep.subr.mxu0 0.0
    %3322 = vmatpush1.msra.mxu0 0.0
    %3323 = vmatprep.subr.mxu0 0.0
    %3324 = vmatpush1.msra.mxu0 0.0
    %3325 = vmatprep.subr.mxu0 0.0
    %3326 = vmatpush1.msra.mxu0 0.0
    %3327 = vmatprep.subr.mxu0 0.0
    %3328 = vmatpush1.msra.mxu0 0.0
    %3329 = vmatprep.subr.mxu0 0.0
    %3330 = vmatpush1.msra.mxu0 0.0
    %3331 = vmatprep.subr.mxu0 0.0
    %3332 = vmatpush1.msra.mxu0 0.0
    %3333 = vmatprep.subr.mxu0 0.0
    %3334 = vmatpush1.msra.mxu0 0.0
    %3335 = vmatprep.subr.mxu0 0.0
    %3336 = vmatpush1.msra.mxu0 0.0
    %3337 = vmatprep.subr.mxu0 0.0
    %3338 = vmatpush1.msra.mxu0 0.0
    %3339 = vmatprep.subr.mxu0 0.0
    %3340 = vmatpush1.msra.mxu0 0.0
    %3341 = vmatprep.subr.mxu0 0.0
    %3342 = vmatpush1.msra.mxu0 0.0
    %3343 = vmatprep.subr.mxu0 0.0
    %3344 = vmatpush1.msra.mxu0 0.0
    %3345 = vmatprep.subr.mxu0 0.0
    %3346 = vmatpush1.msra.mxu0 0.0
    %3347 = vmatprep.subr.mxu0 0.0
    %3348 = vmatpush1.msra.mxu0 0.0
    %3349 = vmatprep.subr.mxu0 0.0
    %3350 = vmatpush1.msra.mxu0 0.0
    %3351 = vmatprep.subr.mxu0 0.0
    %3352 = vmatpush1.msra.mxu0 0.0
    %3353 = vmatprep.subr.mxu0 0.0
    %3354 = vmatpush1.msra.mxu0 0.0
    %3355 = vmatprep.subr.mxu0 0.0
    %3356 = vmatpush1.msra.mxu0 0.0
    %3357 = vmatprep.subr.mxu0 0.0
    %3358 = vmatpush1.msra.mxu0 0.0
    %3359 = vmatprep.subr.mxu0 0.0
    %3360 = vmatpush1.msra.mxu0 0.0
    %3361 = vmatprep.subr.mxu0 0.0
    %3362 = vmatpush1.msra.mxu0 0.0
    %3363 = vmatprep.mubr.f32.mxu0 0.0
    %3364 = vmatmul.mubr.f32.gmra.mrb[0].mxu0 %v3297
    %v3365 = vpop.f32.mrb[0].mxu0
    %v3366 = vadd.f32 0.0, %v3365
    %v3367 = vpop.f32.mrb[0].mxu0
    %3368 = vdwg.mxu0
    %v3370 = vsel %vm1923, %v2851, 0
    %3372 = vmatprep.subr.mxu0 0.0
    %3373 = vmatpush1.msra.mxu0 %v3221
    %3374 = vmatprep.subr.mxu0 0.0
    %3375 = vmatpush1.msra.mxu0 0.0
    %3376 = vmatprep.subr.mxu0 0.0
    %3377 = vmatpush1.msra.mxu0 0.0
    %3378 = vmatprep.subr.mxu0 0.0
    %3379 = vmatpush1.msra.mxu0 0.0
    %3380 = vmatprep.subr.mxu0 0.0
    %3381 = vmatpush1.msra.mxu0 0.0
    %3382 = vmatprep.subr.mxu0 0.0
    %3383 = vmatpush1.msra.mxu0 0.0
    %3384 = vmatprep.subr.mxu0 0.0
    %3385 = vmatpush1.msra.mxu0 0.0
    %3386 = vmatprep.subr.mxu0 0.0
    %3387 = vmatpush1.msra.mxu0 0.0
    %3388 = vmatprep.subr.mxu0 0.0
    %3389 = vmatpush1.msra.mxu0 0.0
    %3390 = vmatprep.subr.mxu0 0.0
    %3391 = vmatpush1.msra.mxu0 0.0
    %3392 = vmatprep.subr.mxu0 0.0
    %3393 = vmatpush1.msra.mxu0 0.0
    %3394 = vmatprep.subr.mxu0 0.0
    %3395 = vmatpush1.msra.mxu0 0.0
    %3396 = vmatprep.subr.mxu0 0.0
    %3397 = vmatpush1.msra.mxu0 0.0
    %3398 = vmatprep.subr.mxu0 0.0
    %3399 = vmatpush1.msra.mxu0 0.0
    %3400 = vmatprep.subr.mxu0 0.0
    %3401 = vmatpush1.msra.mxu0 0.0
    %3402 = vmatprep.subr.mxu0 0.0
    %3403 = vmatpush1.msra.mxu0 0.0
    %3404 = vmatprep.subr.mxu0 0.0
    %3405 = vmatpush1.msra.mxu0 0.0
    %3406 = vmatprep.subr.mxu0 0.0
    %3407 = vmatpush1.msra.mxu0 0.0
    %3408 = vmatprep.subr.mxu0 0.0
    %3409 = vmatpush1.msra.mxu0 0.0
    %3410 = vmatprep.subr.mxu0 0.0
    %3411 = vmatpush1.msra.mxu0 0.0
    %3412 = vmatprep.subr.mxu0 0.0
    %3413 = vmatpush1.msra.mxu0 0.0
    %3414 = vmatprep.subr.mxu0 0.0
    %3415 = vmatpush1.msra.mxu0 0.0
    %3416 = vmatprep.subr.mxu0 0.0
    %3417 = vmatpush1.msra.mxu0 0.0
    %3418 = vmatprep.subr.mxu0 0.0
    %3419 = vmatpush1.msra.mxu0 0.0
    %3420 = vmatprep.subr.mxu0 0.0
    %3421 = vmatpush1.msra.mxu0 0.0
    %3422 = vmatprep.subr.mxu0 0.0
    %3423 = vmatpush1.msra.mxu0 0.0
    %3424 = vmatprep.subr.mxu0 0.0
    %3425 = vmatpush1.msra.mxu0 0.0
    %3426 = vmatprep.subr.mxu0 0.0
    %3427 = vmatpush1.msra.mxu0 0.0
    %3428 = vmatprep.subr.mxu0 0.0
    %3429 = vmatpush1.msra.mxu0 0.0
    %3430 = vmatprep.subr.mxu0 0.0
    %3431 = vmatpush1.msra.mxu0 0.0
    %3432 = vmatprep.subr.mxu0 0.0
    %3433 = vmatpush1.msra.mxu0 0.0
    %3434 = vmatprep.subr.mxu0 0.0
    %3435 = vmatpush1.msra.mxu0 0.0
    %3436 = vmatprep.mubr.f32.mxu0 0.0
    %3437 = vmatmul.mubr.f32.gmra.mrb[0].mxu0 %v3370
    %v3438 = vpop.f32.mrb[0].mxu0
    %v3439 = vadd.f32 0.0, %v3438
    %v3440 = vpop.f32.mrb[0].mxu0
    %3441 = vdwg.mxu0
    %v3443 = vsel %vm1923, %v2924, 0
    %3445 = vmatprep.subr.mxu0 0.0
    %3446 = vmatpush1.msra.mxu0 %v3222
    %3447 = vmatprep.subr.mxu0 0.0
    %3448 = vmatpush1.msra.mxu0 0.0
    %3449 = vmatprep.subr.mxu0 0.0
    %3450 = vmatpush1.msra.mxu0 0.0
    %3451 = vmatprep.subr.mxu0 0.0
    %3452 = vmatpush1.msra.mxu0 0.0
    %3453 = vmatprep.subr.mxu0 0.0
    %3454 = vmatpush1.msra.mxu0 0.0
    %3455 = vmatprep.subr.mxu0 0.0
    %3456 = vmatpush1.msra.mxu0 0.0
    %3457 = vmatprep.subr.mxu0 0.0
    %3458 = vmatpush1.msra.mxu0 0.0
    %3459 = vmatprep.subr.mxu0 0.0
    %3460 = vmatpush1.msra.mxu0 0.0
    %3461 = vmatprep.subr.mxu0 0.0
    %3462 = vmatpush1.msra.mxu0 0.0
    %3463 = vmatprep.subr.mxu0 0.0
    %3464 = vmatpush1.msra.mxu0 0.0
    %3465 = vmatprep.subr.mxu0 0.0
    %3466 = vmatpush1.msra.mxu0 0.0
    %3467 = vmatprep.subr.mxu0 0.0
    %3468 = vmatpush1.msra.mxu0 0.0
    %3469 = vmatprep.subr.mxu0 0.0
    %3470 = vmatpush1.msra.mxu0 0.0
    %3471 = vmatprep.subr.mxu0 0.0
    %3472 = vmatpush1.msra.mxu0 0.0
    %3473 = vmatprep.subr.mxu0 0.0
    %3474 = vmatpush1.msra.mxu0 0.0
    %3475 = vmatprep.subr.mxu0 0.0
    %3476 = vmatpush1.msra.mxu0 0.0
    %3477 = vmatprep.subr.mxu0 0.0
    %3478 = vmatpush1.msra.mxu0 0.0
    %3479 = vmatprep.subr.mxu0 0.0
    %3480 = vmatpush1.msra.mxu0 0.0
    %3481 = vmatprep.subr.mxu0 0.0
    %3482 = vmatpush1.msra.mxu0 0.0
    %3483 = vmatprep.subr.mxu0 0.0
    %3484 = vmatpush1.msra.mxu0 0.0
    %3485 = vmatprep.subr.mxu0 0.0
    %3486 = vmatpush1.msra.mxu0 0.0
    %3487 = vmatprep.subr.mxu0 0.0
    %3488 = vmatpush1.msra.mxu0 0.0
    %3489 = vmatprep.subr.mxu0 0.0
    %3490 = vmatpush1.msra.mxu0 0.0
    %3491 = vmatprep.subr.mxu0 0.0
    %3492 = vmatpush1.msra.mxu0 0.0
    %3493 = vmatprep.subr.mxu0 0.0
    %3494 = vmatpush1.msra.mxu0 0.0
    %3495 = vmatprep.subr.mxu0 0.0
    %3496 = vmatpush1.msra.mxu0 0.0
    %3497 = vmatprep.subr.mxu0 0.0
    %3498 = vmatpush1.msra.mxu0 0.0
    %3499 = vmatprep.subr.mxu0 0.0
    %3500 = vmatpush1.msra.mxu0 0.0
    %3501 = vmatprep.subr.mxu0 0.0
    %3502 = vmatpush1.msra.mxu0 0.0
    %3503 = vmatprep.subr.mxu0 0.0
    %3504 = vmatpush1.msra.mxu0 0.0
    %3505 = vmatprep.subr.mxu0 0.0
    %3506 = vmatpush1.msra.mxu0 0.0
    %3507 = vmatprep.subr.mxu0 0.0
    %3508 = vmatpush1.msra.mxu0 0.0
    %3509 = vmatprep.mubr.f32.mxu0 0.0
    %3510 = vmatmul.mubr.f32.gmra.mrb[0].mxu0 %v3443
    %v3511 = vpop.f32.mrb[0].mxu0
    %v3512 = vadd.f32 0.0, %v3511
    %v3513 = vpop.f32.mrb[0].mxu0
    %3514 = vdwg.mxu0
    %v3516 = vsel %vm1923, %v2997, 0
    %3518 = vmatprep.subr.mxu0 0.0
    %3519 = vmatpush1.msra.mxu0 %v3219
    %3520 = vmatprep.subr.mxu0 0.0
    %3521 = vmatpush1.msra.mxu0 0.0
    %3522 = vmatprep.subr.mxu0 0.0
    %3523 = vmatpush1.msra.mxu0 0.0
    %3524 = vmatprep.subr.mxu0 0.0
    %3525 = vmatpush1.msra.mxu0 0.0
    %3526 = vmatprep.subr.mxu0 0.0
    %3527 = vmatpush1.msra.mxu0 0.0
    %3528 = vmatprep.subr.mxu0 0.0
    %3529 = vmatpush1.msra.mxu0 0.0
    %3530 = vmatprep.subr.mxu0 0.0
    %3531 = vmatpush1.msra.mxu0 0.0
    %3532 = vmatprep.subr.mxu0 0.0
    %3533 = vmatpush1.msra.mxu0 0.0
    %3534 = vmatprep.subr.mxu0 0.0
    %3535 = vmatpush1.msra.mxu0 0.0
    %3536 = vmatprep.subr.mxu0 0.0
    %3537 = vmatpush1.msra.mxu0 0.0
    %3538 = vmatprep.subr.mxu0 0.0
    %3539 = vmatpush1.msra.mxu0 0.0
    %3540 = vmatprep.subr.mxu0 0.0
    %3541 = vmatpush1.msra.mxu0 0.0
    %3542 = vmatprep.subr.mxu0 0.0
    %3543 = vmatpush1.msra.mxu0 0.0
    %3544 = vmatprep.subr.mxu0 0.0
    %3545 = vmatpush1.msra.mxu0 0.0
    %3546 = vmatprep.subr.mxu0 0.0
    %3547 = vmatpush1.msra.mxu0 0.0
    %3548 = vmatprep.subr.mxu0 0.0
    %3549 = vmatpush1.msra.mxu0 0.0
    %3550 = vmatprep.subr.mxu0 0.0
    %3551 = vmatpush1.msra.mxu0 0.0
    %3552 = vmatprep.subr.mxu0 0.0
    %3553 = vmatpush1.msra.mxu0 0.0
    %3554 = vmatprep.subr.mxu0 0.0
    %3555 = vmatpush1.msra.mxu0 0.0
    %3556 = vmatprep.subr.mxu0 0.0
    %3557 = vmatpush1.msra.mxu0 0.0
    %3558 = vmatprep.subr.mxu0 0.0
    %3559 = vmatpush1.msra.mxu0 0.0
    %3560 = vmatprep.subr.mxu0 0.0
    %3561 = vmatpush1.msra.mxu0 0.0
    %3562 = vmatprep.subr.mxu0 0.0
    %3563 = vmatpush1.msra.mxu0 0.0
    %3564 = vmatprep.subr.mxu0 0.0
    %3565 = vmatpush1.msra.mxu0 0.0
    %3566 = vmatprep.subr.mxu0 0.0
    %3567 = vmatpush1.msra.mxu0 0.0
    %3568 = vmatprep.subr.mxu0 0.0
    %3569 = vmatpush1.msra.mxu0 0.0
    %3570 = vmatprep.subr.mxu0 0.0
    %3571 = vmatpush1.msra.mxu0 0.0
    %3572 = vmatprep.subr.mxu0 0.0
    %3573 = vmatpush1.msra.mxu0 0.0
    %3574 = vmatprep.subr.mxu0 0.0
    %3575 = vmatpush1.msra.mxu0 0.0
    %3576 = vmatprep.subr.mxu0 0.0
    %3577 = vmatpush1.msra.mxu0 0.0
    %3578 = vmatprep.subr.mxu0 0.0
    %3579 = vmatpush1.msra.mxu0 0.0
    %3580 = vmatprep.subr.mxu0 0.0
    %3581 = vmatpush1.msra.mxu0 0.0
    %3582 = vmatprep.mubr.f32.mxu0 0.0
    %3583 = vmatmul.mubr.f32.gmra.mrb[0].mxu0 %v3516
    %v3584 = vpop.f32.mrb[0].mxu0
    %v3585 = vadd.f32 0.0, %v3584
    %v3586 = vpop.f32.mrb[0].mxu0
    %3587 = vdwg.mxu0
    %v3589 = vsel %vm1923, %v3070, 0
    %3591 = vmatprep.subr.mxu0 0.0
    %3592 = vmatpush1.msra.mxu0 %v3220
    %3593 = vmatprep.subr.mxu0 0.0
    %3594 = vmatpush1.msra.mxu0 0.0
    %3595 = vmatprep.subr.mxu0 0.0
    %3596 = vmatpush1.msra.mxu0 0.0
    %3597 = vmatprep.subr.mxu0 0.0
    %3598 = vmatpush1.msra.mxu0 0.0
    %3599 = vmatprep.subr.mxu0 0.0
    %3600 = vmatpush1.msra.mxu0 0.0
    %3601 = vmatprep.subr.mxu0 0.0
    %3602 = vmatpush1.msra.mxu0 0.0
    %3603 = vmatprep.subr.mxu0 0.0
    %3604 = vmatpush1.msra.mxu0 0.0
    %3605 = vmatprep.subr.mxu0 0.0
    %3606 = vmatpush1.msra.mxu0 0.0
    %3607 = vmatprep.subr.mxu0 0.0
    %3608 = vmatpush1.msra.mxu0 0.0
    %3609 = vmatprep.subr.mxu0 0.0
    %3610 = vmatpush1.msra.mxu0 0.0
    %3611 = vmatprep.subr.mxu0 0.0
    %3612 = vmatpush1.msra.mxu0 0.0
    %3613 = vmatprep.subr.mxu0 0.0
    %3614 = vmatpush1.msra.mxu0 0.0
    %3615 = vmatprep.subr.mxu0 0.0
    %3616 = vmatpush1.msra.mxu0 0.0
    %3617 = vmatprep.subr.mxu0 0.0
    %3618 = vmatpush1.msra.mxu0 0.0
    %3619 = vmatprep.subr.mxu0 0.0
    %3620 = vmatpush1.msra.mxu0 0.0
    %3621 = vmatprep.subr.mxu0 0.0
    %3622 = vmatpush1.msra.mxu0 0.0
    %3623 = vmatprep.subr.mxu0 0.0
    %3624 = vmatpush1.msra.mxu0 0.0
    %3625 = vmatprep.subr.mxu0 0.0
    %3626 = vmatpush1.msra.mxu0 0.0
    %3627 = vmatprep.subr.mxu0 0.0
    %3628 = vmatpush1.msra.mxu0 0.0
    %3629 = vmatprep.subr.mxu0 0.0
    %3630 = vmatpush1.msra.mxu0 0.0
    %3631 = vmatprep.subr.mxu0 0.0
    %3632 = vmatpush1.msra.mxu0 0.0
    %3633 = vmatprep.subr.mxu0 0.0
    %3634 = vmatpush1.msra.mxu0 0.0
    %3635 = vmatprep.subr.mxu0 0.0
    %3636 = vmatpush1.msra.mxu0 0.0
    %3637 = vmatprep.subr.mxu0 0.0
    %3638 = vmatpush1.msra.mxu0 0.0
    %3639 = vmatprep.subr.mxu0 0.0
    %3640 = vmatpush1.msra.mxu0 0.0
    %3641 = vmatprep.subr.mxu0 0.0
    %3642 = vmatpush1.msra.mxu0 0.0
    %3643 = vmatprep.subr.mxu0 0.0
    %3644 = vmatpush1.msra.mxu0 0.0
    %3645 = vmatprep.subr.mxu0 0.0
    %3646 = vmatpush1.msra.mxu0 0.0
    %3647 = vmatprep.subr.mxu0 0.0
    %3648 = vmatpush1.msra.mxu0 0.0
    %3649 = vmatprep.subr.mxu0 0.0
    %3650 = vmatpush1.msra.mxu0 0.0
    %3651 = vmatprep.subr.mxu0 0.0
    %3652 = vmatpush1.msra.mxu0 0.0
    %3653 = vmatprep.subr.mxu0 0.0
    %3654 = vmatpush1.msra.mxu0 0.0
    %3655 = vmatprep.mubr.f32.mxu0 0.0
    %3656 = vmatmul.mubr.f32.gmra.mrb[0].mxu0 %v3589
    %v3657 = vpop.f32.mrb[0].mxu0
    %v3658 = vadd.f32 0.0, %v3657
    %v3659 = vpop.f32.mrb[0].mxu0
    %3660 = vdwg.mxu0
    %v3662 = vsel %vm1923, %v3143, 0
    %3664 = vmatprep.subr.mxu0 0.0
    %3665 = vmatpush1.msra.mxu0 %v3221
    %3666 = vmatprep.subr.mxu0 0.0
    %3667 = vmatpush1.msra.mxu0 0.0
    %3668 = vmatprep.subr.mxu0 0.0
    %3669 = vmatpush1.msra.mxu0 0.0
    %3670 = vmatprep.subr.mxu0 0.0
    %3671 = vmatpush1.msra.mxu0 0.0
    %3672 = vmatprep.subr.mxu0 0.0
    %3673 = vmatpush1.msra.mxu0 0.0
    %3674 = vmatprep.subr.mxu0 0.0
    %3675 = vmatpush1.msra.mxu0 0.0
    %3676 = vmatprep.subr.mxu0 0.0
    %3677 = vmatpush1.msra.mxu0 0.0
    %3678 = vmatprep.subr.mxu0 0.0
    %3679 = vmatpush1.msra.mxu0 0.0
    %3680 = vmatprep.subr.mxu0 0.0
    %3681 = vmatpush1.msra.mxu0 0.0
    %3682 = vmatprep.subr.mxu0 0.0
    %3683 = vmatpush1.msra.mxu0 0.0
    %3684 = vmatprep.subr.mxu0 0.0
    %3685 = vmatpush1.msra.mxu0 0.0
    %3686 = vmatprep.subr.mxu0 0.0
    %3687 = vmatpush1.msra.mxu0 0.0
    %3688 = vmatprep.subr.mxu0 0.0
    %3689 = vmatpush1.msra.mxu0 0.0
    %3690 = vmatprep.subr.mxu0 0.0
    %3691 = vmatpush1.msra.mxu0 0.0
    %3692 = vmatprep.subr.mxu0 0.0
    %3693 = vmatpush1.msra.mxu0 0.0
    %3694 = vmatprep.subr.mxu0 0.0
    %3695 = vmatpush1.msra.mxu0 0.0
    %3696 = vmatprep.subr.mxu0 0.0
    %3697 = vmatpush1.msra.mxu0 0.0
    %3698 = vmatprep.subr.mxu0 0.0
    %3699 = vmatpush1.msra.mxu0 0.0
    %3700 = vmatprep.subr.mxu0 0.0
    %3701 = vmatpush1.msra.mxu0 0.0
    %3702 = vmatprep.subr.mxu0 0.0
    %3703 = vmatpush1.msra.mxu0 0.0
    %3704 = vmatprep.subr.mxu0 0.0
    %3705 = vmatpush1.msra.mxu0 0.0
    %3706 = vmatprep.subr.mxu0 0.0
    %3707 = vmatpush1.msra.mxu0 0.0
    %3708 = vmatprep.subr.mxu0 0.0
    %3709 = vmatpush1.msra.mxu0 0.0
    %3710 = vmatprep.subr.mxu0 0.0
    %3711 = vmatpush1.msra.mxu0 0.0
    %3712 = vmatprep.subr.mxu0 0.0
    %3713 = vmatpush1.msra.mxu0 0.0
    %3714 = vmatprep.subr.mxu0 0.0
    %3715 = vmatpush1.msra.mxu0 0.0
    %3716 = vmatprep.subr.mxu0 0.0
    %3717 = vmatpush1.msra.mxu0 0.0
    %3718 = vmatprep.subr.mxu0 0.0
    %3719 = vmatpush1.msra.mxu0 0.0
    %3720 = vmatprep.subr.mxu0 0.0
    %3721 = vmatpush1.msra.mxu0 0.0
    %3722 = vmatprep.subr.mxu0 0.0
    %3723 = vmatpush1.msra.mxu0 0.0
    %3724 = vmatprep.subr.mxu0 0.0
    %3725 = vmatpush1.msra.mxu0 0.0
    %3726 = vmatprep.subr.mxu0 0.0
    %3727 = vmatpush1.msra.mxu0 0.0
    %3728 = vmatprep.mubr.f32.mxu0 0.0
    %3729 = vmatmul.mubr.f32.gmra.mrb[0].mxu0 %v3662
    %v3730 = vpop.f32.mrb[0].mxu0
    %v3731 = vadd.f32 0.0, %v3730
    %v3732 = vpop.f32.mrb[0].mxu0
    %3733 = vdwg.mxu0
    %v3735 = vsel %vm1923, %v3216, 0
    %3737 = vmatprep.subr.mxu0 0.0
    %3738 = vmatpush1.msra.mxu0 %v3222
    %3739 = vmatprep.subr.mxu0 0.0
    %3740 = vmatpush1.msra.mxu0 0.0
    %3741 = vmatprep.subr.mxu0 0.0
    %3742 = vmatpush1.msra.mxu0 0.0
    %3743 = vmatprep.subr.mxu0 0.0
    %3744 = vmatpush1.msra.mxu0 0.0
    %3745 = vmatprep.subr.mxu0 0.0
    %3746 = vmatpush1.msra.mxu0 0.0
    %3747 = vmatprep.subr.mxu0 0.0
    %3748 = vmatpush1.msra.mxu0 0.0
    %3749 = vmatprep.subr.mxu0 0.0
    %3750 = vmatpush1.msra.mxu0 0.0
    %3751 = vmatprep.subr.mxu0 0.0
    %3752 = vmatpush1.msra.mxu0 0.0
    %3753 = vmatprep.subr.mxu0 0.0
    %3754 = vmatpush1.msra.mxu0 0.0
    %3755 = vmatprep.subr.mxu0 0.0
    %3756 = vmatpush1.msra.mxu0 0.0
    %3757 = vmatprep.subr.mxu0 0.0
    %3758 = vmatpush1.msra.mxu0 0.0
    %3759 = vmatprep.subr.mxu0 0.0
    %3760 = vmatpush1.msra.mxu0 0.0
    %3761 = vmatprep.subr.mxu0 0.0
    %3762 = vmatpush1.msra.mxu0 0.0
    %3763 = vmatprep.subr.mxu0 0.0
    %3764 = vmatpush1.msra.mxu0 0.0
    %3765 = vmatprep.subr.mxu0 0.0
    %3766 = vmatpush1.msra.mxu0 0.0
    %3767 = vmatprep.subr.mxu0 0.0
    %3768 = vmatpush1.msra.mxu0 0.0
    %3769 = vmatprep.subr.mxu0 0.0
    %3770 = vmatpush1.msra.mxu0 0.0
    %3771 = vmatprep.subr.mxu0 0.0
    %3772 = vmatpush1.msra.mxu0 0.0
    %3773 = vmatprep.subr.mxu0 0.0
    %3774 = vmatpush1.msra.mxu0 0.0
    %3775 = vmatprep.subr.mxu0 0.0
    %3776 = vmatpush1.msra.mxu0 0.0
    %3777 = vmatprep.subr.mxu0 0.0
    %3778 = vmatpush1.msra.mxu0 0.0
    %3779 = vmatprep.subr.mxu0 0.0
    %3780 = vmatpush1.msra.mxu0 0.0
    %3781 = vmatprep.subr.mxu0 0.0
    %3782 = vmatpush1.msra.mxu0 0.0
    %3783 = vmatprep.subr.mxu0 0.0
    %3784 = vmatpush1.msra.mxu0 0.0
    %3785 = vmatprep.subr.mxu0 0.0
    %3786 = vmatpush1.msra.mxu0 0.0
    %3787 = vmatprep.subr.mxu0 0.0
    %3788 = vmatpush1.msra.mxu0 0.0
    %3789 = vmatprep.subr.mxu0 0.0
    %3790 = vmatpush1.msra.mxu0 0.0
    %3791 = vmatprep.subr.mxu0 0.0
    %3792 = vmatpush1.msra.mxu0 0.0
    %3793 = vmatprep.subr.mxu0 0.0
    %3794 = vmatpush1.msra.mxu0 0.0
    %3795 = vmatprep.subr.mxu0 0.0
    %3796 = vmatpush1.msra.mxu0 0.0
    %3797 = vmatprep.subr.mxu0 0.0
    %3798 = vmatpush1.msra.mxu0 0.0
    %3799 = vmatprep.subr.mxu0 0.0
    %3800 = vmatpush1.msra.mxu0 0.0
    %3801 = vmatprep.mubr.f32.mxu0 0.0
    %3802 = vmatmul.mubr.f32.gmra.mrb[0].mxu0 %v3735
    %v3803 = vpop.f32.mrb[0].mxu0
    %v3804 = vadd.f32 0.0, %v3803
    %v3805 = vpop.f32.mrb[0].mxu0
    %3806 = vdwg.mxu0
    %v3807 = vsel %vm61, %v3293, 0.0
    %v3808 = vsel %vm61, %v3366, 0.0
    %v3809 = vadd.f32 %v3807, %v3808
    %v3810 = vsel %vm61, %v3439, 0.0
    %v3811 = vadd.f32 %v3809, %v3810
    %v3812 = vsel %vm61, %v3512, 0.0
    %v3813 = vadd.f32 %v3811, %v3812
    %v3814 = vsel %vm61, %v3585, 0.0
    %v3815 = vsel %vm61, %v3658, 0.0
    %v3816 = vadd.f32 %v3814, %v3815
    %v3817 = vsel %vm61, %v3731, 0.0
    %v3818 = vadd.f32 %v3816, %v3817
    %v3819 = vsel %vm61, %v3804, 0.0
    %v3820 = vadd.f32 %v3818, %v3819
    %v3821 = vld [vmem:[%s10] sm:$0x1]
    %v3823 = vlaneseq
    %v3824 = vshrl.u32 %v3823, 7
    %v3825 = vsub.s32 0, %v3824
    %v3826 = vrot.slane %v3821, %v3825
    %v3828 = vadd.f32 %v3813, %v3826
    %v3829 = vadd.f32 %v3820, %v3826
    %v3830 = vadd.f32 %v57, %v3828
    %v3831 = vadd.f32 %v58, %v3829
    %v3832 = vld [vmem:[%s11] sm:$0x1]
    %v3833 = vld [vmem:[%s12] sm:$0x1]
    %v3834 = vsel %vm61, %v3830, 0.0
    %3835 = vadd.xlane.f32.xlu0 %v3834
    %v3836 = vpop.xlane.xlu0 %3835
    %v3837 = vsel %vm61, %v3831, 0.0
    %3838 = vadd.xlane.f32.xlu0 %v3837
    %v3839 = vpop.xlane.xlu0 %3838
    %v3840 = vmul.f32 %v3836, %v68
    %v3841 = vmul.f32 %v3839, %v68
    %v3842 = vsub.f32 %v3830, %v3840
    %v3843 = vsub.f32 %v3831, %v3841
    %v3844 = vmul.f32 %v3842, %v3842
    %v3845 = vmul.f32 %v3843, %v3843
    %v3846 = vsel %vm61, %v3844, 0.0
    %3847 = vadd.xlane.f32.xlu0 %v3846
    %v3848 = vpop.xlane.xlu0 %3847
    %v3849 = vsel %vm61, %v3845, 0.0
    %3850 = vadd.xlane.f32.xlu0 %v3849
    %v3851 = vpop.xlane.xlu0 %3850
    %v3852 = vmul.f32 %v3848, %v68
    %v3853 = vmul.f32 %v3851, %v68
    %v3854 = vadd.f32 %v3852, 1e-05
    %v3855 = vadd.f32 %v3853, 1e-05
    %v3856 = vrsqrt.pop %v3854
    %v3857 = vrsqrt.pop %v3855
    %v3858 = vmul.f32 %v3842, %v3856
    %v3859 = vmul.f32 %v3843, %v3857
    %v3861 = vlaneseq
    %v3862 = vshrl.u32 %v3861, 7
    %v3863 = vsub.s32 0, %v3862
    %v3864 = vrot.slane %v3832, %v3863
    %v3866 = vmul.f32 %v3858, %v3864
    %v3867 = vmul.f32 %v3859, %v3864
    %v3869 = vlaneseq
    %v3870 = vshrl.u32 %v3869, 7
    %v3871 = vsub.s32 0, %v3870
    %v3872 = vrot.slane %v3833, %v3871
    %v3874 = vadd.f32 %v3866, %v3872
    %v3875 = vadd.f32 %v3867, %v3872
    %v3876 = vld [vmem:[%s13] sm:$0xff]
    %v3877 = vld [vmem:[%s13 + $0x8] sm:$0xff]
    %v3878 = vld [vmem:[%s13 + $0x10] sm:$0xff]
    %v3879 = vld [vmem:[%s13 + $0x18] sm:$0xff]
    %v3880 = vld [vmem:[%s14] sm:$0x1]
    %v3882 = vlaneseq
    %v3883 = vshrl.u32 %v3882, 7
    %v3884 = vsub.s32 0, %v3883
    %v3885 = vrot.slane %v3880, %v3884
    %v3888 = vsel %vm61, %v3874, 0
    %v3891 = vsel %vm61, %v3875, 0
    %3893 = vmatprep.subr.mxu0 0.0
    %3894 = vmatpush1.msra.mxu0 %v3876
    %3895 = vmatprep.subr.mxu0 0.0
    %3896 = vmatpush1.msra.mxu0 %v3877
    %3897 = vmatprep.subr.mxu0 0.0
    %3898 = vmatpush1.msra.mxu0 %v3878
    %3899 = vmatprep.subr.mxu0 0.0
    %3900 = vmatpush1.msra.mxu0 %v3879
    %3901 = vmatprep.subr.mxu0 0.0
    %3902 = vmatpush1.msra.mxu0 0.0
    %3903 = vmatprep.subr.mxu0 0.0
    %3904 = vmatpush1.msra.mxu0 0.0
    %3905 = vmatprep.subr.mxu0 0.0
    %3906 = vmatpush1.msra.mxu0 0.0
    %3907 = vmatprep.subr.mxu0 0.0
    %3908 = vmatpush1.msra.mxu0 0.0
    %3909 = vmatprep.subr.mxu0 0.0
    %3910 = vmatpush1.msra.mxu0 0.0
    %3911 = vmatprep.subr.mxu0 0.0
    %3912 = vmatpush1.msra.mxu0 0.0
    %3913 = vmatprep.subr.mxu0 0.0
    %3914 = vmatpush1.msra.mxu0 0.0
    %3915 = vmatprep.subr.mxu0 0.0
    %3916 = vmatpush1.msra.mxu0 0.0
    %3917 = vmatprep.subr.mxu0 0.0
    %3918 = vmatpush1.msra.mxu0 0.0
    %3919 = vmatprep.subr.mxu0 0.0
    %3920 = vmatpush1.msra.mxu0 0.0
    %3921 = vmatprep.subr.mxu0 0.0
    %3922 = vmatpush1.msra.mxu0 0.0
    %3923 = vmatprep.subr.mxu0 0.0
    %3924 = vmatpush1.msra.mxu0 0.0
    %3925 = vmatprep.subr.mxu0 0.0
    %3926 = vmatpush1.msra.mxu0 0.0
    %3927 = vmatprep.subr.mxu0 0.0
    %3928 = vmatpush1.msra.mxu0 0.0
    %3929 = vmatprep.subr.mxu0 0.0
    %3930 = vmatpush1.msra.mxu0 0.0
    %3931 = vmatprep.subr.mxu0 0.0
    %3932 = vmatpush1.msra.mxu0 0.0
    %3933 = vmatprep.subr.mxu0 0.0
    %3934 = vmatpush1.msra.mxu0 0.0
    %3935 = vmatprep.subr.mxu0 0.0
    %3936 = vmatpush1.msra.mxu0 0.0
    %3937 = vmatprep.subr.mxu0 0.0
    %3938 = vmatpush1.msra.mxu0 0.0
    %3939 = vmatprep.subr.mxu0 0.0
    %3940 = vmatpush1.msra.mxu0 0.0
    %3941 = vmatprep.subr.mxu0 0.0
    %3942 = vmatpush1.msra.mxu0 0.0
    %3943 = vmatprep.subr.mxu0 0.0
    %3944 = vmatpush1.msra.mxu0 0.0
    %3945 = vmatprep.subr.mxu0 0.0
    %3946 = vmatpush1.msra.mxu0 0.0
    %3947 = vmatprep.subr.mxu0 0.0
    %3948 = vmatpush1.msra.mxu0 0.0
    %3949 = vmatprep.subr.mxu0 0.0
    %3950 = vmatpush1.msra.mxu0 0.0
    %3951 = vmatprep.subr.mxu0 0.0
    %3952 = vmatpush1.msra.mxu0 0.0
    %3953 = vmatprep.subr.mxu0 0.0
    %3954 = vmatpush1.msra.mxu0 0.0
    %3955 = vmatprep.subr.mxu0 0.0
    %3956 = vmatpush1.msra.mxu0 0.0
    %3957 = vmatprep.mubr.f32.mxu0 0.0
    %3958 = vmatmul.mubr.f32.gmra.mrb[0].mxu0 %v3888
    %v3959 = vpop.f32.mrb[0].mxu0
    %v3960 = vadd.f32 %v3885, %v3959
    %v3961 = vpop.f32.mrb[0].mxu0
    %3962 = vmatprep.mubr.f32.mxu0 0.0
    %3963 = vmatmul.mubr.f32.gmra.mrb[0].mxu0 %v3891
    %v3964 = vpop.f32.mrb[0].mxu0
    %v3965 = vadd.f32 %v3885, %v3964
    %v3966 = vpop.f32.mrb[0].mxu0
    %3967 = vdwg.mxu0
    %v3968 = vmul.f32 %v3960, 0.5
    %v3969 = vmul.f32 %v3965, 0.5
    %v3970 = vmul.f32 %v3960, 0.044715
    %v3971 = vmul.f32 %v3965, 0.044715
    %v3972 = vmul.f32 %v3970, %v3960
    %v3973 = vmul.f32 %v3971, %v3965
    %v3974 = vmul.f32 %v3972, %v3960
    %v3975 = vmul.f32 %v3973, %v3965
    %v3976 = vadd.f32 %v3960, %v3974
    %v3977 = vadd.f32 %v3965, %v3975
    %v3978 = vmul.f32 %v3976, 0.7978846
    %v3979 = vmul.f32 %v3977, 0.7978846
    %v3980 = vtanh.pop %v3978
    %v3981 = vtanh.pop %v3979
    %v3982 = vadd.f32 %v3980, 1.0
    %v3983 = vadd.f32 %v3981, 1.0
    %v3984 = vmul.f32 %v3968, %v3982
    %v3985 = vmul.f32 %v3969, %v3983
    %v3986 = vld [vmem:[%s15] sm:$0xff]
    %v3987 = vld [vmem:[%s15 + $0x8] sm:$0xff]
    %v3988 = vld [vmem:[%s15 + $0x10] sm:$0xff]
    %v3989 = vld [vmem:[%s15 + $0x18] sm:$0xff]
    %v3990 = vld [vmem:[%s15 + $0x20] sm:$0xff]
    %v3991 = vld [vmem:[%s15 + $0x28] sm:$0xff]
    %v3992 = vld [vmem:[%s15 + $0x30] sm:$0xff]
    %v3993 = vld [vmem:[%s15 + $0x38] sm:$0xff]
    %v3994 = vld [vmem:[%s15 + $0x40] sm:$0xff]
    %v3995 = vld [vmem:[%s15 + $0x48] sm:$0xff]
    %v3996 = vld [vmem:[%s15 + $0x50] sm:$0xff]
    %v3997 = vld [vmem:[%s15 + $0x58] sm:$0xff]
    %v3998 = vld [vmem:[%s15 + $0x60] sm:$0xff]
    %v3999 = vld [vmem:[%s15 + $0x68] sm:$0xff]
    %v4000 = vld [vmem:[%s15 + $0x70] sm:$0xff]
    %v4001 = vld [vmem:[%s15 + $0x78] sm:$0xff]
    %v4002 = vld [vmem:[%s16] sm:$0x1]
    %v4004 = vlaneseq
    %v4005 = vshrl.u32 %v4004, 7
    %v4006 = vsub.s32 0, %v4005
    %v4007 = vrot.slane %v4002, %v4006
    %4009 = vmatprep.subr.mxu0 0.0
    %4010 = vmatpush1.msra.mxu0 %v3986
    %4011 = vmatprep.subr.mxu0 0.0
    %4012 = vmatpush1.msra.mxu0 %v3987
    %4013 = vmatprep.subr.mxu0 0.0
    %4014 = vmatpush1.msra.mxu0 %v3988
    %4015 = vmatprep.subr.mxu0 0.0
    %4016 = vmatpush1.msra.mxu0 %v3989
    %4017 = vmatprep.subr.mxu0 0.0
    %4018 = vmatpush1.msra.mxu0 %v3990
    %4019 = vmatprep.subr.mxu0 0.0
    %4020 = vmatpush1.msra.mxu0 %v3991
    %4021 = vmatprep.subr.mxu0 0.0
    %4022 = vmatpush1.msra.mxu0 %v3992
    %4023 = vmatprep.subr.mxu0 0.0
    %4024 = vmatpush1.msra.mxu0 %v3993
    %4025 = vmatprep.subr.mxu0 0.0
    %4026 = vmatpush1.msra.mxu0 %v3994
    %4027 = vmatprep.subr.mxu0 0.0
    %4028 = vmatpush1.msra.mxu0 %v3995
    %4029 = vmatprep.subr.mxu0 0.0
    %4030 = vmatpush1.msra.mxu0 %v3996
    %4031 = vmatprep.subr.mxu0 0.0
    %4032 = vmatpush1.msra.mxu0 %v3997
    %4033 = vmatprep.subr.mxu0 0.0
    %4034 = vmatpush1.msra.mxu0 %v3998
    %4035 = vmatprep.subr.mxu0 0.0
    %4036 = vmatpush1.msra.mxu0 %v3999
    %4037 = vmatprep.subr.mxu0 0.0
    %4038 = vmatpush1.msra.mxu0 %v4000
    %4039 = vmatprep.subr.mxu0 0.0
    %4040 = vmatpush1.msra.mxu0 %v4001
    %4041 = vmatprep.subr.mxu0 0.0
    %4042 = vmatpush1.msra.mxu0 0.0
    %4043 = vmatprep.subr.mxu0 0.0
    %4044 = vmatpush1.msra.mxu0 0.0
    %4045 = vmatprep.subr.mxu0 0.0
    %4046 = vmatpush1.msra.mxu0 0.0
    %4047 = vmatprep.subr.mxu0 0.0
    %4048 = vmatpush1.msra.mxu0 0.0
    %4049 = vmatprep.subr.mxu0 0.0
    %4050 = vmatpush1.msra.mxu0 0.0
    %4051 = vmatprep.subr.mxu0 0.0
    %4052 = vmatpush1.msra.mxu0 0.0
    %4053 = vmatprep.subr.mxu0 0.0
    %4054 = vmatpush1.msra.mxu0 0.0
    %4055 = vmatprep.subr.mxu0 0.0
    %4056 = vmatpush1.msra.mxu0 0.0
    %4057 = vmatprep.subr.mxu0 0.0
    %4058 = vmatpush1.msra.mxu0 0.0
    %4059 = vmatprep.subr.mxu0 0.0
    %4060 = vmatpush1.msra.mxu0 0.0
    %4061 = vmatprep.subr.mxu0 0.0
    %4062 = vmatpush1.msra.mxu0 0.0
    %4063 = vmatprep.subr.mxu0 0.0
    %4064 = vmatpush1.msra.mxu0 0.0
    %4065 = vmatprep.subr.mxu0 0.0
    %4066 = vmatpush1.msra.mxu0 0.0
    %4067 = vmatprep.subr.mxu0 0.0
    %4068 = vmatpush1.msra.mxu0 0.0
    %4069 = vmatprep.subr.mxu0 0.0
    %4070 = vmatpush1.msra.mxu0 0.0
    %4071 = vmatprep.subr.mxu0 0.0
    %4072 = vmatpush1.msra.mxu0 0.0
    %4073 = vmatprep.mubr.f32.mxu0 0.0
    %4074 = vmatmul.mubr.f32.gmra.mrb[0].mxu0 %v3984
    %v4075 = vpop.f32.mrb[0].mxu0
    %v4076 = vadd.f32 %v4007, %v4075
    %v4077 = vpop.f32.mrb[0].mxu0
    %4078 = vmatprep.mubr.f32.mxu0 0.0
    %4079 = vmatmul.mubr.f32.gmra.mrb[0].mxu0 %v3985
    %v4080 = vpop.f32.mrb[0].mxu0
    %v4081 = vadd.f32 %v4007, %v4080
    %v4082 = vpop.f32.mrb[0].mxu0
    %4083 = vdwg.mxu0
    %v4084 = vadd.f32 %v3830, %v4076
    %v4085 = vadd.f32 %v3831, %v4081
    %4086 = vst.msk [vmem:[#allocation2] sm:$0xff] %vm61, %v4084
    %4087 = vst.msk [vmem:[#allocation2 + $0x8] sm:$0xff] %vm61, %v4085
    // Predicated region
    $region70: #{tpu_custom_call.1} parent=1 // pred_check
      _
    $region71: #{tpu_custom_call.1} parent=1 // pred_check_branch
      %4089 = sbr.rel (0) target = $region73
    $region72: #{tpu_custom_call.1} parent=1 // pred_region
      %s4091 = ssub.s32 256, 256
      %4092 = vsyncadd [#allocation3], %s4091
      %s4093 = sshll.u32 [#allocation2], 4
      %s4094 = int_to_ptr.vmem [resolvable:$true] %s4093
      %4099 = dma.vmem_to_hbm [thread:$0]  %s4094, 256, %s17, [#allocation3], 128, 128, 8
    $region73: #{tpu_custom_call.1} parent=1 // pred_fallthru
      _
    // Predicated region
    $region74: #{tpu_custom_call.1} parent=1 // pred_check
      _
    $region75: #{tpu_custom_call.1} parent=1 // pred_check_branch
      %4101 = sbr.rel (0) target = $region77
    $region76: #{tpu_custom_call.1} parent=1 // pred_region
      %4102 = dma.done [#allocation3], 256
    $region77: #{tpu_custom_call.1} parent=1 // pred_fallthru
      _
    %4103 = vsyncpa [#allocation3], 1

</llo_original>
